<compile_context>
chip_gen: v7x
topology: tpu7x:2x2x1
jax: 0.10.0
libtpu: 0.0.40
codegen_flags: <defaults>
</compile_context>

<pallas_src>
import functools

import jax
import jax.numpy as jnp
import numpy as np
from jax.experimental import pallas as pl
from jax.experimental.pallas import tpu as pltpu


def _resblock_kernel(x_ref, wv1_ref, b1_ref, wv2_ref, b2_ref, gam_ref,
                     bet_ref, g_ref, out_ref, pad_ref, *, C, H, K, P, LANE,
                     BLK, inv_count):
    """Whole-block kernel on lane-dense (H, LANE = C*N*W) slabs.

    x_ref   : VMEM (H, LANE)      repacked input, lane = (c, n, w); residual
    wv*_ref : VMEM (C*K*K, LANE)  pre-broadcast, edge-masked conv weight rows
    b*_ref  : VMEM (1, LANE)      conv bias broadcast over lanes
    gam_ref : VMEM (1, LANE)      BN gamma broadcast over lanes
    bet_ref : VMEM (1, LANE)      BN beta broadcast over lanes
    g_ref   : VMEM (LANE, LANE)   0/1 same-channel matrix (segment sum+bcast)
    out_ref : VMEM (H, LANE)
    pad_ref : VMEM (H+2P, LANE)   H-padded conv input scratch (reused twice)
    """
    eps = 1e-5

    # Zero the whole padded scratch once (single dense store).  Border rows
    # stay zero across both convs; the interior is rewritten before each.
    pad_ref[...] = jnp.zeros(pad_ref.shape, jnp.float32)

    def conv(wv_ref, bias_ref):
        # 'same' conv, stride 1.  For each dy window, the channel contraction
        # (cyclic lane-block shift d*BLK) and the dx shift fuse into one
        # static lane roll; W-edge zeroing lives in the weight vectors.
        accs = [jnp.zeros((H, LANE), jnp.float32) for _ in range(C)]
        for dy in range(K):
            slab = pad_ref[dy:dy + H, :]                       # (H, LANE)
            for d in range(C):
                for dx in range(K):
                    shift = (-(d * BLK + dx - P)) % LANE
                    rolled = slab if shift == 0 else pltpu.roll(slab, shift,
                                                                axis=1)
                    row = (d * K + dy) * K + dx
                    accs[d] = accs[d] + rolled * wv_ref[row:row + 1, :]
        acc = bias_ref[...]
        for a in accs:
            acc = acc + a
        return acc

    def batchnorm(t):
        # Per-channel train-mode stats, vectorized over channels: t @ G sums
        # each row over its channel's lane segment (and broadcasts back), a
        # sublane reduce finishes the (N, H, W) reduction.  Two-pass variance.
        g = g_ref[...]
        s = jnp.sum(jnp.dot(t, g, preferred_element_type=jnp.float32,
                            precision=jax.lax.Precision.HIGHEST),
                    axis=0, keepdims=True)
        mean = s * inv_count
        cen = t - mean
        s2 = jnp.sum(jnp.dot(cen * cen, g, preferred_element_type=jnp.float32,
                             precision=jax.lax.Precision.HIGHEST),
                     axis=0, keepdims=True)
        scale = jax.lax.rsqrt(s2 * inv_count + eps) * gam_ref[...]
        return cen * scale + bet_ref[...]

    # ---- conv1 -> BN -> SiLU ----
    pad_ref[P:P + H, :] = x_ref[...]
    t = batchnorm(conv(wv1_ref, b1_ref))
    t = t * jax.nn.sigmoid(t)

    # ---- conv2 -> BN -> +residual -> SiLU ----
    pad_ref[P:P + H, :] = t
    z = batchnorm(conv(wv2_ref, b2_ref)) + x_ref[...]
    out_ref[...] = z * jax.nn.sigmoid(z)


def residual_block_pallas(x, w1, b1, w2, b2, gamma, beta):
    N, Cin, H, W = x.shape
    Cout, _, K, _ = w1.shape
    assert Cin == Cout, "residual add requires in_f == out_f"
    C = Cout
    P = (K - 1) // 2
    BLK = N * W
    LANE = C * BLK          # 4 * 2 * 16 = 128 -> exactly one vreg lane width

    f32 = jnp.float32
    lane = jnp.arange(LANE)
    co = lane // BLK        # output channel owning each lane
    wpos = lane % W         # w position within each (c, n) block

    def make_wv(wt):
        # wv[(d*K + dy)*K + dx, L=(co,n,w)] = W[co, (co+d) % C, dy, dx],
        # zeroed where the rolled source column w + dx - P is outside [0, W)
        # (replaces physical W padding).
        wt = wt.astype(f32)
        rows = []
        for d in range(C):
            ci = (co + d) % C
            for dy in range(K):
                for dx in range(K):
                    vals = wt[co, ci, dy, dx]
                    ok = (wpos + dx - P >= 0) & (wpos + dx - P < W)
                    rows.append(jnp.where(ok, vals, 0.0))
        return jnp.stack(rows, axis=0)                         # (C*K*K, LANE)

    # NCHW -> (H, C*N*W): lane-dense repack done in the wrapper (tiny tensor).
    x2d = jnp.transpose(x.astype(f32), (2, 1, 0, 3)).reshape(H, LANE)
    wv1, wv2 = make_wv(w1), make_wv(w2)
    b1_row = b1.astype(f32)[co].reshape(1, LANE)
    b2_row = b2.astype(f32)[co].reshape(1, LANE)
    gam_row = gamma.astype(f32)[co].reshape(1, LANE)
    bet_row = beta.astype(f32)[co].reshape(1, LANE)
    gmat = (co[:, None] == co[None, :]).astype(f32)            # (LANE, LANE)

    kernel = functools.partial(_resblock_kernel, C=C, H=H, K=K, P=P,
                               LANE=LANE, BLK=BLK,
                               inv_count=1.0 / float(N * H * W))
    vmem = pl.BlockSpec(memory_space=pltpu.MemorySpace.VMEM)

    # Single grid point: at this size everything is a few vregs and the call
    # is launch-overhead bound, so no grid / megacore split is used.
    # TODO(synk): for production H/W (or v7x's 2 TensorCores / 32 MiB scoped
    # VMEM), tile H with a grid + halo and make the BN reductions two-phase.
    out2d = pl.pallas_call(
        kernel,
        out_shape=jax.ShapeDtypeStruct((H, LANE), f32),
        in_specs=[vmem] * 8,
        out_specs=vmem,
        scratch_shapes=[pltpu.VMEM((H + 2 * P, LANE), f32)],
    )(x2d, wv1, b1_row, wv2, b2_row, gam_row, bet_row, gmat)

    # (H, C*N*W) -> NCHW
    return jnp.transpose(out2d.reshape(H, C, N, W), (2, 1, 0, 3))


def residual_block_ref(x, w1, b1, w2, b2, gamma, beta):
    """Pure-JAX reference mirroring the PyTorch forward (train-mode BN)."""
    P = (w1.shape[-1] - 1) // 2

    def conv(v, w, b):
        out = jax.lax.conv_general_dilated(
            v, w, window_strides=(1, 1), padding=[(P, P), (P, P)],
            dimension_numbers=("NCHW", "OIHW", "NCHW"))
        return out + b[None, :, None, None]

    def bn(v):
        mean = jnp.mean(v, axis=(0, 2, 3), keepdims=True)
        var = jnp.var(v, axis=(0, 2, 3), keepdims=True)
        return ((v - mean) / jnp.sqrt(var + 1e-5)
                * gamma[None, :, None, None] + beta[None, :, None, None])

    def silu(v):
        return v * jax.nn.sigmoid(v)

    out = silu(bn(conv(x, w1, b1)))
    out = bn(conv(out, w2, b2))
    out = out + x
    return silu(out)


if __name__ == "__main__":
    N, C, H, W, K = 2, 4, 16, 16, 3  # in_f = out_f = 4, kernel_size = 3

    key = jax.random.PRNGKey(0)
    k_x, k_w1, k_b1, k_w2, k_b2 = jax.random.split(key, 5)

    x = jax.random.normal(k_x, (N, C, H, W), dtype=jnp.float32)
    w1 = jax.random.normal(k_w1, (C, C, K, K), dtype=jnp.float32) * 0.1
    b1 = jax.random.normal(k_b1, (C,), dtype=jnp.float32) * 0.1
    w2 = jax.random.normal(k_w2, (C, C, K, K), dtype=jnp.float32) * 0.1
    b2 = jax.random.normal(k_b2, (C,), dtype=jnp.float32) * 0.1
    gamma = 1.0 + 0.1 * jnp.arange(C, dtype=jnp.float32)
    beta = 0.05 * jnp.arange(C, dtype=jnp.float32)

    out = residual_block_pallas(x, w1, b1, w2, b2, gamma, beta)
    out = jax.block_until_ready(out)

    ref = residual_block_ref(x, w1, b1, w2, b2, gamma, beta)
    np.testing.assert_allclose(np.asarray(out), np.asarray(ref),
                               rtol=1e-4, atol=1e-4)
    print("KERNEL_OK")
</pallas_src>

<mosaic_0001>
module attributes {stable_mosaic.version = 11 : i64} {
  func.func @_resblock_kernel(%arg0: memref<16x128xf32, #tpu.memory_space<vmem>>, %arg1: memref<36x128xf32, #tpu.memory_space<vmem>>, %arg2: memref<1x128xf32, #tpu.memory_space<vmem>>, %arg3: memref<36x128xf32, #tpu.memory_space<vmem>>, %arg4: memref<1x128xf32, #tpu.memory_space<vmem>>, %arg5: memref<1x128xf32, #tpu.memory_space<vmem>>, %arg6: memref<1x128xf32, #tpu.memory_space<vmem>>, %arg7: memref<128x128xf32, #tpu.memory_space<vmem>>, %arg8: memref<16x128xf32, #tpu.memory_space<vmem>>, %arg9: memref<18x128xf32, #tpu.memory_space<vmem>>) attributes {dimension_semantics = [], scalar_prefetch = 0 : i64, scratch_operands = 1 : i64, tpu.core_type = #tpu.core_type<tc>} {
    %cst = arith.constant 0.000000e+00 : f32
    %0 = vector.broadcast %cst : f32 to vector<18x128xf32>
    %c0 = arith.constant 0 : index
    %c0_0 = arith.constant 0 : index
    %1 = vector.load %arg9[%c0, %c0_0] : memref<18x128xf32, #tpu.memory_space<vmem>>, vector<18x128xf32>
    tpu.vector_store %arg9[%c0, %c0_0], %0 {strides = array<i32>} : memref<18x128xf32, #tpu.memory_space<vmem>>, vector<18x128xf32>,
    %c0_1 = arith.constant 0 : index
    %c0_2 = arith.constant 0 : index
    %2 = vector.load %arg0[%c0_1, %c0_2] : memref<16x128xf32, #tpu.memory_space<vmem>>, vector<16x128xf32>
    %c1 = arith.constant 1 : index
    %c0_3 = arith.constant 0 : index
    %3 = vector.load %arg9[%c1, %c0_3] : memref<18x128xf32, #tpu.memory_space<vmem>>, vector<16x128xf32>
    tpu.vector_store %arg9[%c1, %c0_3], %2 {strides = array<i32>} : memref<18x128xf32, #tpu.memory_space<vmem>>, vector<16x128xf32>,
    %cst_4 = arith.constant 0.000000e+00 : f32
    %4 = vector.broadcast %cst_4 : f32 to vector<16x128xf32>
    %cst_5 = arith.constant 0.000000e+00 : f32
    %5 = vector.broadcast %cst_5 : f32 to vector<16x128xf32>
    %cst_6 = arith.constant 0.000000e+00 : f32
    %6 = vector.broadcast %cst_6 : f32 to vector<16x128xf32>
    %cst_7 = arith.constant 0.000000e+00 : f32
    %7 = vector.broadcast %cst_7 : f32 to vector<16x128xf32>
    %c0_8 = arith.constant 0 : index
    %c0_9 = arith.constant 0 : index
    %8 = vector.load %arg9[%c0_8, %c0_9] : memref<18x128xf32, #tpu.memory_space<vmem>>, vector<16x128xf32>
    %c1_i32 = arith.constant 1 : i32
    %9 = tpu.dynamic_rotate %8 by %c1_i32 dim 1 : vector<16x128xf32>, i32 -> vector<16x128xf32>
    %c0_10 = arith.constant 0 : index
    %c0_11 = arith.constant 0 : index
    %10 = vector.load %arg1[%c0_10, %c0_11] : memref<36x128xf32, #tpu.memory_space<vmem>>, vector<1x128xf32>
    %11 = vector.broadcast %10 : vector<1x128xf32> to vector<16x128xf32>
    %12 = arith.mulf %9, %11 : vector<16x128xf32>
    %13 = arith.addf %4, %12 : vector<16x128xf32>
    %c1_12 = arith.constant 1 : index
    %c0_13 = arith.constant 0 : index
    %14 = vector.load %arg1[%c1_12, %c0_13] : memref<36x128xf32, #tpu.memory_space<vmem>>, vector<1x128xf32>
    %15 = vector.broadcast %14 : vector<1x128xf32> to vector<16x128xf32>
    %16 = arith.mulf %8, %15 : vector<16x128xf32>
    %17 = arith.addf %13, %16 : vector<16x128xf32>
    %c127_i32 = arith.constant 127 : i32
    %18 = tpu.dynamic_rotate %8 by %c127_i32 dim 1 : vector<16x128xf32>, i32 -> vector<16x128xf32>
    %c2 = arith.constant 2 : index
    %c0_14 = arith.constant 0 : index
    %19 = vector.load %arg1[%c2, %c0_14] : memref<36x128xf32, #tpu.memory_space<vmem>>, vector<1x128xf32>
    %20 = vector.broadcast %19 : vector<1x128xf32> to vector<16x128xf32>
    %21 = arith.mulf %18, %20 : vector<16x128xf32>
    %22 = arith.addf %17, %21 : vector<16x128xf32>
    %c97_i32 = arith.constant 97 : i32
    %23 = tpu.dynamic_rotate %8 by %c97_i32 dim 1 : vector<16x128xf32>, i32 -> vector<16x128xf32>
    %c9 = arith.constant 9 : index
    %c0_15 = arith.constant 0 : index
    %24 = vector.load %arg1[%c9, %c0_15] : memref<36x128xf32, #tpu.memory_space<vmem>>, vector<1x128xf32>
    %25 = vector.broadcast %24 : vector<1x128xf32> to vector<16x128xf32>
    %26 = arith.mulf %23, %25 : vector<16x128xf32>
    %27 = arith.addf %5, %26 : vector<16x128xf32>
    %c96_i32 = arith.constant 96 : i32
    %28 = tpu.dynamic_rotate %8 by %c96_i32 dim 1 : vector<16x128xf32>, i32 -> vector<16x128xf32>
    %c10 = arith.constant 10 : index
    %c0_16 = arith.constant 0 : index
    %29 = vector.load %arg1[%c10, %c0_16] : memref<36x128xf32, #tpu.memory_space<vmem>>, vector<1x128xf32>
    %30 = vector.broadcast %29 : vector<1x128xf32> to vector<16x128xf32>
    %31 = arith.mulf %28, %30 : vector<16x128xf32>
    %32 = arith.addf %27, %31 : vector<16x128xf32>
    %c95_i32 = arith.constant 95 : i32
    %33 = tpu.dynamic_rotate %8 by %c95_i32 dim 1 : vector<16x128xf32>, i32 -> vector<16x128xf32>
    %c11 = arith.constant 11 : index
    %c0_17 = arith.constant 0 : index
    %34 = vector.load %arg1[%c11, %c0_17] : memref<36x128xf32, #tpu.memory_space<vmem>>, vector<1x128xf32>
    %35 = vector.broadcast %34 : vector<1x128xf32> to vector<16x128xf32>
    %36 = arith.mulf %33, %35 : vector<16x128xf32>
    %37 = arith.addf %32, %36 : vector<16x128xf32>
    %c65_i32 = arith.constant 65 : i32
    %38 = tpu.dynamic_rotate %8 by %c65_i32 dim 1 : vector<16x128xf32>, i32 -> vector<16x128xf32>
    %c18 = arith.constant 18 : index
    %c0_18 = arith.constant 0 : index
    %39 = vector.load %arg1[%c18, %c0_18] : memref<36x128xf32, #tpu.memory_space<vmem>>, vector<1x128xf32>
    %40 = vector.broadcast %39 : vector<1x128xf32> to vector<16x128xf32>
    %41 = arith.mulf %38, %40 : vector<16x128xf32>
    %42 = arith.addf %6, %41 : vector<16x128xf32>
    %c64_i32 = arith.constant 64 : i32
    %43 = tpu.dynamic_rotate %8 by %c64_i32 dim 1 : vector<16x128xf32>, i32 -> vector<16x128xf32>
    %c19 = arith.constant 19 : index
    %c0_19 = arith.constant 0 : index
    %44 = vector.load %arg1[%c19, %c0_19] : memref<36x128xf32, #tpu.memory_space<vmem>>, vector<1x128xf32>
    %45 = vector.broadcast %44 : vector<1x128xf32> to vector<16x128xf32>
    %46 = arith.mulf %43, %45 : vector<16x128xf32>
    %47 = arith.addf %42, %46 : vector<16x128xf32>
    %c63_i32 = arith.constant 63 : i32
    %48 = tpu.dynamic_rotate %8 by %c63_i32 dim 1 : vector<16x128xf32>, i32 -> vector<16x128xf32>
    %c20 = arith.constant 20 : index
    %c0_20 = arith.constant 0 : index
    %49 = vector.load %arg1[%c20, %c0_20] : memref<36x128xf32, #tpu.memory_space<vmem>>, vector<1x128xf32>
    %50 = vector.broadcast %49 : vector<1x128xf32> to vector<16x128xf32>
    %51 = arith.mulf %48, %50 : vector<16x128xf32>
    %52 = arith.addf %47, %51 : vector<16x128xf32>
    %c33_i32 = arith.constant 33 : i32
    %53 = tpu.dynamic_rotate %8 by %c33_i32 dim 1 : vector<16x128xf32>, i32 -> vector<16x128xf32>
    %c27 = arith.constant 27 : index
    %c0_21 = arith.constant 0 : index
    %54 = vector.load %arg1[%c27, %c0_21] : memref<36x128xf32, #tpu.memory_space<vmem>>, vector<1x128xf32>
    %55 = vector.broadcast %54 : vector<1x128xf32> to vector<16x128xf32>
    %56 = arith.mulf %53, %55 : vector<16x128xf32>
    %57 = arith.addf %7, %56 : vector<16x128xf32>
    %c32_i32 = arith.constant 32 : i32
    %58 = tpu.dynamic_rotate %8 by %c32_i32 dim 1 : vector<16x128xf32>, i32 -> vector<16x128xf32>
    %c28 = arith.constant 28 : index
    %c0_22 = arith.constant 0 : index
    %59 = vector.load %arg1[%c28, %c0_22] : memref<36x128xf32, #tpu.memory_space<vmem>>, vector<1x128xf32>
    %60 = vector.broadcast %59 : vector<1x128xf32> to vector<16x128xf32>
    %61 = arith.mulf %58, %60 : vector<16x128xf32>
    %62 = arith.addf %57, %61 : vector<16x128xf32>
    %c31_i32 = arith.constant 31 : i32
    %63 = tpu.dynamic_rotate %8 by %c31_i32 dim 1 : vector<16x128xf32>, i32 -> vector<16x128xf32>
    %c29 = arith.constant 29 : index
    %c0_23 = arith.constant 0 : index
    %64 = vector.load %arg1[%c29, %c0_23] : memref<36x128xf32, #tpu.memory_space<vmem>>, vector<1x128xf32>
    %65 = vector.broadcast %64 : vector<1x128xf32> to vector<16x128xf32>
    %66 = arith.mulf %63, %65 : vector<16x128xf32>
    %67 = arith.addf %62, %66 : vector<16x128xf32>
    %c1_24 = arith.constant 1 : index
    %c0_25 = arith.constant 0 : index
    %68 = vector.load %arg9[%c1_24, %c0_25] : memref<18x128xf32, #tpu.memory_space<vmem>>, vector<16x128xf32>
    %c1_i32_26 = arith.constant 1 : i32
    %69 = tpu.dynamic_rotate %68 by %c1_i32_26 dim 1 : vector<16x128xf32>, i32 -> vector<16x128xf32>
    %c3 = arith.constant 3 : index
    %c0_27 = arith.constant 0 : index
    %70 = vector.load %arg1[%c3, %c0_27] : memref<36x128xf32, #tpu.memory_space<vmem>>, vector<1x128xf32>
    %71 = vector.broadcast %70 : vector<1x128xf32> to vector<16x128xf32>
    %72 = arith.mulf %69, %71 : vector<16x128xf32>
    %73 = arith.addf %22, %72 : vector<16x128xf32>
    %c4 = arith.constant 4 : index
    %c0_28 = arith.constant 0 : index
    %74 = vector.load %arg1[%c4, %c0_28] : memref<36x128xf32, #tpu.memory_space<vmem>>, vector<1x128xf32>
    %75 = vector.broadcast %74 : vector<1x128xf32> to vector<16x128xf32>
    %76 = arith.mulf %68, %75 : vector<16x128xf32>
    %77 = arith.addf %73, %76 : vector<16x128xf32>
    %c127_i32_29 = arith.constant 127 : i32
    %78 = tpu.dynamic_rotate %68 by %c127_i32_29 dim 1 : vector<16x128xf32>, i32 -> vector<16x128xf32>
    %c5 = arith.constant 5 : index
    %c0_30 = arith.constant 0 : index
    %79 = vector.load %arg1[%c5, %c0_30] : memref<36x128xf32, #tpu.memory_space<vmem>>, vector<1x128xf32>
    %80 = vector.broadcast %79 : vector<1x128xf32> to vector<16x128xf32>
    %81 = arith.mulf %78, %80 : vector<16x128xf32>
    %82 = arith.addf %77, %81 : vector<16x128xf32>
    %c97_i32_31 = arith.constant 97 : i32
    %83 = tpu.dynamic_rotate %68 by %c97_i32_31 dim 1 : vector<16x128xf32>, i32 -> vector<16x128xf32>
    %c12 = arith.constant 12 : index
    %c0_32 = arith.constant 0 : index
    %84 = vector.load %arg1[%c12, %c0_32] : memref<36x128xf32, #tpu.memory_space<vmem>>, vector<1x128xf32>
    %85 = vector.broadcast %84 : vector<1x128xf32> to vector<16x128xf32>
    %86 = arith.mulf %83, %85 : vector<16x128xf32>
    %87 = arith.addf %37, %86 : vector<16x128xf32>
    %c96_i32_33 = arith.constant 96 : i32
    %88 = tpu.dynamic_rotate %68 by %c96_i32_33 dim 1 : vector<16x128xf32>, i32 -> vector<16x128xf32>
    %c13 = arith.constant 13 : index
    %c0_34 = arith.constant 0 : index
    %89 = vector.load %arg1[%c13, %c0_34] : memref<36x128xf32, #tpu.memory_space<vmem>>, vector<1x128xf32>
    %90 = vector.broadcast %89 : vector<1x128xf32> to vector<16x128xf32>
    %91 = arith.mulf %88, %90 : vector<16x128xf32>
    %92 = arith.addf %87, %91 : vector<16x128xf32>
    %c95_i32_35 = arith.constant 95 : i32
    %93 = tpu.dynamic_rotate %68 by %c95_i32_35 dim 1 : vector<16x128xf32>, i32 -> vector<16x128xf32>
    %c14 = arith.constant 14 : index
    %c0_36 = arith.constant 0 : index
    %94 = vector.load %arg1[%c14, %c0_36] : memref<36x128xf32, #tpu.memory_space<vmem>>, vector<1x128xf32>
    %95 = vector.broadcast %94 : vector<1x128xf32> to vector<16x128xf32>
    %96 = arith.mulf %93, %95 : vector<16x128xf32>
    %97 = arith.addf %92, %96 : vector<16x128xf32>
    %c65_i32_37 = arith.constant 65 : i32
    %98 = tpu.dynamic_rotate %68 by %c65_i32_37 dim 1 : vector<16x128xf32>, i32 -> vector<16x128xf32>
    %c21 = arith.constant 21 : index
    %c0_38 = arith.constant 0 : index
    %99 = vector.load %arg1[%c21, %c0_38] : memref<36x128xf32, #tpu.memory_space<vmem>>, vector<1x128xf32>
    %100 = vector.broadcast %99 : vector<1x128xf32> to vector<16x128xf32>
    %101 = arith.mulf %98, %100 : vector<16x128xf32>
    %102 = arith.addf %52, %101 : vector<16x128xf32>
    %c64_i32_39 = arith.constant 64 : i32
    %103 = tpu.dynamic_rotate %68 by %c64_i32_39 dim 1 : vector<16x128xf32>, i32 -> vector<16x128xf32>
    %c22 = arith.constant 22 : index
    %c0_40 = arith.constant 0 : index
    %104 = vector.load %arg1[%c22, %c0_40] : memref<36x128xf32, #tpu.memory_space<vmem>>, vector<1x128xf32>
    %105 = vector.broadcast %104 : vector<1x128xf32> to vector<16x128xf32>
    %106 = arith.mulf %103, %105 : vector<16x128xf32>
    %107 = arith.addf %102, %106 : vector<16x128xf32>
    %c63_i32_41 = arith.constant 63 : i32
    %108 = tpu.dynamic_rotate %68 by %c63_i32_41 dim 1 : vector<16x128xf32>, i32 -> vector<16x128xf32>
    %c23 = arith.constant 23 : index
    %c0_42 = arith.constant 0 : index
    %109 = vector.load %arg1[%c23, %c0_42] : memref<36x128xf32, #tpu.memory_space<vmem>>, vector<1x128xf32>
    %110 = vector.broadcast %109 : vector<1x128xf32> to vector<16x128xf32>
    %111 = arith.mulf %108, %110 : vector<16x128xf32>
    %112 = arith.addf %107, %111 : vector<16x128xf32>
    %c33_i32_43 = arith.constant 33 : i32
    %113 = tpu.dynamic_rotate %68 by %c33_i32_43 dim 1 : vector<16x128xf32>, i32 -> vector<16x128xf32>
    %c30 = arith.constant 30 : index
    %c0_44 = arith.constant 0 : index
    %114 = vector.load %arg1[%c30, %c0_44] : memref<36x128xf32, #tpu.memory_space<vmem>>, vector<1x128xf32>
    %115 = vector.broadcast %114 : vector<1x128xf32> to vector<16x128xf32>
    %116 = arith.mulf %113, %115 : vector<16x128xf32>
    %117 = arith.addf %67, %116 : vector<16x128xf32>
    %c32_i32_45 = arith.constant 32 : i32
    %118 = tpu.dynamic_rotate %68 by %c32_i32_45 dim 1 : vector<16x128xf32>, i32 -> vector<16x128xf32>
    %c31 = arith.constant 31 : index
    %c0_46 = arith.constant 0 : index
    %119 = vector.load %arg1[%c31, %c0_46] : memref<36x128xf32, #tpu.memory_space<vmem>>, vector<1x128xf32>
    %120 = vector.broadcast %119 : vector<1x128xf32> to vector<16x128xf32>
    %121 = arith.mulf %118, %120 : vector<16x128xf32>
    %122 = arith.addf %117, %121 : vector<16x128xf32>
    %c31_i32_47 = arith.constant 31 : i32
    %123 = tpu.dynamic_rotate %68 by %c31_i32_47 dim 1 : vector<16x128xf32>, i32 -> vector<16x128xf32>
    %c32 = arith.constant 32 : index
    %c0_48 = arith.constant 0 : index
    %124 = vector.load %arg1[%c32, %c0_48] : memref<36x128xf32, #tpu.memory_space<vmem>>, vector<1x128xf32>
    %125 = vector.broadcast %124 : vector<1x128xf32> to vector<16x128xf32>
    %126 = arith.mulf %123, %125 : vector<16x128xf32>
    %127 = arith.addf %122, %126 : vector<16x128xf32>
    %c2_49 = arith.constant 2 : index
    %c0_50 = arith.constant 0 : index
    %128 = vector.load %arg9[%c2_49, %c0_50] : memref<18x128xf32, #tpu.memory_space<vmem>>, vector<16x128xf32>
    %c1_i32_51 = arith.constant 1 : i32
    %129 = tpu.dynamic_rotate %128 by %c1_i32_51 dim 1 : vector<16x128xf32>, i32 -> vector<16x128xf32>
    %c6 = arith.constant 6 : index
    %c0_52 = arith.constant 0 : index
    %130 = vector.load %arg1[%c6, %c0_52] : memref<36x128xf32, #tpu.memory_space<vmem>>, vector<1x128xf32>
    %131 = vector.broadcast %130 : vector<1x128xf32> to vector<16x128xf32>
    %132 = arith.mulf %129, %131 : vector<16x128xf32>
    %133 = arith.addf %82, %132 : vector<16x128xf32>
    %c7 = arith.constant 7 : index
    %c0_53 = arith.constant 0 : index
    %134 = vector.load %arg1[%c7, %c0_53] : memref<36x128xf32, #tpu.memory_space<vmem>>, vector<1x128xf32>
    %135 = vector.broadcast %134 : vector<1x128xf32> to vector<16x128xf32>
    %136 = arith.mulf %128, %135 : vector<16x128xf32>
    %137 = arith.addf %133, %136 : vector<16x128xf32>
    %c127_i32_54 = arith.constant 127 : i32
    %138 = tpu.dynamic_rotate %128 by %c127_i32_54 dim 1 : vector<16x128xf32>, i32 -> vector<16x128xf32>
    %c8 = arith.constant 8 : index
    %c0_55 = arith.constant 0 : index
    %139 = vector.load %arg1[%c8, %c0_55] : memref<36x128xf32, #tpu.memory_space<vmem>>, vector<1x128xf32>
    %140 = vector.broadcast %139 : vector<1x128xf32> to vector<16x128xf32>
    %141 = arith.mulf %138, %140 : vector<16x128xf32>
    %142 = arith.addf %137, %141 : vector<16x128xf32>
    %c97_i32_56 = arith.constant 97 : i32
    %143 = tpu.dynamic_rotate %128 by %c97_i32_56 dim 1 : vector<16x128xf32>, i32 -> vector<16x128xf32>
    %c15 = arith.constant 15 : index
    %c0_57 = arith.constant 0 : index
    %144 = vector.load %arg1[%c15, %c0_57] : memref<36x128xf32, #tpu.memory_space<vmem>>, vector<1x128xf32>
    %145 = vector.broadcast %144 : vector<1x128xf32> to vector<16x128xf32>
    %146 = arith.mulf %143, %145 : vector<16x128xf32>
    %147 = arith.addf %97, %146 : vector<16x128xf32>
    %c96_i32_58 = arith.constant 96 : i32
    %148 = tpu.dynamic_rotate %128 by %c96_i32_58 dim 1 : vector<16x128xf32>, i32 -> vector<16x128xf32>
    %c16 = arith.constant 16 : index
    %c0_59 = arith.constant 0 : index
    %149 = vector.load %arg1[%c16, %c0_59] : memref<36x128xf32, #tpu.memory_space<vmem>>, vector<1x128xf32>
    %150 = vector.broadcast %149 : vector<1x128xf32> to vector<16x128xf32>
    %151 = arith.mulf %148, %150 : vector<16x128xf32>
    %152 = arith.addf %147, %151 : vector<16x128xf32>
    %c95_i32_60 = arith.constant 95 : i32
    %153 = tpu.dynamic_rotate %128 by %c95_i32_60 dim 1 : vector<16x128xf32>, i32 -> vector<16x128xf32>
    %c17 = arith.constant 17 : index
    %c0_61 = arith.constant 0 : index
    %154 = vector.load %arg1[%c17, %c0_61] : memref<36x128xf32, #tpu.memory_space<vmem>>, vector<1x128xf32>
    %155 = vector.broadcast %154 : vector<1x128xf32> to vector<16x128xf32>
    %156 = arith.mulf %153, %155 : vector<16x128xf32>
    %157 = arith.addf %152, %156 : vector<16x128xf32>
    %c65_i32_62 = arith.constant 65 : i32
    %158 = tpu.dynamic_rotate %128 by %c65_i32_62 dim 1 : vector<16x128xf32>, i32 -> vector<16x128xf32>
    %c24 = arith.constant 24 : index
    %c0_63 = arith.constant 0 : index
    %159 = vector.load %arg1[%c24, %c0_63] : memref<36x128xf32, #tpu.memory_space<vmem>>, vector<1x128xf32>
    %160 = vector.broadcast %159 : vector<1x128xf32> to vector<16x128xf32>
    %161 = arith.mulf %158, %160 : vector<16x128xf32>
    %162 = arith.addf %112, %161 : vector<16x128xf32>
    %c64_i32_64 = arith.constant 64 : i32
    %163 = tpu.dynamic_rotate %128 by %c64_i32_64 dim 1 : vector<16x128xf32>, i32 -> vector<16x128xf32>
    %c25 = arith.constant 25 : index
    %c0_65 = arith.constant 0 : index
    %164 = vector.load %arg1[%c25, %c0_65] : memref<36x128xf32, #tpu.memory_space<vmem>>, vector<1x128xf32>
    %165 = vector.broadcast %164 : vector<1x128xf32> to vector<16x128xf32>
    %166 = arith.mulf %163, %165 : vector<16x128xf32>
    %167 = arith.addf %162, %166 : vector<16x128xf32>
    %c63_i32_66 = arith.constant 63 : i32
    %168 = tpu.dynamic_rotate %128 by %c63_i32_66 dim 1 : vector<16x128xf32>, i32 -> vector<16x128xf32>
    %c26 = arith.constant 26 : index
    %c0_67 = arith.constant 0 : index
    %169 = vector.load %arg1[%c26, %c0_67] : memref<36x128xf32, #tpu.memory_space<vmem>>, vector<1x128xf32>
    %170 = vector.broadcast %169 : vector<1x128xf32> to vector<16x128xf32>
    %171 = arith.mulf %168, %170 : vector<16x128xf32>
    %172 = arith.addf %167, %171 : vector<16x128xf32>
    %c33_i32_68 = arith.constant 33 : i32
    %173 = tpu.dynamic_rotate %128 by %c33_i32_68 dim 1 : vector<16x128xf32>, i32 -> vector<16x128xf32>
    %c33 = arith.constant 33 : index
    %c0_69 = arith.constant 0 : index
    %174 = vector.load %arg1[%c33, %c0_69] : memref<36x128xf32, #tpu.memory_space<vmem>>, vector<1x128xf32>
    %175 = vector.broadcast %174 : vector<1x128xf32> to vector<16x128xf32>
    %176 = arith.mulf %173, %175 : vector<16x128xf32>
    %177 = arith.addf %127, %176 : vector<16x128xf32>
    %c32_i32_70 = arith.constant 32 : i32
    %178 = tpu.dynamic_rotate %128 by %c32_i32_70 dim 1 : vector<16x128xf32>, i32 -> vector<16x128xf32>
    %c34 = arith.constant 34 : index
    %c0_71 = arith.constant 0 : index
    %179 = vector.load %arg1[%c34, %c0_71] : memref<36x128xf32, #tpu.memory_space<vmem>>, vector<1x128xf32>
    %180 = vector.broadcast %179 : vector<1x128xf32> to vector<16x128xf32>
    %181 = arith.mulf %178, %180 : vector<16x128xf32>
    %182 = arith.addf %177, %181 : vector<16x128xf32>
    %c31_i32_72 = arith.constant 31 : i32
    %183 = tpu.dynamic_rotate %128 by %c31_i32_72 dim 1 : vector<16x128xf32>, i32 -> vector<16x128xf32>
    %c35 = arith.constant 35 : index
    %c0_73 = arith.constant 0 : index
    %184 = vector.load %arg1[%c35, %c0_73] : memref<36x128xf32, #tpu.memory_space<vmem>>, vector<1x128xf32>
    %185 = vector.broadcast %184 : vector<1x128xf32> to vector<16x128xf32>
    %186 = arith.mulf %183, %185 : vector<16x128xf32>
    %187 = arith.addf %182, %186 : vector<16x128xf32>
    %c0_74 = arith.constant 0 : index
    %c0_75 = arith.constant 0 : index
    %188 = vector.load %arg2[%c0_74, %c0_75] : memref<1x128xf32, #tpu.memory_space<vmem>>, vector<1x128xf32>
    %189 = vector.broadcast %188 : vector<1x128xf32> to vector<16x128xf32>
    %190 = arith.addf %189, %142 : vector<16x128xf32>
    %191 = arith.addf %190, %157 : vector<16x128xf32>
    %192 = arith.addf %191, %172 : vector<16x128xf32>
    %193 = arith.addf %192, %187 : vector<16x128xf32>
    %c0_76 = arith.constant 0 : index
    %c0_77 = arith.constant 0 : index
    %194 = vector.load %arg7[%c0_76, %c0_77] : memref<128x128xf32, #tpu.memory_space<vmem>>, vector<128x128xf32>
    %cst_78 = arith.constant dense<0.000000e+00> : vector<16x128xf32>
    %195 = tpu.matmul %193, %194, %cst_78 {dimension_numbers = #tpu.dot_dimension_numbers<[1], [0], [0], [1], [0, 0, 1, 1], [], []>, precision = #tpu.contract_precision<fp32>} : vector<16x128xf32>, vector<128x128xf32>, vector<16x128xf32> -> vector<16x128xf32>
    %cst_79 = arith.constant dense<0.000000e+00> : vector<128xf32>
    %196 = vector.multi_reduction <add>, %195, %cst_79 [0] : vector<16x128xf32> to vector<128xf32>
    %197 = vector.shape_cast %196 : vector<128xf32> to vector<1x128xf32>
    %cst_80 = arith.constant 0.001953125 : f32
    %198 = vector.broadcast %cst_80 : f32 to vector<1x128xf32>
    %199 = arith.mulf %197, %198 : vector<1x128xf32>
    %200 = vector.broadcast %199 : vector<1x128xf32> to vector<16x128xf32>
    %201 = arith.subf %193, %200 : vector<16x128xf32>
    %202 = arith.mulf %201, %201 : vector<16x128xf32>
    %cst_81 = arith.constant dense<0.000000e+00> : vector<16x128xf32>
    %203 = tpu.matmul %202, %194, %cst_81 {dimension_numbers = #tpu.dot_dimension_numbers<[1], [0], [0], [1], [0, 0, 1, 1], [], []>, precision = #tpu.contract_precision<fp32>} : vector<16x128xf32>, vector<128x128xf32>, vector<16x128xf32> -> vector<16x128xf32>
    %cst_82 = arith.constant dense<0.000000e+00> : vector<128xf32>
    %204 = vector.multi_reduction <add>, %203, %cst_82 [0] : vector<16x128xf32> to vector<128xf32>
    %205 = vector.shape_cast %204 : vector<128xf32> to vector<1x128xf32>
    %cst_83 = arith.constant 0.001953125 : f32
    %206 = vector.broadcast %cst_83 : f32 to vector<1x128xf32>
    %207 = arith.mulf %205, %206 : vector<1x128xf32>
    %cst_84 = arith.constant 9.99999974E-6 : f32
    %208 = vector.broadcast %cst_84 : f32 to vector<1x128xf32>
    %209 = arith.addf %207, %208 : vector<1x128xf32>
    %210 = math.rsqrt %209 : vector<1x128xf32>
    %c0_85 = arith.constant 0 : index
    %c0_86 = arith.constant 0 : index
    %211 = vector.load %arg5[%c0_85, %c0_86] : memref<1x128xf32, #tpu.memory_space<vmem>>, vector<1x128xf32>
    %212 = arith.mulf %210, %211 : vector<1x128xf32>
    %213 = vector.broadcast %212 : vector<1x128xf32> to vector<16x128xf32>
    %214 = arith.mulf %201, %213 : vector<16x128xf32>
    %c0_87 = arith.constant 0 : index
    %c0_88 = arith.constant 0 : index
    %215 = vector.load %arg6[%c0_87, %c0_88] : memref<1x128xf32, #tpu.memory_space<vmem>>, vector<1x128xf32>
    %216 = vector.broadcast %215 : vector<1x128xf32> to vector<16x128xf32>
    %217 = arith.addf %214, %216 : vector<16x128xf32>
    %218 = arith.negf %217 : vector<16x128xf32>
    %219 = math.exp %218 : vector<16x128xf32>
    %cst_89 = arith.constant 1.000000e+00 : f32
    %220 = vector.broadcast %cst_89 : f32 to vector<16x128xf32>
    %221 = arith.addf %220, %219 : vector<16x128xf32>
    %222 = arith.divf %220, %221 : vector<16x128xf32>
    %223 = arith.mulf %217, %222 : vector<16x128xf32>
    %c1_90 = arith.constant 1 : index
    %c0_91 = arith.constant 0 : index
    %224 = vector.load %arg9[%c1_90, %c0_91] : memref<18x128xf32, #tpu.memory_space<vmem>>, vector<16x128xf32>
    tpu.vector_store %arg9[%c1_90, %c0_91], %223 {strides = array<i32>} : memref<18x128xf32, #tpu.memory_space<vmem>>, vector<16x128xf32>,
    %cst_92 = arith.constant 0.000000e+00 : f32
    %225 = vector.broadcast %cst_92 : f32 to vector<16x128xf32>
    %cst_93 = arith.constant 0.000000e+00 : f32
    %226 = vector.broadcast %cst_93 : f32 to vector<16x128xf32>
    %cst_94 = arith.constant 0.000000e+00 : f32
    %227 = vector.broadcast %cst_94 : f32 to vector<16x128xf32>
    %cst_95 = arith.constant 0.000000e+00 : f32
    %228 = vector.broadcast %cst_95 : f32 to vector<16x128xf32>
    %c0_96 = arith.constant 0 : index
    %c0_97 = arith.constant 0 : index
    %229 = vector.load %arg9[%c0_96, %c0_97] : memref<18x128xf32, #tpu.memory_space<vmem>>, vector<16x128xf32>
    %c1_i32_98 = arith.constant 1 : i32
    %230 = tpu.dynamic_rotate %229 by %c1_i32_98 dim 1 : vector<16x128xf32>, i32 -> vector<16x128xf32>
    %c0_99 = arith.constant 0 : index
    %c0_100 = arith.constant 0 : index
    %231 = vector.load %arg3[%c0_99, %c0_100] : memref<36x128xf32, #tpu.memory_space<vmem>>, vector<1x128xf32>
    %232 = vector.broadcast %231 : vector<1x128xf32> to vector<16x128xf32>
    %233 = arith.mulf %230, %232 : vector<16x128xf32>
    %234 = arith.addf %225, %233 : vector<16x128xf32>
    %c1_101 = arith.constant 1 : index
    %c0_102 = arith.constant 0 : index
    %235 = vector.load %arg3[%c1_101, %c0_102] : memref<36x128xf32, #tpu.memory_space<vmem>>, vector<1x128xf32>
    %236 = vector.broadcast %235 : vector<1x128xf32> to vector<16x128xf32>
    %237 = arith.mulf %229, %236 : vector<16x128xf32>
    %238 = arith.addf %234, %237 : vector<16x128xf32>
    %c127_i32_103 = arith.constant 127 : i32
    %239 = tpu.dynamic_rotate %229 by %c127_i32_103 dim 1 : vector<16x128xf32>, i32 -> vector<16x128xf32>
    %c2_104 = arith.constant 2 : index
    %c0_105 = arith.constant 0 : index
    %240 = vector.load %arg3[%c2_104, %c0_105] : memref<36x128xf32, #tpu.memory_space<vmem>>, vector<1x128xf32>
    %241 = vector.broadcast %240 : vector<1x128xf32> to vector<16x128xf32>
    %242 = arith.mulf %239, %241 : vector<16x128xf32>
    %243 = arith.addf %238, %242 : vector<16x128xf32>
    %c97_i32_106 = arith.constant 97 : i32
    %244 = tpu.dynamic_rotate %229 by %c97_i32_106 dim 1 : vector<16x128xf32>, i32 -> vector<16x128xf32>
    %c9_107 = arith.constant 9 : index
    %c0_108 = arith.constant 0 : index
    %245 = vector.load %arg3[%c9_107, %c0_108] : memref<36x128xf32, #tpu.memory_space<vmem>>, vector<1x128xf32>
    %246 = vector.broadcast %245 : vector<1x128xf32> to vector<16x128xf32>
    %247 = arith.mulf %244, %246 : vector<16x128xf32>
    %248 = arith.addf %226, %247 : vector<16x128xf32>
    %c96_i32_109 = arith.constant 96 : i32
    %249 = tpu.dynamic_rotate %229 by %c96_i32_109 dim 1 : vector<16x128xf32>, i32 -> vector<16x128xf32>
    %c10_110 = arith.constant 10 : index
    %c0_111 = arith.constant 0 : index
    %250 = vector.load %arg3[%c10_110, %c0_111] : memref<36x128xf32, #tpu.memory_space<vmem>>, vector<1x128xf32>
    %251 = vector.broadcast %250 : vector<1x128xf32> to vector<16x128xf32>
    %252 = arith.mulf %249, %251 : vector<16x128xf32>
    %253 = arith.addf %248, %252 : vector<16x128xf32>
    %c95_i32_112 = arith.constant 95 : i32
    %254 = tpu.dynamic_rotate %229 by %c95_i32_112 dim 1 : vector<16x128xf32>, i32 -> vector<16x128xf32>
    %c11_113 = arith.constant 11 : index
    %c0_114 = arith.constant 0 : index
    %255 = vector.load %arg3[%c11_113, %c0_114] : memref<36x128xf32, #tpu.memory_space<vmem>>, vector<1x128xf32>
    %256 = vector.broadcast %255 : vector<1x128xf32> to vector<16x128xf32>
    %257 = arith.mulf %254, %256 : vector<16x128xf32>
    %258 = arith.addf %253, %257 : vector<16x128xf32>
    %c65_i32_115 = arith.constant 65 : i32
    %259 = tpu.dynamic_rotate %229 by %c65_i32_115 dim 1 : vector<16x128xf32>, i32 -> vector<16x128xf32>
    %c18_116 = arith.constant 18 : index
    %c0_117 = arith.constant 0 : index
    %260 = vector.load %arg3[%c18_116, %c0_117] : memref<36x128xf32, #tpu.memory_space<vmem>>, vector<1x128xf32>
    %261 = vector.broadcast %260 : vector<1x128xf32> to vector<16x128xf32>
    %262 = arith.mulf %259, %261 : vector<16x128xf32>
    %263 = arith.addf %227, %262 : vector<16x128xf32>
    %c64_i32_118 = arith.constant 64 : i32
    %264 = tpu.dynamic_rotate %229 by %c64_i32_118 dim 1 : vector<16x128xf32>, i32 -> vector<16x128xf32>
    %c19_119 = arith.constant 19 : index
    %c0_120 = arith.constant 0 : index
    %265 = vector.load %arg3[%c19_119, %c0_120] : memref<36x128xf32, #tpu.memory_space<vmem>>, vector<1x128xf32>
    %266 = vector.broadcast %265 : vector<1x128xf32> to vector<16x128xf32>
    %267 = arith.mulf %264, %266 : vector<16x128xf32>
    %268 = arith.addf %263, %267 : vector<16x128xf32>
    %c63_i32_121 = arith.constant 63 : i32
    %269 = tpu.dynamic_rotate %229 by %c63_i32_121 dim 1 : vector<16x128xf32>, i32 -> vector<16x128xf32>
    %c20_122 = arith.constant 20 : index
    %c0_123 = arith.constant 0 : index
    %270 = vector.load %arg3[%c20_122, %c0_123] : memref<36x128xf32, #tpu.memory_space<vmem>>, vector<1x128xf32>
    %271 = vector.broadcast %270 : vector<1x128xf32> to vector<16x128xf32>
    %272 = arith.mulf %269, %271 : vector<16x128xf32>
    %273 = arith.addf %268, %272 : vector<16x128xf32>
    %c33_i32_124 = arith.constant 33 : i32
    %274 = tpu.dynamic_rotate %229 by %c33_i32_124 dim 1 : vector<16x128xf32>, i32 -> vector<16x128xf32>
    %c27_125 = arith.constant 27 : index
    %c0_126 = arith.constant 0 : index
    %275 = vector.load %arg3[%c27_125, %c0_126] : memref<36x128xf32, #tpu.memory_space<vmem>>, vector<1x128xf32>
    %276 = vector.broadcast %275 : vector<1x128xf32> to vector<16x128xf32>
    %277 = arith.mulf %274, %276 : vector<16x128xf32>
    %278 = arith.addf %228, %277 : vector<16x128xf32>
    %c32_i32_127 = arith.constant 32 : i32
    %279 = tpu.dynamic_rotate %229 by %c32_i32_127 dim 1 : vector<16x128xf32>, i32 -> vector<16x128xf32>
    %c28_128 = arith.constant 28 : index
    %c0_129 = arith.constant 0 : index
    %280 = vector.load %arg3[%c28_128, %c0_129] : memref<36x128xf32, #tpu.memory_space<vmem>>, vector<1x128xf32>
    %281 = vector.broadcast %280 : vector<1x128xf32> to vector<16x128xf32>
    %282 = arith.mulf %279, %281 : vector<16x128xf32>
    %283 = arith.addf %278, %282 : vector<16x128xf32>
    %c31_i32_130 = arith.constant 31 : i32
    %284 = tpu.dynamic_rotate %229 by %c31_i32_130 dim 1 : vector<16x128xf32>, i32 -> vector<16x128xf32>
    %c29_131 = arith.constant 29 : index
    %c0_132 = arith.constant 0 : index
    %285 = vector.load %arg3[%c29_131, %c0_132] : memref<36x128xf32, #tpu.memory_space<vmem>>, vector<1x128xf32>
    %286 = vector.broadcast %285 : vector<1x128xf32> to vector<16x128xf32>
    %287 = arith.mulf %284, %286 : vector<16x128xf32>
    %288 = arith.addf %283, %287 : vector<16x128xf32>
    %c1_133 = arith.constant 1 : index
    %c0_134 = arith.constant 0 : index
    %289 = vector.load %arg9[%c1_133, %c0_134] : memref<18x128xf32, #tpu.memory_space<vmem>>, vector<16x128xf32>
    %c1_i32_135 = arith.constant 1 : i32
    %290 = tpu.dynamic_rotate %289 by %c1_i32_135 dim 1 : vector<16x128xf32>, i32 -> vector<16x128xf32>
    %c3_136 = arith.constant 3 : index
    %c0_137 = arith.constant 0 : index
    %291 = vector.load %arg3[%c3_136, %c0_137] : memref<36x128xf32, #tpu.memory_space<vmem>>, vector<1x128xf32>
    %292 = vector.broadcast %291 : vector<1x128xf32> to vector<16x128xf32>
    %293 = arith.mulf %290, %292 : vector<16x128xf32>
    %294 = arith.addf %243, %293 : vector<16x128xf32>
    %c4_138 = arith.constant 4 : index
    %c0_139 = arith.constant 0 : index
    %295 = vector.load %arg3[%c4_138, %c0_139] : memref<36x128xf32, #tpu.memory_space<vmem>>, vector<1x128xf32>
    %296 = vector.broadcast %295 : vector<1x128xf32> to vector<16x128xf32>
    %297 = arith.mulf %289, %296 : vector<16x128xf32>
    %298 = arith.addf %294, %297 : vector<16x128xf32>
    %c127_i32_140 = arith.constant 127 : i32
    %299 = tpu.dynamic_rotate %289 by %c127_i32_140 dim 1 : vector<16x128xf32>, i32 -> vector<16x128xf32>
    %c5_141 = arith.constant 5 : index
    %c0_142 = arith.constant 0 : index
    %300 = vector.load %arg3[%c5_141, %c0_142] : memref<36x128xf32, #tpu.memory_space<vmem>>, vector<1x128xf32>
    %301 = vector.broadcast %300 : vector<1x128xf32> to vector<16x128xf32>
    %302 = arith.mulf %299, %301 : vector<16x128xf32>
    %303 = arith.addf %298, %302 : vector<16x128xf32>
    %c97_i32_143 = arith.constant 97 : i32
    %304 = tpu.dynamic_rotate %289 by %c97_i32_143 dim 1 : vector<16x128xf32>, i32 -> vector<16x128xf32>
    %c12_144 = arith.constant 12 : index
    %c0_145 = arith.constant 0 : index
    %305 = vector.load %arg3[%c12_144, %c0_145] : memref<36x128xf32, #tpu.memory_space<vmem>>, vector<1x128xf32>
    %306 = vector.broadcast %305 : vector<1x128xf32> to vector<16x128xf32>
    %307 = arith.mulf %304, %306 : vector<16x128xf32>
    %308 = arith.addf %258, %307 : vector<16x128xf32>
    %c96_i32_146 = arith.constant 96 : i32
    %309 = tpu.dynamic_rotate %289 by %c96_i32_146 dim 1 : vector<16x128xf32>, i32 -> vector<16x128xf32>
    %c13_147 = arith.constant 13 : index
    %c0_148 = arith.constant 0 : index
    %310 = vector.load %arg3[%c13_147, %c0_148] : memref<36x128xf32, #tpu.memory_space<vmem>>, vector<1x128xf32>
    %311 = vector.broadcast %310 : vector<1x128xf32> to vector<16x128xf32>
    %312 = arith.mulf %309, %311 : vector<16x128xf32>
    %313 = arith.addf %308, %312 : vector<16x128xf32>
    %c95_i32_149 = arith.constant 95 : i32
    %314 = tpu.dynamic_rotate %289 by %c95_i32_149 dim 1 : vector<16x128xf32>, i32 -> vector<16x128xf32>
    %c14_150 = arith.constant 14 : index
    %c0_151 = arith.constant 0 : index
    %315 = vector.load %arg3[%c14_150, %c0_151] : memref<36x128xf32, #tpu.memory_space<vmem>>, vector<1x128xf32>
    %316 = vector.broadcast %315 : vector<1x128xf32> to vector<16x128xf32>
    %317 = arith.mulf %314, %316 : vector<16x128xf32>
    %318 = arith.addf %313, %317 : vector<16x128xf32>
    %c65_i32_152 = arith.constant 65 : i32
    %319 = tpu.dynamic_rotate %289 by %c65_i32_152 dim 1 : vector<16x128xf32>, i32 -> vector<16x128xf32>
    %c21_153 = arith.constant 21 : index
    %c0_154 = arith.constant 0 : index
    %320 = vector.load %arg3[%c21_153, %c0_154] : memref<36x128xf32, #tpu.memory_space<vmem>>, vector<1x128xf32>
    %321 = vector.broadcast %320 : vector<1x128xf32> to vector<16x128xf32>
    %322 = arith.mulf %319, %321 : vector<16x128xf32>
    %323 = arith.addf %273, %322 : vector<16x128xf32>
    %c64_i32_155 = arith.constant 64 : i32
    %324 = tpu.dynamic_rotate %289 by %c64_i32_155 dim 1 : vector<16x128xf32>, i32 -> vector<16x128xf32>
    %c22_156 = arith.constant 22 : index
    %c0_157 = arith.constant 0 : index
    %325 = vector.load %arg3[%c22_156, %c0_157] : memref<36x128xf32, #tpu.memory_space<vmem>>, vector<1x128xf32>
    %326 = vector.broadcast %325 : vector<1x128xf32> to vector<16x128xf32>
    %327 = arith.mulf %324, %326 : vector<16x128xf32>
    %328 = arith.addf %323, %327 : vector<16x128xf32>
    %c63_i32_158 = arith.constant 63 : i32
    %329 = tpu.dynamic_rotate %289 by %c63_i32_158 dim 1 : vector<16x128xf32>, i32 -> vector<16x128xf32>
    %c23_159 = arith.constant 23 : index
    %c0_160 = arith.constant 0 : index
    %330 = vector.load %arg3[%c23_159, %c0_160] : memref<36x128xf32, #tpu.memory_space<vmem>>, vector<1x128xf32>
    %331 = vector.broadcast %330 : vector<1x128xf32> to vector<16x128xf32>
    %332 = arith.mulf %329, %331 : vector<16x128xf32>
    %333 = arith.addf %328, %332 : vector<16x128xf32>
    %c33_i32_161 = arith.constant 33 : i32
    %334 = tpu.dynamic_rotate %289 by %c33_i32_161 dim 1 : vector<16x128xf32>, i32 -> vector<16x128xf32>
    %c30_162 = arith.constant 30 : index
    %c0_163 = arith.constant 0 : index
    %335 = vector.load %arg3[%c30_162, %c0_163] : memref<36x128xf32, #tpu.memory_space<vmem>>, vector<1x128xf32>
    %336 = vector.broadcast %335 : vector<1x128xf32> to vector<16x128xf32>
    %337 = arith.mulf %334, %336 : vector<16x128xf32>
    %338 = arith.addf %288, %337 : vector<16x128xf32>
    %c32_i32_164 = arith.constant 32 : i32
    %339 = tpu.dynamic_rotate %289 by %c32_i32_164 dim 1 : vector<16x128xf32>, i32 -> vector<16x128xf32>
    %c31_165 = arith.constant 31 : index
    %c0_166 = arith.constant 0 : index
    %340 = vector.load %arg3[%c31_165, %c0_166] : memref<36x128xf32, #tpu.memory_space<vmem>>, vector<1x128xf32>
    %341 = vector.broadcast %340 : vector<1x128xf32> to vector<16x128xf32>
    %342 = arith.mulf %339, %341 : vector<16x128xf32>
    %343 = arith.addf %338, %342 : vector<16x128xf32>
    %c31_i32_167 = arith.constant 31 : i32
    %344 = tpu.dynamic_rotate %289 by %c31_i32_167 dim 1 : vector<16x128xf32>, i32 -> vector<16x128xf32>
    %c32_168 = arith.constant 32 : index
    %c0_169 = arith.constant 0 : index
    %345 = vector.load %arg3[%c32_168, %c0_169] : memref<36x128xf32, #tpu.memory_space<vmem>>, vector<1x128xf32>
    %346 = vector.broadcast %345 : vector<1x128xf32> to vector<16x128xf32>
    %347 = arith.mulf %344, %346 : vector<16x128xf32>
    %348 = arith.addf %343, %347 : vector<16x128xf32>
    %c2_170 = arith.constant 2 : index
    %c0_171 = arith.constant 0 : index
    %349 = vector.load %arg9[%c2_170, %c0_171] : memref<18x128xf32, #tpu.memory_space<vmem>>, vector<16x128xf32>
    %c1_i32_172 = arith.constant 1 : i32
    %350 = tpu.dynamic_rotate %349 by %c1_i32_172 dim 1 : vector<16x128xf32>, i32 -> vector<16x128xf32>
    %c6_173 = arith.constant 6 : index
    %c0_174 = arith.constant 0 : index
    %351 = vector.load %arg3[%c6_173, %c0_174] : memref<36x128xf32, #tpu.memory_space<vmem>>, vector<1x128xf32>
    %352 = vector.broadcast %351 : vector<1x128xf32> to vector<16x128xf32>
    %353 = arith.mulf %350, %352 : vector<16x128xf32>
    %354 = arith.addf %303, %353 : vector<16x128xf32>
    %c7_175 = arith.constant 7 : index
    %c0_176 = arith.constant 0 : index
    %355 = vector.load %arg3[%c7_175, %c0_176] : memref<36x128xf32, #tpu.memory_space<vmem>>, vector<1x128xf32>
    %356 = vector.broadcast %355 : vector<1x128xf32> to vector<16x128xf32>
    %357 = arith.mulf %349, %356 : vector<16x128xf32>
    %358 = arith.addf %354, %357 : vector<16x128xf32>
    %c127_i32_177 = arith.constant 127 : i32
    %359 = tpu.dynamic_rotate %349 by %c127_i32_177 dim 1 : vector<16x128xf32>, i32 -> vector<16x128xf32>
    %c8_178 = arith.constant 8 : index
    %c0_179 = arith.constant 0 : index
    %360 = vector.load %arg3[%c8_178, %c0_179] : memref<36x128xf32, #tpu.memory_space<vmem>>, vector<1x128xf32>
    %361 = vector.broadcast %360 : vector<1x128xf32> to vector<16x128xf32>
    %362 = arith.mulf %359, %361 : vector<16x128xf32>
    %363 = arith.addf %358, %362 : vector<16x128xf32>
    %c97_i32_180 = arith.constant 97 : i32
    %364 = tpu.dynamic_rotate %349 by %c97_i32_180 dim 1 : vector<16x128xf32>, i32 -> vector<16x128xf32>
    %c15_181 = arith.constant 15 : index
    %c0_182 = arith.constant 0 : index
    %365 = vector.load %arg3[%c15_181, %c0_182] : memref<36x128xf32, #tpu.memory_space<vmem>>, vector<1x128xf32>
    %366 = vector.broadcast %365 : vector<1x128xf32> to vector<16x128xf32>
    %367 = arith.mulf %364, %366 : vector<16x128xf32>
    %368 = arith.addf %318, %367 : vector<16x128xf32>
    %c96_i32_183 = arith.constant 96 : i32
    %369 = tpu.dynamic_rotate %349 by %c96_i32_183 dim 1 : vector<16x128xf32>, i32 -> vector<16x128xf32>
    %c16_184 = arith.constant 16 : index
    %c0_185 = arith.constant 0 : index
    %370 = vector.load %arg3[%c16_184, %c0_185] : memref<36x128xf32, #tpu.memory_space<vmem>>, vector<1x128xf32>
    %371 = vector.broadcast %370 : vector<1x128xf32> to vector<16x128xf32>
    %372 = arith.mulf %369, %371 : vector<16x128xf32>
    %373 = arith.addf %368, %372 : vector<16x128xf32>
    %c95_i32_186 = arith.constant 95 : i32
    %374 = tpu.dynamic_rotate %349 by %c95_i32_186 dim 1 : vector<16x128xf32>, i32 -> vector<16x128xf32>
    %c17_187 = arith.constant 17 : index
    %c0_188 = arith.constant 0 : index
    %375 = vector.load %arg3[%c17_187, %c0_188] : memref<36x128xf32, #tpu.memory_space<vmem>>, vector<1x128xf32>
    %376 = vector.broadcast %375 : vector<1x128xf32> to vector<16x128xf32>
    %377 = arith.mulf %374, %376 : vector<16x128xf32>
    %378 = arith.addf %373, %377 : vector<16x128xf32>
    %c65_i32_189 = arith.constant 65 : i32
    %379 = tpu.dynamic_rotate %349 by %c65_i32_189 dim 1 : vector<16x128xf32>, i32 -> vector<16x128xf32>
    %c24_190 = arith.constant 24 : index
    %c0_191 = arith.constant 0 : index
    %380 = vector.load %arg3[%c24_190, %c0_191] : memref<36x128xf32, #tpu.memory_space<vmem>>, vector<1x128xf32>
    %381 = vector.broadcast %380 : vector<1x128xf32> to vector<16x128xf32>
    %382 = arith.mulf %379, %381 : vector<16x128xf32>
    %383 = arith.addf %333, %382 : vector<16x128xf32>
    %c64_i32_192 = arith.constant 64 : i32
    %384 = tpu.dynamic_rotate %349 by %c64_i32_192 dim 1 : vector<16x128xf32>, i32 -> vector<16x128xf32>
    %c25_193 = arith.constant 25 : index
    %c0_194 = arith.constant 0 : index
    %385 = vector.load %arg3[%c25_193, %c0_194] : memref<36x128xf32, #tpu.memory_space<vmem>>, vector<1x128xf32>
    %386 = vector.broadcast %385 : vector<1x128xf32> to vector<16x128xf32>
    %387 = arith.mulf %384, %386 : vector<16x128xf32>
    %388 = arith.addf %383, %387 : vector<16x128xf32>
    %c63_i32_195 = arith.constant 63 : i32
    %389 = tpu.dynamic_rotate %349 by %c63_i32_195 dim 1 : vector<16x128xf32>, i32 -> vector<16x128xf32>
    %c26_196 = arith.constant 26 : index
    %c0_197 = arith.constant 0 : index
    %390 = vector.load %arg3[%c26_196, %c0_197] : memref<36x128xf32, #tpu.memory_space<vmem>>, vector<1x128xf32>
    %391 = vector.broadcast %390 : vector<1x128xf32> to vector<16x128xf32>
    %392 = arith.mulf %389, %391 : vector<16x128xf32>
    %393 = arith.addf %388, %392 : vector<16x128xf32>
    %c33_i32_198 = arith.constant 33 : i32
    %394 = tpu.dynamic_rotate %349 by %c33_i32_198 dim 1 : vector<16x128xf32>, i32 -> vector<16x128xf32>
    %c33_199 = arith.constant 33 : index
    %c0_200 = arith.constant 0 : index
    %395 = vector.load %arg3[%c33_199, %c0_200] : memref<36x128xf32, #tpu.memory_space<vmem>>, vector<1x128xf32>
    %396 = vector.broadcast %395 : vector<1x128xf32> to vector<16x128xf32>
    %397 = arith.mulf %394, %396 : vector<16x128xf32>
    %398 = arith.addf %348, %397 : vector<16x128xf32>
    %c32_i32_201 = arith.constant 32 : i32
    %399 = tpu.dynamic_rotate %349 by %c32_i32_201 dim 1 : vector<16x128xf32>, i32 -> vector<16x128xf32>
    %c34_202 = arith.constant 34 : index
    %c0_203 = arith.constant 0 : index
    %400 = vector.load %arg3[%c34_202, %c0_203] : memref<36x128xf32, #tpu.memory_space<vmem>>, vector<1x128xf32>
    %401 = vector.broadcast %400 : vector<1x128xf32> to vector<16x128xf32>
    %402 = arith.mulf %399, %401 : vector<16x128xf32>
    %403 = arith.addf %398, %402 : vector<16x128xf32>
    %c31_i32_204 = arith.constant 31 : i32
    %404 = tpu.dynamic_rotate %349 by %c31_i32_204 dim 1 : vector<16x128xf32>, i32 -> vector<16x128xf32>
    %c35_205 = arith.constant 35 : index
    %c0_206 = arith.constant 0 : index
    %405 = vector.load %arg3[%c35_205, %c0_206] : memref<36x128xf32, #tpu.memory_space<vmem>>, vector<1x128xf32>
    %406 = vector.broadcast %405 : vector<1x128xf32> to vector<16x128xf32>
    %407 = arith.mulf %404, %406 : vector<16x128xf32>
    %408 = arith.addf %403, %407 : vector<16x128xf32>
    %c0_207 = arith.constant 0 : index
    %c0_208 = arith.constant 0 : index
    %409 = vector.load %arg4[%c0_207, %c0_208] : memref<1x128xf32, #tpu.memory_space<vmem>>, vector<1x128xf32>
    %410 = vector.broadcast %409 : vector<1x128xf32> to vector<16x128xf32>
    %411 = arith.addf %410, %363 : vector<16x128xf32>
    %412 = arith.addf %411, %378 : vector<16x128xf32>
    %413 = arith.addf %412, %393 : vector<16x128xf32>
    %414 = arith.addf %413, %408 : vector<16x128xf32>
    %c0_209 = arith.constant 0 : index
    %c0_210 = arith.constant 0 : index
    %415 = vector.load %arg7[%c0_209, %c0_210] : memref<128x128xf32, #tpu.memory_space<vmem>>, vector<128x128xf32>
    %cst_211 = arith.constant dense<0.000000e+00> : vector<16x128xf32>
    %416 = tpu.matmul %414, %415, %cst_211 {dimension_numbers = #tpu.dot_dimension_numbers<[1], [0], [0], [1], [0, 0, 1, 1], [], []>, precision = #tpu.contract_precision<fp32>} : vector<16x128xf32>, vector<128x128xf32>, vector<16x128xf32> -> vector<16x128xf32>
    %cst_212 = arith.constant dense<0.000000e+00> : vector<128xf32>
    %417 = vector.multi_reduction <add>, %416, %cst_212 [0] : vector<16x128xf32> to vector<128xf32>
    %418 = vector.shape_cast %417 : vector<128xf32> to vector<1x128xf32>
    %cst_213 = arith.constant 0.001953125 : f32
    %419 = vector.broadcast %cst_213 : f32 to vector<1x128xf32>
    %420 = arith.mulf %418, %419 : vector<1x128xf32>
    %421 = vector.broadcast %420 : vector<1x128xf32> to vector<16x128xf32>
    %422 = arith.subf %414, %421 : vector<16x128xf32>
    %423 = arith.mulf %422, %422 : vector<16x128xf32>
    %cst_214 = arith.constant dense<0.000000e+00> : vector<16x128xf32>
    %424 = tpu.matmul %423, %415, %cst_214 {dimension_numbers = #tpu.dot_dimension_numbers<[1], [0], [0], [1], [0, 0, 1, 1], [], []>, precision = #tpu.contract_precision<fp32>} : vector<16x128xf32>, vector<128x128xf32>, vector<16x128xf32> -> vector<16x128xf32>
    %cst_215 = arith.constant dense<0.000000e+00> : vector<128xf32>
    %425 = vector.multi_reduction <add>, %424, %cst_215 [0] : vector<16x128xf32> to vector<128xf32>
    %426 = vector.shape_cast %425 : vector<128xf32> to vector<1x128xf32>
    %cst_216 = arith.constant 0.001953125 : f32
    %427 = vector.broadcast %cst_216 : f32 to vector<1x128xf32>
    %428 = arith.mulf %426, %427 : vector<1x128xf32>
    %cst_217 = arith.constant 9.99999974E-6 : f32
    %429 = vector.broadcast %cst_217 : f32 to vector<1x128xf32>
    %430 = arith.addf %428, %429 : vector<1x128xf32>
    %431 = math.rsqrt %430 : vector<1x128xf32>
    %c0_218 = arith.constant 0 : index
    %c0_219 = arith.constant 0 : index
    %432 = vector.load %arg5[%c0_218, %c0_219] : memref<1x128xf32, #tpu.memory_space<vmem>>, vector<1x128xf32>
    %433 = arith.mulf %431, %432 : vector<1x128xf32>
    %434 = vector.broadcast %433 : vector<1x128xf32> to vector<16x128xf32>
    %435 = arith.mulf %422, %434 : vector<16x128xf32>
    %c0_220 = arith.constant 0 : index
    %c0_221 = arith.constant 0 : index
    %436 = vector.load %arg6[%c0_220, %c0_221] : memref<1x128xf32, #tpu.memory_space<vmem>>, vector<1x128xf32>
    %437 = vector.broadcast %436 : vector<1x128xf32> to vector<16x128xf32>
    %438 = arith.addf %435, %437 : vector<16x128xf32>
    %c0_222 = arith.constant 0 : index
    %c0_223 = arith.constant 0 : index
    %439 = vector.load %arg0[%c0_222, %c0_223] : memref<16x128xf32, #tpu.memory_space<vmem>>, vector<16x128xf32>
    %440 = arith.addf %438, %439 : vector<16x128xf32>
    %441 = arith.negf %440 : vector<16x128xf32>
    %442 = math.exp %441 : vector<16x128xf32>
    %cst_224 = arith.constant 1.000000e+00 : f32
    %443 = vector.broadcast %cst_224 : f32 to vector<16x128xf32>
    %444 = arith.addf %443, %442 : vector<16x128xf32>
    %445 = arith.divf %443, %444 : vector<16x128xf32>
    %446 = arith.mulf %440, %445 : vector<16x128xf32>
    %c0_225 = arith.constant 0 : index
    %c0_226 = arith.constant 0 : index
    %447 = vector.load %arg8[%c0_225, %c0_226] : memref<16x128xf32, #tpu.memory_space<vmem>>, vector<16x128xf32>
    tpu.vector_store %arg8[%c0_225, %c0_226], %446 {strides = array<i32>} : memref<16x128xf32, #tpu.memory_space<vmem>>, vector<16x128xf32>,
    return
  }
}

</mosaic_0001>

<llo_original>
// kernel: tpu_custom_call.1
$region0: #{tpu_custom_call.1}
  #allocation0 [shape = 'u32[]', space=smem, size = 0x4, offset = 0x4, fixed_abs, tag = 'smem constant byte address 0x4 - core index']
  #allocation1 [shape = 'u32[144,128]{1,0:T(1,128)}', space=vmem, size = 0x12000, scoped, tag = 'internal scratch']
  #allocation2 [shape = 'f32[18,128]{1,0:T(8,128)}', space=vmem, size = 0x3000, scoped, tag = 'scratch operand']
  %s0 = inlined_call_operand.hbm [shape: f32[16,128], index: 0, kind: input, shape index: {}]
  %s1 = inlined_call_operand.hbm [shape: f32[36,128], index: 1, kind: input, shape index: {}]
  %s2 = inlined_call_operand.vmem [shape: f32[1,128], index: 2, kind: input, shape index: {}]
  %s3 = inlined_call_operand.hbm [shape: f32[36,128], index: 3, kind: input, shape index: {}]
  %s4 = inlined_call_operand.vmem [shape: f32[1,128], index: 4, kind: input, shape index: {}]
  %s5 = inlined_call_operand.vmem [shape: f32[1,128], index: 5, kind: input, shape index: {}]
  %s6 = inlined_call_operand.vmem [shape: f32[1,128], index: 6, kind: input, shape index: {}]
  %s7 = inlined_call_operand.hbm [shape: f32[128,128], index: 7, kind: input, shape index: {}]
  %s8 = inlined_call_operand.hbm [shape: f32[16,128], index: 8, kind: output, shape index: {}]
  %s9 = sld [smem:[#allocation0]]
  $region58: #{tpu_custom_call.1} parent=0
    _
  %s11 = ssub.s32 1, %s9
  %s12 = scalar_select 0, %s11, %s9
  $region1: #{tpu_custom_call.1} parent=0
    #allocation3 [shape = 'u8[8192]{0}', space=vmem, size = 0x2000, scoped, tag = 'input window, operand 0, single buffered']
    #allocation4 [shape = 's32[1]{0}', space=sflag, size = 0x4, scoped, tag = 'scoped memory for tpu_custom_call.1']
    #allocation5 [shape = 's32[1]{0}', space=sflag, size = 0x4, scoped, tag = 'scoped memory for tpu_custom_call.1']
    #allocation6 [shape = 'u8[20480]{0}', space=vmem, size = 0x5000, scoped, tag = 'input window, operand 1, single buffered']
    #allocation7 [shape = 's32[1]{0}', space=sflag, size = 0x4, scoped, tag = 'scoped memory for tpu_custom_call.1']
    #allocation8 [shape = 'u8[20480]{0}', space=vmem, size = 0x5000, scoped, tag = 'input window, operand 3, single buffered']
    #allocation9 [shape = 'u8[65536]{0}', space=vmem, size = 0x10000, scoped, tag = 'input window, operand 7, single buffered']
    #allocation10 [shape = 's32[1]{0}', space=sflag, size = 0x4, scoped, tag = 'scoped memory for tpu_custom_call.1']
    #allocation11 [shape = 'u8[8192]{0}', space=vmem, size = 0x2000, scoped, tag = 'output window, operand 0, single buffered']
    %13 = vsyncpa [#allocation4], 0
    %14 = vsyncpa [#allocation7], 0
    %15 = vsyncpa [#allocation10], 0
    %16 = vsyncpa [#allocation5], 0
    // Predicated region
    $region2: #{tpu_custom_call.1} parent=1 // pred_check
      _
    $region3: #{tpu_custom_call.1} parent=1 // pred_check_branch
      %18 = sbr.rel (0) target = $region5
    $region4: #{tpu_custom_call.1} parent=1 // pred_region
      %s20 = ssub.s32 256, 256
      %21 = vsyncadd [#allocation4], %s20
      %s22 = sshll.u32 [#allocation3], 4
      %s23 = int_to_ptr.vmem [resolvable:$true] %s22
      %28 = dma.hbm_to_vmem [thread:$0]  %s0, 256, %s23, [#allocation4], 128, 128, 8
    $region5: #{tpu_custom_call.1} parent=1 // pred_fallthru
      _
    // Predicated region
    $region6: #{tpu_custom_call.1} parent=1 // pred_check
      _
    $region7: #{tpu_custom_call.1} parent=1 // pred_check_branch
      %30 = sbr.rel (0) target = $region9
    $region8: #{tpu_custom_call.1} parent=1 // pred_region
      %s32 = ssub.s32 640, 640
      %33 = vsyncadd [#allocation7], %s32
      %s34 = sshll.u32 [#allocation6], 4
      %s35 = int_to_ptr.vmem [resolvable:$true] %s34
      %40 = dma.hbm_to_vmem [thread:$0]  %s1, 640, %s35, [#allocation7], 128, 128, 8
    $region9: #{tpu_custom_call.1} parent=1 // pred_fallthru
      _
    // Predicated region
    $region10: #{tpu_custom_call.1} parent=1 // pred_check
      _
    $region11: #{tpu_custom_call.1} parent=1 // pred_check_branch
      %42 = sbr.rel (0) target = $region13
    $region12: #{tpu_custom_call.1} parent=1 // pred_region
      _
    $region13: #{tpu_custom_call.1} parent=1 // pred_fallthru
      _
    // Predicated region
    $region14: #{tpu_custom_call.1} parent=1 // pred_check
      _
    $region15: #{tpu_custom_call.1} parent=1 // pred_check_branch
      %44 = sbr.rel (0) target = $region17
    $region16: #{tpu_custom_call.1} parent=1 // pred_region
      %s46 = ssub.s32 640, 640
      %47 = vsyncadd [#allocation7], %s46
      %s48 = sshll.u32 [#allocation8], 4
      %s49 = int_to_ptr.vmem [resolvable:$true] %s48
      %54 = dma.hbm_to_vmem [thread:$0]  %s3, 640, %s49, [#allocation7], 128, 128, 8
    $region17: #{tpu_custom_call.1} parent=1 // pred_fallthru
      _
    // Predicated region
    $region18: #{tpu_custom_call.1} parent=1 // pred_check
      _
    $region19: #{tpu_custom_call.1} parent=1 // pred_check_branch
      %56 = sbr.rel (0) target = $region21
    $region20: #{tpu_custom_call.1} parent=1 // pred_region
      _
    $region21: #{tpu_custom_call.1} parent=1 // pred_fallthru
      _
    // Predicated region
    $region22: #{tpu_custom_call.1} parent=1 // pred_check
      _
    $region23: #{tpu_custom_call.1} parent=1 // pred_check_branch
      %58 = sbr.rel (0) target = $region25
    $region24: #{tpu_custom_call.1} parent=1 // pred_region
      _
    $region25: #{tpu_custom_call.1} parent=1 // pred_fallthru
      _
    // Predicated region
    $region26: #{tpu_custom_call.1} parent=1 // pred_check
      _
    $region27: #{tpu_custom_call.1} parent=1 // pred_check_branch
      %60 = sbr.rel (0) target = $region29
    $region28: #{tpu_custom_call.1} parent=1 // pred_region
      _
    $region29: #{tpu_custom_call.1} parent=1 // pred_fallthru
      _
    // Predicated region
    $region30: #{tpu_custom_call.1} parent=1 // pred_check
      _
    $region31: #{tpu_custom_call.1} parent=1 // pred_check_branch
      %62 = sbr.rel (0) target = $region33
    $region32: #{tpu_custom_call.1} parent=1 // pred_region
      %s64 = ssub.s32 2048, 2048
      %65 = vsyncadd [#allocation10], %s64
      %s66 = sshll.u32 [#allocation9], 4
      %s67 = int_to_ptr.vmem [resolvable:$true] %s66
      %72 = dma.hbm_to_vmem [thread:$0]  %s7, 2048, %s67, [#allocation10], 128, 128, 8
    $region33: #{tpu_custom_call.1} parent=1 // pred_fallthru
      _
    // Predicated region
    $region34: #{tpu_custom_call.1} parent=1 // pred_check
      _
    $region35: #{tpu_custom_call.1} parent=1 // pred_check_branch
      %74 = sbr.rel (0) target = $region37
    $region36: #{tpu_custom_call.1} parent=1 // pred_region
      %75 = dma.done [#allocation4], 256
    $region37: #{tpu_custom_call.1} parent=1 // pred_fallthru
      _
    // Predicated region
    $region38: #{tpu_custom_call.1} parent=1 // pred_check
      _
    $region39: #{tpu_custom_call.1} parent=1 // pred_check_branch
      %77 = sbr.rel (0) target = $region41
    $region40: #{tpu_custom_call.1} parent=1 // pred_region
      %78 = dma.done [#allocation7], 640
    $region41: #{tpu_custom_call.1} parent=1 // pred_fallthru
      _
    // Predicated region
    $region42: #{tpu_custom_call.1} parent=1 // pred_check
      _
    $region43: #{tpu_custom_call.1} parent=1 // pred_check_branch
      %80 = sbr.rel (0) target = $region45
    $region44: #{tpu_custom_call.1} parent=1 // pred_region
      %81 = dma.done [#allocation7], 640
    $region45: #{tpu_custom_call.1} parent=1 // pred_fallthru
      _
    // Predicated region
    $region46: #{tpu_custom_call.1} parent=1 // pred_check
      _
    $region47: #{tpu_custom_call.1} parent=1 // pred_check_branch
      %83 = sbr.rel (0) target = $region49
    $region48: #{tpu_custom_call.1} parent=1 // pred_region
      %84 = dma.done [#allocation10], 2048
    $region49: #{tpu_custom_call.1} parent=1 // pred_fallthru
      _
    %85 = vst [vmem:[#allocation2] sm:$0xff] 0.0
    %86 = vst [vmem:[#allocation2 + $0x8] sm:$0xff] 0.0
    %87 = vst [vmem:[#allocation2 + $0x10] sm:$0x3] 0.0
    %v88 = vld [vmem:[#allocation3] sm:$0xff]
    %v89 = vld [vmem:[#allocation3 + $0x8] sm:$0xff]
    %90 = vst [vmem:[#allocation2 + $0x1] sm:$0xff] %v88
    %91 = vst [vmem:[#allocation2 + $0x9] sm:$0xff] %v89
    %v92 = vld [vmem:[#allocation2] sm:$0xff]
    %v93 = vld [vmem:[#allocation2 + $0x8] sm:$0xff]
    %94 = vrot.lane.b32.xlu0 %v92, 1
    %v95 = vpop.permute.xlu0 %94
    %96 = vrot.lane.b32.xlu0 %v93, 1
    %v97 = vpop.permute.xlu0 %96
    %v98 = vld [vmem:[#allocation6] sm:$0x1]
    %v99 = vlaneseq
    %v100 = vshrl.u32 %v99, 7
    %v101 = vsub.s32 0, %v100
    %v102 = vrot.slane %v98, %v101
    %v103 = vmul.f32 %v95, %v102
    %v104 = vmul.f32 %v97, %v102
    %v105 = vadd.f32 %v103, 0.0
    %v106 = vadd.f32 %v104, 0.0
    %v107 = vld [vmem:[#allocation6 + $0x1] sm:$0x1]
    %v108 = vlaneseq
    %v109 = vshrl.u32 %v108, 7
    %v110 = vsub.s32 0, %v109
    %v111 = vrot.slane %v107, %v110
    %v112 = vmul.f32 %v92, %v111
    %v113 = vmul.f32 %v93, %v111
    %v114 = vadd.f32 %v105, %v112
    %v115 = vadd.f32 %v106, %v113
    %116 = vrot.lane.b32.xlu0 %v92, 127
    %v117 = vpop.permute.xlu0 %116
    %118 = vrot.lane.b32.xlu0 %v93, 127
    %v119 = vpop.permute.xlu0 %118
    %v120 = vld [vmem:[#allocation6 + $0x2] sm:$0x1]
    %v121 = vlaneseq
    %v122 = vshrl.u32 %v121, 7
    %v123 = vsub.s32 0, %v122
    %v124 = vrot.slane %v120, %v123
    %v125 = vmul.f32 %v117, %v124
    %v126 = vmul.f32 %v119, %v124
    %v127 = vadd.f32 %v114, %v125
    %v128 = vadd.f32 %v115, %v126
    %129 = vrot.lane.b32.xlu0 %v92, 97
    %v130 = vpop.permute.xlu0 %129
    %131 = vrot.lane.b32.xlu0 %v93, 97
    %v132 = vpop.permute.xlu0 %131
    %v133 = vld [vmem:[#allocation6 + $0x9] sm:$0x1]
    %v134 = vlaneseq
    %v135 = vshrl.u32 %v134, 7
    %v136 = vsub.s32 0, %v135
    %v137 = vrot.slane %v133, %v136
    %v138 = vmul.f32 %v130, %v137
    %v139 = vmul.f32 %v132, %v137
    %v140 = vadd.f32 %v138, 0.0
    %v141 = vadd.f32 %v139, 0.0
    %142 = vrot.lane.b32.xlu0 %v92, 96
    %v143 = vpop.permute.xlu0 %142
    %144 = vrot.lane.b32.xlu0 %v93, 96
    %v145 = vpop.permute.xlu0 %144
    %v146 = vld [vmem:[#allocation6 + $0xa] sm:$0x1]
    %v147 = vlaneseq
    %v148 = vshrl.u32 %v147, 7
    %v149 = vsub.s32 0, %v148
    %v150 = vrot.slane %v146, %v149
    %v151 = vmul.f32 %v143, %v150
    %v152 = vmul.f32 %v145, %v150
    %v153 = vadd.f32 %v140, %v151
    %v154 = vadd.f32 %v141, %v152
    %155 = vrot.lane.b32.xlu0 %v92, 95
    %v156 = vpop.permute.xlu0 %155
    %157 = vrot.lane.b32.xlu0 %v93, 95
    %v158 = vpop.permute.xlu0 %157
    %v159 = vld [vmem:[#allocation6 + $0xb] sm:$0x1]
    %v160 = vlaneseq
    %v161 = vshrl.u32 %v160, 7
    %v162 = vsub.s32 0, %v161
    %v163 = vrot.slane %v159, %v162
    %v164 = vmul.f32 %v156, %v163
    %v165 = vmul.f32 %v158, %v163
    %v166 = vadd.f32 %v153, %v164
    %v167 = vadd.f32 %v154, %v165
    %168 = vrot.lane.b32.xlu0 %v92, 65
    %v169 = vpop.permute.xlu0 %168
    %170 = vrot.lane.b32.xlu0 %v93, 65
    %v171 = vpop.permute.xlu0 %170
    %v172 = vld [vmem:[#allocation6 + $0x12] sm:$0x1]
    %v173 = vlaneseq
    %v174 = vshrl.u32 %v173, 7
    %v175 = vsub.s32 0, %v174
    %v176 = vrot.slane %v172, %v175
    %v177 = vmul.f32 %v169, %v176
    %v178 = vmul.f32 %v171, %v176
    %v179 = vadd.f32 %v177, 0.0
    %v180 = vadd.f32 %v178, 0.0
    %181 = vrot.lane.b32.xlu0 %v92, 64
    %v182 = vpop.permute.xlu0 %181
    %183 = vrot.lane.b32.xlu0 %v93, 64
    %v184 = vpop.permute.xlu0 %183
    %v185 = vld [vmem:[#allocation6 + $0x13] sm:$0x1]
    %v186 = vlaneseq
    %v187 = vshrl.u32 %v186, 7
    %v188 = vsub.s32 0, %v187
    %v189 = vrot.slane %v185, %v188
    %v190 = vmul.f32 %v182, %v189
    %v191 = vmul.f32 %v184, %v189
    %v192 = vadd.f32 %v179, %v190
    %v193 = vadd.f32 %v180, %v191
    %194 = vrot.lane.b32.xlu0 %v92, 63
    %v195 = vpop.permute.xlu0 %194
    %196 = vrot.lane.b32.xlu0 %v93, 63
    %v197 = vpop.permute.xlu0 %196
    %v198 = vld [vmem:[#allocation6 + $0x14] sm:$0x1]
    %v199 = vlaneseq
    %v200 = vshrl.u32 %v199, 7
    %v201 = vsub.s32 0, %v200
    %v202 = vrot.slane %v198, %v201
    %v203 = vmul.f32 %v195, %v202
    %v204 = vmul.f32 %v197, %v202
    %v205 = vadd.f32 %v192, %v203
    %v206 = vadd.f32 %v193, %v204
    %207 = vrot.lane.b32.xlu0 %v92, 33
    %v208 = vpop.permute.xlu0 %207
    %209 = vrot.lane.b32.xlu0 %v93, 33
    %v210 = vpop.permute.xlu0 %209
    %v211 = vld [vmem:[#allocation6 + $0x1b] sm:$0x1]
    %v212 = vlaneseq
    %v213 = vshrl.u32 %v212, 7
    %v214 = vsub.s32 0, %v213
    %v215 = vrot.slane %v211, %v214
    %v216 = vmul.f32 %v208, %v215
    %v217 = vmul.f32 %v210, %v215
    %v218 = vadd.f32 %v216, 0.0
    %v219 = vadd.f32 %v217, 0.0
    %220 = vrot.lane.b32.xlu0 %v92, 32
    %v221 = vpop.permute.xlu0 %220
    %222 = vrot.lane.b32.xlu0 %v93, 32
    %v223 = vpop.permute.xlu0 %222
    %v224 = vld [vmem:[#allocation6 + $0x1c] sm:$0x1]
    %v225 = vlaneseq
    %v226 = vshrl.u32 %v225, 7
    %v227 = vsub.s32 0, %v226
    %v228 = vrot.slane %v224, %v227
    %v229 = vmul.f32 %v221, %v228
    %v230 = vmul.f32 %v223, %v228
    %v231 = vadd.f32 %v218, %v229
    %v232 = vadd.f32 %v219, %v230
    %233 = vrot.lane.b32.xlu0 %v92, 31
    %v234 = vpop.permute.xlu0 %233
    %235 = vrot.lane.b32.xlu0 %v93, 31
    %v236 = vpop.permute.xlu0 %235
    %v237 = vld [vmem:[#allocation6 + $0x1d] sm:$0x1]
    %v238 = vlaneseq
    %v239 = vshrl.u32 %v238, 7
    %v240 = vsub.s32 0, %v239
    %v241 = vrot.slane %v237, %v240
    %v242 = vmul.f32 %v234, %v241
    %v243 = vmul.f32 %v236, %v241
    %v244 = vadd.f32 %v231, %v242
    %v245 = vadd.f32 %v232, %v243
    %v246 = vld [vmem:[#allocation2 + $0x1] sm:$0xff]
    %v247 = vld [vmem:[#allocation2 + $0x9] sm:$0xff]
    %248 = vrot.lane.b32.xlu0 %v246, 1
    %v249 = vpop.permute.xlu0 %248
    %250 = vrot.lane.b32.xlu0 %v247, 1
    %v251 = vpop.permute.xlu0 %250
    %v252 = vld [vmem:[#allocation6 + $0x3] sm:$0x1]
    %v253 = vlaneseq
    %v254 = vshrl.u32 %v253, 7
    %v255 = vsub.s32 0, %v254
    %v256 = vrot.slane %v252, %v255
    %v257 = vmul.f32 %v249, %v256
    %v258 = vmul.f32 %v251, %v256
    %v259 = vadd.f32 %v127, %v257
    %v260 = vadd.f32 %v128, %v258
    %v261 = vld [vmem:[#allocation6 + $0x4] sm:$0x1]
    %v262 = vlaneseq
    %v263 = vshrl.u32 %v262, 7
    %v264 = vsub.s32 0, %v263
    %v265 = vrot.slane %v261, %v264
    %v266 = vmul.f32 %v246, %v265
    %v267 = vmul.f32 %v247, %v265
    %v268 = vadd.f32 %v259, %v266
    %v269 = vadd.f32 %v260, %v267
    %270 = vrot.lane.b32.xlu0 %v246, 127
    %v271 = vpop.permute.xlu0 %270
    %272 = vrot.lane.b32.xlu0 %v247, 127
    %v273 = vpop.permute.xlu0 %272
    %v274 = vld [vmem:[#allocation6 + $0x5] sm:$0x1]
    %v275 = vlaneseq
    %v276 = vshrl.u32 %v275, 7
    %v277 = vsub.s32 0, %v276
    %v278 = vrot.slane %v274, %v277
    %v279 = vmul.f32 %v271, %v278
    %v280 = vmul.f32 %v273, %v278
    %v281 = vadd.f32 %v268, %v279
    %v282 = vadd.f32 %v269, %v280
    %283 = vrot.lane.b32.xlu0 %v246, 97
    %v284 = vpop.permute.xlu0 %283
    %285 = vrot.lane.b32.xlu0 %v247, 97
    %v286 = vpop.permute.xlu0 %285
    %v287 = vld [vmem:[#allocation6 + $0xc] sm:$0x1]
    %v288 = vlaneseq
    %v289 = vshrl.u32 %v288, 7
    %v290 = vsub.s32 0, %v289
    %v291 = vrot.slane %v287, %v290
    %v292 = vmul.f32 %v284, %v291
    %v293 = vmul.f32 %v286, %v291
    %v294 = vadd.f32 %v166, %v292
    %v295 = vadd.f32 %v167, %v293
    %296 = vrot.lane.b32.xlu0 %v246, 96
    %v297 = vpop.permute.xlu0 %296
    %298 = vrot.lane.b32.xlu0 %v247, 96
    %v299 = vpop.permute.xlu0 %298
    %v300 = vld [vmem:[#allocation6 + $0xd] sm:$0x1]
    %v301 = vlaneseq
    %v302 = vshrl.u32 %v301, 7
    %v303 = vsub.s32 0, %v302
    %v304 = vrot.slane %v300, %v303
    %v305 = vmul.f32 %v297, %v304
    %v306 = vmul.f32 %v299, %v304
    %v307 = vadd.f32 %v294, %v305
    %v308 = vadd.f32 %v295, %v306
    %309 = vrot.lane.b32.xlu0 %v246, 95
    %v310 = vpop.permute.xlu0 %309
    %311 = vrot.lane.b32.xlu0 %v247, 95
    %v312 = vpop.permute.xlu0 %311
    %v313 = vld [vmem:[#allocation6 + $0xe] sm:$0x1]
    %v314 = vlaneseq
    %v315 = vshrl.u32 %v314, 7
    %v316 = vsub.s32 0, %v315
    %v317 = vrot.slane %v313, %v316
    %v318 = vmul.f32 %v310, %v317
    %v319 = vmul.f32 %v312, %v317
    %v320 = vadd.f32 %v307, %v318
    %v321 = vadd.f32 %v308, %v319
    %322 = vrot.lane.b32.xlu0 %v246, 65
    %v323 = vpop.permute.xlu0 %322
    %324 = vrot.lane.b32.xlu0 %v247, 65
    %v325 = vpop.permute.xlu0 %324
    %v326 = vld [vmem:[#allocation6 + $0x15] sm:$0x1]
    %v327 = vlaneseq
    %v328 = vshrl.u32 %v327, 7
    %v329 = vsub.s32 0, %v328
    %v330 = vrot.slane %v326, %v329
    %v331 = vmul.f32 %v323, %v330
    %v332 = vmul.f32 %v325, %v330
    %v333 = vadd.f32 %v205, %v331
    %v334 = vadd.f32 %v206, %v332
    %335 = vrot.lane.b32.xlu0 %v246, 64
    %v336 = vpop.permute.xlu0 %335
    %337 = vrot.lane.b32.xlu0 %v247, 64
    %v338 = vpop.permute.xlu0 %337
    %v339 = vld [vmem:[#allocation6 + $0x16] sm:$0x1]
    %v340 = vlaneseq
    %v341 = vshrl.u32 %v340, 7
    %v342 = vsub.s32 0, %v341
    %v343 = vrot.slane %v339, %v342
    %v344 = vmul.f32 %v336, %v343
    %v345 = vmul.f32 %v338, %v343
    %v346 = vadd.f32 %v333, %v344
    %v347 = vadd.f32 %v334, %v345
    %348 = vrot.lane.b32.xlu0 %v246, 63
    %v349 = vpop.permute.xlu0 %348
    %350 = vrot.lane.b32.xlu0 %v247, 63
    %v351 = vpop.permute.xlu0 %350
    %v352 = vld [vmem:[#allocation6 + $0x17] sm:$0x1]
    %v353 = vlaneseq
    %v354 = vshrl.u32 %v353, 7
    %v355 = vsub.s32 0, %v354
    %v356 = vrot.slane %v352, %v355
    %v357 = vmul.f32 %v349, %v356
    %v358 = vmul.f32 %v351, %v356
    %v359 = vadd.f32 %v346, %v357
    %v360 = vadd.f32 %v347, %v358
    %361 = vrot.lane.b32.xlu0 %v246, 33
    %v362 = vpop.permute.xlu0 %361
    %363 = vrot.lane.b32.xlu0 %v247, 33
    %v364 = vpop.permute.xlu0 %363
    %v365 = vld [vmem:[#allocation6 + $0x1e] sm:$0x1]
    %v366 = vlaneseq
    %v367 = vshrl.u32 %v366, 7
    %v368 = vsub.s32 0, %v367
    %v369 = vrot.slane %v365, %v368
    %v370 = vmul.f32 %v362, %v369
    %v371 = vmul.f32 %v364, %v369
    %v372 = vadd.f32 %v244, %v370
    %v373 = vadd.f32 %v245, %v371
    %374 = vrot.lane.b32.xlu0 %v246, 32
    %v375 = vpop.permute.xlu0 %374
    %376 = vrot.lane.b32.xlu0 %v247, 32
    %v377 = vpop.permute.xlu0 %376
    %v378 = vld [vmem:[#allocation6 + $0x1f] sm:$0x1]
    %v379 = vlaneseq
    %v380 = vshrl.u32 %v379, 7
    %v381 = vsub.s32 0, %v380
    %v382 = vrot.slane %v378, %v381
    %v383 = vmul.f32 %v375, %v382
    %v384 = vmul.f32 %v377, %v382
    %v385 = vadd.f32 %v372, %v383
    %v386 = vadd.f32 %v373, %v384
    %387 = vrot.lane.b32.xlu0 %v246, 31
    %v388 = vpop.permute.xlu0 %387
    %389 = vrot.lane.b32.xlu0 %v247, 31
    %v390 = vpop.permute.xlu0 %389
    %v391 = vld [vmem:[#allocation6 + $0x20] sm:$0x1]
    %v392 = vlaneseq
    %v393 = vshrl.u32 %v392, 7
    %v394 = vsub.s32 0, %v393
    %v395 = vrot.slane %v391, %v394
    %v396 = vmul.f32 %v388, %v395
    %v397 = vmul.f32 %v390, %v395
    %v398 = vadd.f32 %v385, %v396
    %v399 = vadd.f32 %v386, %v397
    %v400 = vld [vmem:[#allocation2 + $0x2] sm:$0xff]
    %v401 = vld [vmem:[#allocation2 + $0xa] sm:$0xff]
    %402 = vrot.lane.b32.xlu0 %v400, 1
    %v403 = vpop.permute.xlu0 %402
    %404 = vrot.lane.b32.xlu0 %v401, 1
    %v405 = vpop.permute.xlu0 %404
    %v406 = vld [vmem:[#allocation6 + $0x6] sm:$0x1]
    %v407 = vlaneseq
    %v408 = vshrl.u32 %v407, 7
    %v409 = vsub.s32 0, %v408
    %v410 = vrot.slane %v406, %v409
    %v411 = vmul.f32 %v403, %v410
    %v412 = vmul.f32 %v405, %v410
    %v413 = vadd.f32 %v281, %v411
    %v414 = vadd.f32 %v282, %v412
    %v415 = vld [vmem:[#allocation6 + $0x7] sm:$0x1]
    %v416 = vlaneseq
    %v417 = vshrl.u32 %v416, 7
    %v418 = vsub.s32 0, %v417
    %v419 = vrot.slane %v415, %v418
    %v420 = vmul.f32 %v400, %v419
    %v421 = vmul.f32 %v401, %v419
    %v422 = vadd.f32 %v413, %v420
    %v423 = vadd.f32 %v414, %v421
    %424 = vrot.lane.b32.xlu0 %v400, 127
    %v425 = vpop.permute.xlu0 %424
    %426 = vrot.lane.b32.xlu0 %v401, 127
    %v427 = vpop.permute.xlu0 %426
    %v428 = vld [vmem:[#allocation6 + $0x8] sm:$0x1]
    %v429 = vlaneseq
    %v430 = vshrl.u32 %v429, 7
    %v431 = vsub.s32 0, %v430
    %v432 = vrot.slane %v428, %v431
    %v433 = vmul.f32 %v425, %v432
    %v434 = vmul.f32 %v427, %v432
    %v435 = vadd.f32 %v422, %v433
    %v436 = vadd.f32 %v423, %v434
    %437 = vrot.lane.b32.xlu0 %v400, 97
    %v438 = vpop.permute.xlu0 %437
    %439 = vrot.lane.b32.xlu0 %v401, 97
    %v440 = vpop.permute.xlu0 %439
    %v441 = vld [vmem:[#allocation6 + $0xf] sm:$0x1]
    %v442 = vlaneseq
    %v443 = vshrl.u32 %v442, 7
    %v444 = vsub.s32 0, %v443
    %v445 = vrot.slane %v441, %v444
    %v446 = vmul.f32 %v438, %v445
    %v447 = vmul.f32 %v440, %v445
    %v448 = vadd.f32 %v320, %v446
    %v449 = vadd.f32 %v321, %v447
    %450 = vrot.lane.b32.xlu0 %v400, 96
    %v451 = vpop.permute.xlu0 %450
    %452 = vrot.lane.b32.xlu0 %v401, 96
    %v453 = vpop.permute.xlu0 %452
    %v454 = vld [vmem:[#allocation6 + $0x10] sm:$0x1]
    %v455 = vlaneseq
    %v456 = vshrl.u32 %v455, 7
    %v457 = vsub.s32 0, %v456
    %v458 = vrot.slane %v454, %v457
    %v459 = vmul.f32 %v451, %v458
    %v460 = vmul.f32 %v453, %v458
    %v461 = vadd.f32 %v448, %v459
    %v462 = vadd.f32 %v449, %v460
    %463 = vrot.lane.b32.xlu0 %v400, 95
    %v464 = vpop.permute.xlu0 %463
    %465 = vrot.lane.b32.xlu0 %v401, 95
    %v466 = vpop.permute.xlu0 %465
    %v467 = vld [vmem:[#allocation6 + $0x11] sm:$0x1]
    %v468 = vlaneseq
    %v469 = vshrl.u32 %v468, 7
    %v470 = vsub.s32 0, %v469
    %v471 = vrot.slane %v467, %v470
    %v472 = vmul.f32 %v464, %v471
    %v473 = vmul.f32 %v466, %v471
    %v474 = vadd.f32 %v461, %v472
    %v475 = vadd.f32 %v462, %v473
    %476 = vrot.lane.b32.xlu0 %v400, 65
    %v477 = vpop.permute.xlu0 %476
    %478 = vrot.lane.b32.xlu0 %v401, 65
    %v479 = vpop.permute.xlu0 %478
    %v480 = vld [vmem:[#allocation6 + $0x18] sm:$0x1]
    %v481 = vlaneseq
    %v482 = vshrl.u32 %v481, 7
    %v483 = vsub.s32 0, %v482
    %v484 = vrot.slane %v480, %v483
    %v485 = vmul.f32 %v477, %v484
    %v486 = vmul.f32 %v479, %v484
    %v487 = vadd.f32 %v359, %v485
    %v488 = vadd.f32 %v360, %v486
    %489 = vrot.lane.b32.xlu0 %v400, 64
    %v490 = vpop.permute.xlu0 %489
    %491 = vrot.lane.b32.xlu0 %v401, 64
    %v492 = vpop.permute.xlu0 %491
    %v493 = vld [vmem:[#allocation6 + $0x19] sm:$0x1]
    %v494 = vlaneseq
    %v495 = vshrl.u32 %v494, 7
    %v496 = vsub.s32 0, %v495
    %v497 = vrot.slane %v493, %v496
    %v498 = vmul.f32 %v490, %v497
    %v499 = vmul.f32 %v492, %v497
    %v500 = vadd.f32 %v487, %v498
    %v501 = vadd.f32 %v488, %v499
    %502 = vrot.lane.b32.xlu0 %v400, 63
    %v503 = vpop.permute.xlu0 %502
    %504 = vrot.lane.b32.xlu0 %v401, 63
    %v505 = vpop.permute.xlu0 %504
    %v506 = vld [vmem:[#allocation6 + $0x1a] sm:$0x1]
    %v507 = vlaneseq
    %v508 = vshrl.u32 %v507, 7
    %v509 = vsub.s32 0, %v508
    %v510 = vrot.slane %v506, %v509
    %v511 = vmul.f32 %v503, %v510
    %v512 = vmul.f32 %v505, %v510
    %v513 = vadd.f32 %v500, %v511
    %v514 = vadd.f32 %v501, %v512
    %515 = vrot.lane.b32.xlu0 %v400, 33
    %v516 = vpop.permute.xlu0 %515
    %517 = vrot.lane.b32.xlu0 %v401, 33
    %v518 = vpop.permute.xlu0 %517
    %v519 = vld [vmem:[#allocation6 + $0x21] sm:$0x1]
    %v520 = vlaneseq
    %v521 = vshrl.u32 %v520, 7
    %v522 = vsub.s32 0, %v521
    %v523 = vrot.slane %v519, %v522
    %v524 = vmul.f32 %v516, %v523
    %v525 = vmul.f32 %v518, %v523
    %v526 = vadd.f32 %v398, %v524
    %v527 = vadd.f32 %v399, %v525
    %528 = vrot.lane.b32.xlu0 %v400, 32
    %v529 = vpop.permute.xlu0 %528
    %530 = vrot.lane.b32.xlu0 %v401, 32
    %v531 = vpop.permute.xlu0 %530
    %v532 = vld [vmem:[#allocation6 + $0x22] sm:$0x1]
    %v533 = vlaneseq
    %v534 = vshrl.u32 %v533, 7
    %v535 = vsub.s32 0, %v534
    %v536 = vrot.slane %v532, %v535
    %v537 = vmul.f32 %v529, %v536
    %v538 = vmul.f32 %v531, %v536
    %v539 = vadd.f32 %v526, %v537
    %v540 = vadd.f32 %v527, %v538
    %541 = vrot.lane.b32.xlu0 %v400, 31
    %v542 = vpop.permute.xlu0 %541
    %543 = vrot.lane.b32.xlu0 %v401, 31
    %v544 = vpop.permute.xlu0 %543
    %v545 = vld [vmem:[#allocation6 + $0x23] sm:$0x1]
    %v546 = vlaneseq
    %v547 = vshrl.u32 %v546, 7
    %v548 = vsub.s32 0, %v547
    %v549 = vrot.slane %v545, %v548
    %v550 = vmul.f32 %v542, %v549
    %v551 = vmul.f32 %v544, %v549
    %v552 = vadd.f32 %v539, %v550
    %v553 = vadd.f32 %v540, %v551
    %v554 = vld [vmem:[%s2] sm:$0x1]
    %v556 = vlaneseq
    %v557 = vshrl.u32 %v556, 7
    %v558 = vsub.s32 0, %v557
    %v559 = vrot.slane %v554, %v558
    %v561 = vadd.f32 %v559, %v435
    %v562 = vadd.f32 %v559, %v436
    %v563 = vadd.f32 %v561, %v474
    %v564 = vadd.f32 %v562, %v475
    %v565 = vadd.f32 %v563, %v513
    %v566 = vadd.f32 %v564, %v514
    %v567 = vadd.f32 %v565, %v552
    %v568 = vadd.f32 %v566, %v553
    %v569 = vld [vmem:[#allocation9] sm:$0xff]
    %v570 = vld [vmem:[#allocation9 + $0x8] sm:$0xff]
    %v571 = vld [vmem:[#allocation9 + $0x10] sm:$0xff]
    %v572 = vld [vmem:[#allocation9 + $0x18] sm:$0xff]
    %v573 = vld [vmem:[#allocation9 + $0x20] sm:$0xff]
    %v574 = vld [vmem:[#allocation9 + $0x28] sm:$0xff]
    %v575 = vld [vmem:[#allocation9 + $0x30] sm:$0xff]
    %v576 = vld [vmem:[#allocation9 + $0x38] sm:$0xff]
    %v577 = vld [vmem:[#allocation9 + $0x40] sm:$0xff]
    %v578 = vld [vmem:[#allocation9 + $0x48] sm:$0xff]
    %v579 = vld [vmem:[#allocation9 + $0x50] sm:$0xff]
    %v580 = vld [vmem:[#allocation9 + $0x58] sm:$0xff]
    %v581 = vld [vmem:[#allocation9 + $0x60] sm:$0xff]
    %v582 = vld [vmem:[#allocation9 + $0x68] sm:$0xff]
    %v583 = vld [vmem:[#allocation9 + $0x70] sm:$0xff]
    %v584 = vld [vmem:[#allocation9 + $0x78] sm:$0xff]
    %585 = vmatprep.subr.mxu0 0.0
    %v586 = vand.u32 %v569, 4294901760
    %587 = vmatpush1.msra.mxu0 %v586
    %588 = vmatprep.subr.mxu0 0.0
    %v589 = vand.u32 %v570, 4294901760
    %590 = vmatpush1.msra.mxu0 %v589
    %591 = vmatprep.subr.mxu0 0.0
    %v592 = vand.u32 %v571, 4294901760
    %593 = vmatpush1.msra.mxu0 %v592
    %594 = vmatprep.subr.mxu0 0.0
    %v595 = vand.u32 %v572, 4294901760
    %596 = vmatpush1.msra.mxu0 %v595
    %597 = vmatprep.subr.mxu0 0.0
    %v598 = vand.u32 %v573, 4294901760
    %599 = vmatpush1.msra.mxu0 %v598
    %600 = vmatprep.subr.mxu0 0.0
    %v601 = vand.u32 %v574, 4294901760
    %602 = vmatpush1.msra.mxu0 %v601
    %603 = vmatprep.subr.mxu0 0.0
    %v604 = vand.u32 %v575, 4294901760
    %605 = vmatpush1.msra.mxu0 %v604
    %606 = vmatprep.subr.mxu0 0.0
    %v607 = vand.u32 %v576, 4294901760
    %608 = vmatpush1.msra.mxu0 %v607
    %609 = vmatprep.subr.mxu0 0.0
    %v610 = vand.u32 %v577, 4294901760
    %611 = vmatpush1.msra.mxu0 %v610
    %612 = vmatprep.subr.mxu0 0.0
    %v613 = vand.u32 %v578, 4294901760
    %614 = vmatpush1.msra.mxu0 %v613
    %615 = vmatprep.subr.mxu0 0.0
    %v616 = vand.u32 %v579, 4294901760
    %617 = vmatpush1.msra.mxu0 %v616
    %618 = vmatprep.subr.mxu0 0.0
    %v619 = vand.u32 %v580, 4294901760
    %620 = vmatpush1.msra.mxu0 %v619
    %621 = vmatprep.subr.mxu0 0.0
    %v622 = vand.u32 %v581, 4294901760
    %623 = vmatpush1.msra.mxu0 %v622
    %624 = vmatprep.subr.mxu0 0.0
    %v625 = vand.u32 %v582, 4294901760
    %626 = vmatpush1.msra.mxu0 %v625
    %627 = vmatprep.subr.mxu0 0.0
    %v628 = vand.u32 %v583, 4294901760
    %629 = vmatpush1.msra.mxu0 %v628
    %630 = vmatprep.subr.mxu0 0.0
    %v631 = vand.u32 %v584, 4294901760
    %632 = vmatpush1.msra.mxu0 %v631
    %633 = vmatprep.subr.mxu0 0.0
    %634 = vmatpush1.msra.mxu0 0.0
    %635 = vmatprep.subr.mxu0 0.0
    %636 = vmatpush1.msra.mxu0 0.0
    %637 = vmatprep.subr.mxu0 0.0
    %638 = vmatpush1.msra.mxu0 0.0
    %639 = vmatprep.subr.mxu0 0.0
    %640 = vmatpush1.msra.mxu0 0.0
    %641 = vmatprep.subr.mxu0 0.0
    %642 = vmatpush1.msra.mxu0 0.0
    %643 = vmatprep.subr.mxu0 0.0
    %644 = vmatpush1.msra.mxu0 0.0
    %645 = vmatprep.subr.mxu0 0.0
    %646 = vmatpush1.msra.mxu0 0.0
    %647 = vmatprep.subr.mxu0 0.0
    %648 = vmatpush1.msra.mxu0 0.0
    %649 = vmatprep.subr.mxu0 0.0
    %650 = vmatpush1.msra.mxu0 0.0
    %651 = vmatprep.subr.mxu0 0.0
    %652 = vmatpush1.msra.mxu0 0.0
    %653 = vmatprep.subr.mxu0 0.0
    %654 = vmatpush1.msra.mxu0 0.0
    %655 = vmatprep.subr.mxu0 0.0
    %656 = vmatpush1.msra.mxu0 0.0
    %657 = vmatprep.subr.mxu0 0.0
    %658 = vmatpush1.msra.mxu0 0.0
    %659 = vmatprep.subr.mxu0 0.0
    %660 = vmatpush1.msra.mxu0 0.0
    %661 = vmatprep.subr.mxu0 0.0
    %662 = vmatpush1.msra.mxu0 0.0
    %663 = vmatprep.subr.mxu0 0.0
    %664 = vmatpush1.msra.mxu0 0.0
    %665 = vmatprep.mubr.f32.mxu0 0.0
    %v666 = vand.u32 %v567, 4294901760
    %v667 = vsub.f32 %v567, %v666
    %v668 = vand.u32 %v667, 4294901760
    %v669 = vsub.f32 %v667, %v668
    %v670 = vand.u32 %v669, 4294901760
    %671 = vmatmul.mubr.f32.gmra.mrb[0].mxu0 %v670
    %v672 = vpop.f32.mrb[0].mxu0
    %v673 = vadd.f32 0.0, %v672
    %v674 = vpop.f32.mrb[0].mxu0
    %675 = vmatprep.mubr.f32.mxu0 0.0
    %v676 = vand.u32 %v568, 4294901760
    %v677 = vsub.f32 %v568, %v676
    %v678 = vand.u32 %v677, 4294901760
    %v679 = vsub.f32 %v677, %v678
    %v680 = vand.u32 %v679, 4294901760
    %681 = vmatmul.mubr.f32.gmra.mrb[0].mxu0 %v680
    %v682 = vpop.f32.mrb[0].mxu0
    %v683 = vadd.f32 0.0, %v682
    %v684 = vpop.f32.mrb[0].mxu0
    %685 = vdwg.mxu0
    %686 = vmatprep.subr.mxu0 0.0
    %v687 = vand.u32 %v569, 4294901760
    %v688 = vsub.f32 %v569, %v687
    %v689 = vand.u32 %v688, 4294901760
    %v690 = vsub.f32 %v688, %v689
    %v691 = vand.u32 %v690, 4294901760
    %692 = vmatpush1.msra.mxu0 %v691
    %693 = vmatprep.subr.mxu0 0.0
    %v694 = vand.u32 %v570, 4294901760
    %v695 = vsub.f32 %v570, %v694
    %v696 = vand.u32 %v695, 4294901760
    %v697 = vsub.f32 %v695, %v696
    %v698 = vand.u32 %v697, 4294901760
    %699 = vmatpush1.msra.mxu0 %v698
    %700 = vmatprep.subr.mxu0 0.0
    %v701 = vand.u32 %v571, 4294901760
    %v702 = vsub.f32 %v571, %v701
    %v703 = vand.u32 %v702, 4294901760
    %v704 = vsub.f32 %v702, %v703
    %v705 = vand.u32 %v704, 4294901760
    %706 = vmatpush1.msra.mxu0 %v705
    %707 = vmatprep.subr.mxu0 0.0
    %v708 = vand.u32 %v572, 4294901760
    %v709 = vsub.f32 %v572, %v708
    %v710 = vand.u32 %v709, 4294901760
    %v711 = vsub.f32 %v709, %v710
    %v712 = vand.u32 %v711, 4294901760
    %713 = vmatpush1.msra.mxu0 %v712
    %714 = vmatprep.subr.mxu0 0.0
    %v715 = vand.u32 %v573, 4294901760
    %v716 = vsub.f32 %v573, %v715
    %v717 = vand.u32 %v716, 4294901760
    %v718 = vsub.f32 %v716, %v717
    %v719 = vand.u32 %v718, 4294901760
    %720 = vmatpush1.msra.mxu0 %v719
    %721 = vmatprep.subr.mxu0 0.0
    %v722 = vand.u32 %v574, 4294901760
    %v723 = vsub.f32 %v574, %v722
    %v724 = vand.u32 %v723, 4294901760
    %v725 = vsub.f32 %v723, %v724
    %v726 = vand.u32 %v725, 4294901760
    %727 = vmatpush1.msra.mxu0 %v726
    %728 = vmatprep.subr.mxu0 0.0
    %v729 = vand.u32 %v575, 4294901760
    %v730 = vsub.f32 %v575, %v729
    %v731 = vand.u32 %v730, 4294901760
    %v732 = vsub.f32 %v730, %v731
    %v733 = vand.u32 %v732, 4294901760
    %734 = vmatpush1.msra.mxu0 %v733
    %735 = vmatprep.subr.mxu0 0.0
    %v736 = vand.u32 %v576, 4294901760
    %v737 = vsub.f32 %v576, %v736
    %v738 = vand.u32 %v737, 4294901760
    %v739 = vsub.f32 %v737, %v738
    %v740 = vand.u32 %v739, 4294901760
    %741 = vmatpush1.msra.mxu0 %v740
    %742 = vmatprep.subr.mxu0 0.0
    %v743 = vand.u32 %v577, 4294901760
    %v744 = vsub.f32 %v577, %v743
    %v745 = vand.u32 %v744, 4294901760
    %v746 = vsub.f32 %v744, %v745
    %v747 = vand.u32 %v746, 4294901760
    %748 = vmatpush1.msra.mxu0 %v747
    %749 = vmatprep.subr.mxu0 0.0
    %v750 = vand.u32 %v578, 4294901760
    %v751 = vsub.f32 %v578, %v750
    %v752 = vand.u32 %v751, 4294901760
    %v753 = vsub.f32 %v751, %v752
    %v754 = vand.u32 %v753, 4294901760
    %755 = vmatpush1.msra.mxu0 %v754
    %756 = vmatprep.subr.mxu0 0.0
    %v757 = vand.u32 %v579, 4294901760
    %v758 = vsub.f32 %v579, %v757
    %v759 = vand.u32 %v758, 4294901760
    %v760 = vsub.f32 %v758, %v759
    %v761 = vand.u32 %v760, 4294901760
    %762 = vmatpush1.msra.mxu0 %v761
    %763 = vmatprep.subr.mxu0 0.0
    %v764 = vand.u32 %v580, 4294901760
    %v765 = vsub.f32 %v580, %v764
    %v766 = vand.u32 %v765, 4294901760
    %v767 = vsub.f32 %v765, %v766
    %v768 = vand.u32 %v767, 4294901760
    %769 = vmatpush1.msra.mxu0 %v768
    %770 = vmatprep.subr.mxu0 0.0
    %v771 = vand.u32 %v581, 4294901760
    %v772 = vsub.f32 %v581, %v771
    %v773 = vand.u32 %v772, 4294901760
    %v774 = vsub.f32 %v772, %v773
    %v775 = vand.u32 %v774, 4294901760
    %776 = vmatpush1.msra.mxu0 %v775
    %777 = vmatprep.subr.mxu0 0.0
    %v778 = vand.u32 %v582, 4294901760
    %v779 = vsub.f32 %v582, %v778
    %v780 = vand.u32 %v779, 4294901760
    %v781 = vsub.f32 %v779, %v780
    %v782 = vand.u32 %v781, 4294901760
    %783 = vmatpush1.msra.mxu0 %v782
    %784 = vmatprep.subr.mxu0 0.0
    %v785 = vand.u32 %v583, 4294901760
    %v786 = vsub.f32 %v583, %v785
    %v787 = vand.u32 %v786, 4294901760
    %v788 = vsub.f32 %v786, %v787
    %v789 = vand.u32 %v788, 4294901760
    %790 = vmatpush1.msra.mxu0 %v789
    %791 = vmatprep.subr.mxu0 0.0
    %v792 = vand.u32 %v584, 4294901760
    %v793 = vsub.f32 %v584, %v792
    %v794 = vand.u32 %v793, 4294901760
    %v795 = vsub.f32 %v793, %v794
    %v796 = vand.u32 %v795, 4294901760
    %797 = vmatpush1.msra.mxu0 %v796
    %798 = vmatprep.subr.mxu0 0.0
    %799 = vmatpush1.msra.mxu0 0.0
    %800 = vmatprep.subr.mxu0 0.0
    %801 = vmatpush1.msra.mxu0 0.0
    %802 = vmatprep.subr.mxu0 0.0
    %803 = vmatpush1.msra.mxu0 0.0
    %804 = vmatprep.subr.mxu0 0.0
    %805 = vmatpush1.msra.mxu0 0.0
    %806 = vmatprep.subr.mxu0 0.0
    %807 = vmatpush1.msra.mxu0 0.0
    %808 = vmatprep.subr.mxu0 0.0
    %809 = vmatpush1.msra.mxu0 0.0
    %810 = vmatprep.subr.mxu0 0.0
    %811 = vmatpush1.msra.mxu0 0.0
    %812 = vmatprep.subr.mxu0 0.0
    %813 = vmatpush1.msra.mxu0 0.0
    %814 = vmatprep.subr.mxu0 0.0
    %815 = vmatpush1.msra.mxu0 0.0
    %816 = vmatprep.subr.mxu0 0.0
    %817 = vmatpush1.msra.mxu0 0.0
    %818 = vmatprep.subr.mxu0 0.0
    %819 = vmatpush1.msra.mxu0 0.0
    %820 = vmatprep.subr.mxu0 0.0
    %821 = vmatpush1.msra.mxu0 0.0
    %822 = vmatprep.subr.mxu0 0.0
    %823 = vmatpush1.msra.mxu0 0.0
    %824 = vmatprep.subr.mxu0 0.0
    %825 = vmatpush1.msra.mxu0 0.0
    %826 = vmatprep.subr.mxu0 0.0
    %827 = vmatpush1.msra.mxu0 0.0
    %828 = vmatprep.subr.mxu0 0.0
    %829 = vmatpush1.msra.mxu0 0.0
    %830 = vmatprep.mubr.f32.mxu0 0.0
    %v831 = vand.u32 %v567, 4294901760
    %832 = vmatmul.mubr.f32.gmra.mrb[0].mxu0 %v831
    %v833 = vpop.f32.mrb[0].mxu0
    %v834 = vadd.f32 %v673, %v833
    %v835 = vpop.f32.mrb[0].mxu0
    %836 = vmatprep.mubr.f32.mxu0 0.0
    %v837 = vand.u32 %v568, 4294901760
    %838 = vmatmul.mubr.f32.gmra.mrb[0].mxu0 %v837
    %v839 = vpop.f32.mrb[0].mxu0
    %v840 = vadd.f32 %v683, %v839
    %v841 = vpop.f32.mrb[0].mxu0
    %842 = vdwg.mxu0
    %843 = vmatprep.subr.mxu0 0.0
    %v844 = vand.u32 %v569, 4294901760
    %v845 = vsub.f32 %v569, %v844
    %846 = vmatpush1.msra.mxu0 %v845
    %847 = vmatprep.subr.mxu0 0.0
    %v848 = vand.u32 %v570, 4294901760
    %v849 = vsub.f32 %v570, %v848
    %850 = vmatpush1.msra.mxu0 %v849
    %851 = vmatprep.subr.mxu0 0.0
    %v852 = vand.u32 %v571, 4294901760
    %v853 = vsub.f32 %v571, %v852
    %854 = vmatpush1.msra.mxu0 %v853
    %855 = vmatprep.subr.mxu0 0.0
    %v856 = vand.u32 %v572, 4294901760
    %v857 = vsub.f32 %v572, %v856
    %858 = vmatpush1.msra.mxu0 %v857
    %859 = vmatprep.subr.mxu0 0.0
    %v860 = vand.u32 %v573, 4294901760
    %v861 = vsub.f32 %v573, %v860
    %862 = vmatpush1.msra.mxu0 %v861
    %863 = vmatprep.subr.mxu0 0.0
    %v864 = vand.u32 %v574, 4294901760
    %v865 = vsub.f32 %v574, %v864
    %866 = vmatpush1.msra.mxu0 %v865
    %867 = vmatprep.subr.mxu0 0.0
    %v868 = vand.u32 %v575, 4294901760
    %v869 = vsub.f32 %v575, %v868
    %870 = vmatpush1.msra.mxu0 %v869
    %871 = vmatprep.subr.mxu0 0.0
    %v872 = vand.u32 %v576, 4294901760
    %v873 = vsub.f32 %v576, %v872
    %874 = vmatpush1.msra.mxu0 %v873
    %875 = vmatprep.subr.mxu0 0.0
    %v876 = vand.u32 %v577, 4294901760
    %v877 = vsub.f32 %v577, %v876
    %878 = vmatpush1.msra.mxu0 %v877
    %879 = vmatprep.subr.mxu0 0.0
    %v880 = vand.u32 %v578, 4294901760
    %v881 = vsub.f32 %v578, %v880
    %882 = vmatpush1.msra.mxu0 %v881
    %883 = vmatprep.subr.mxu0 0.0
    %v884 = vand.u32 %v579, 4294901760
    %v885 = vsub.f32 %v579, %v884
    %886 = vmatpush1.msra.mxu0 %v885
    %887 = vmatprep.subr.mxu0 0.0
    %v888 = vand.u32 %v580, 4294901760
    %v889 = vsub.f32 %v580, %v888
    %890 = vmatpush1.msra.mxu0 %v889
    %891 = vmatprep.subr.mxu0 0.0
    %v892 = vand.u32 %v581, 4294901760
    %v893 = vsub.f32 %v581, %v892
    %894 = vmatpush1.msra.mxu0 %v893
    %895 = vmatprep.subr.mxu0 0.0
    %v896 = vand.u32 %v582, 4294901760
    %v897 = vsub.f32 %v582, %v896
    %898 = vmatpush1.msra.mxu0 %v897
    %899 = vmatprep.subr.mxu0 0.0
    %v900 = vand.u32 %v583, 4294901760
    %v901 = vsub.f32 %v583, %v900
    %902 = vmatpush1.msra.mxu0 %v901
    %903 = vmatprep.subr.mxu0 0.0
    %v904 = vand.u32 %v584, 4294901760
    %v905 = vsub.f32 %v584, %v904
    %906 = vmatpush1.msra.mxu0 %v905
    %907 = vmatprep.subr.mxu0 0.0
    %908 = vmatpush1.msra.mxu0 0.0
    %909 = vmatprep.subr.mxu0 0.0
    %910 = vmatpush1.msra.mxu0 0.0
    %911 = vmatprep.subr.mxu0 0.0
    %912 = vmatpush1.msra.mxu0 0.0
    %913 = vmatprep.subr.mxu0 0.0
    %914 = vmatpush1.msra.mxu0 0.0
    %915 = vmatprep.subr.mxu0 0.0
    %916 = vmatpush1.msra.mxu0 0.0
    %917 = vmatprep.subr.mxu0 0.0
    %918 = vmatpush1.msra.mxu0 0.0
    %919 = vmatprep.subr.mxu0 0.0
    %920 = vmatpush1.msra.mxu0 0.0
    %921 = vmatprep.subr.mxu0 0.0
    %922 = vmatpush1.msra.mxu0 0.0
    %923 = vmatprep.subr.mxu0 0.0
    %924 = vmatpush1.msra.mxu0 0.0
    %925 = vmatprep.subr.mxu0 0.0
    %926 = vmatpush1.msra.mxu0 0.0
    %927 = vmatprep.subr.mxu0 0.0
    %928 = vmatpush1.msra.mxu0 0.0
    %929 = vmatprep.subr.mxu0 0.0
    %930 = vmatpush1.msra.mxu0 0.0
    %931 = vmatprep.subr.mxu0 0.0
    %932 = vmatpush1.msra.mxu0 0.0
    %933 = vmatprep.subr.mxu0 0.0
    %934 = vmatpush1.msra.mxu0 0.0
    %935 = vmatprep.subr.mxu0 0.0
    %936 = vmatpush1.msra.mxu0 0.0
    %937 = vmatprep.subr.mxu0 0.0
    %938 = vmatpush1.msra.mxu0 0.0
    %939 = vmatprep.mubr.f32.mxu0 0.0
    %v940 = vand.u32 %v567, 4294901760
    %v941 = vsub.f32 %v567, %v940
    %942 = vmatmul.mubr.f32.gmra.mrb[0].mxu0 %v941
    %v943 = vpop.f32.mrb[0].mxu0
    %v944 = vadd.f32 %v834, %v943
    %v945 = vpop.f32.mrb[0].mxu0
    %946 = vmatprep.mubr.f32.mxu0 0.0
    %v947 = vand.u32 %v568, 4294901760
    %v948 = vsub.f32 %v568, %v947
    %949 = vmatmul.mubr.f32.gmra.mrb[0].mxu0 %v948
    %v950 = vpop.f32.mrb[0].mxu0
    %v951 = vadd.f32 %v840, %v950
    %v952 = vpop.f32.mrb[0].mxu0
    %953 = vdwg.mxu0
    %954 = vmatprep.subr.mxu0 0.0
    %v955 = vand.u32 %v569, 4294901760
    %956 = vmatpush1.msra.mxu0 %v955
    %957 = vmatprep.subr.mxu0 0.0
    %v958 = vand.u32 %v570, 4294901760
    %959 = vmatpush1.msra.mxu0 %v958
    %960 = vmatprep.subr.mxu0 0.0
    %v961 = vand.u32 %v571, 4294901760
    %962 = vmatpush1.msra.mxu0 %v961
    %963 = vmatprep.subr.mxu0 0.0
    %v964 = vand.u32 %v572, 4294901760
    %965 = vmatpush1.msra.mxu0 %v964
    %966 = vmatprep.subr.mxu0 0.0
    %v967 = vand.u32 %v573, 4294901760
    %968 = vmatpush1.msra.mxu0 %v967
    %969 = vmatprep.subr.mxu0 0.0
    %v970 = vand.u32 %v574, 4294901760
    %971 = vmatpush1.msra.mxu0 %v970
    %972 = vmatprep.subr.mxu0 0.0
    %v973 = vand.u32 %v575, 4294901760
    %974 = vmatpush1.msra.mxu0 %v973
    %975 = vmatprep.subr.mxu0 0.0
    %v976 = vand.u32 %v576, 4294901760
    %977 = vmatpush1.msra.mxu0 %v976
    %978 = vmatprep.subr.mxu0 0.0
    %v979 = vand.u32 %v577, 4294901760
    %980 = vmatpush1.msra.mxu0 %v979
    %981 = vmatprep.subr.mxu0 0.0
    %v982 = vand.u32 %v578, 4294901760
    %983 = vmatpush1.msra.mxu0 %v982
    %984 = vmatprep.subr.mxu0 0.0
    %v985 = vand.u32 %v579, 4294901760
    %986 = vmatpush1.msra.mxu0 %v985
    %987 = vmatprep.subr.mxu0 0.0
    %v988 = vand.u32 %v580, 4294901760
    %989 = vmatpush1.msra.mxu0 %v988
    %990 = vmatprep.subr.mxu0 0.0
    %v991 = vand.u32 %v581, 4294901760
    %992 = vmatpush1.msra.mxu0 %v991
    %993 = vmatprep.subr.mxu0 0.0
    %v994 = vand.u32 %v582, 4294901760
    %995 = vmatpush1.msra.mxu0 %v994
    %996 = vmatprep.subr.mxu0 0.0
    %v997 = vand.u32 %v583, 4294901760
    %998 = vmatpush1.msra.mxu0 %v997
    %999 = vmatprep.subr.mxu0 0.0
    %v1000 = vand.u32 %v584, 4294901760
    %1001 = vmatpush1.msra.mxu0 %v1000
    %1002 = vmatprep.subr.mxu0 0.0
    %1003 = vmatpush1.msra.mxu0 0.0
    %1004 = vmatprep.subr.mxu0 0.0
    %1005 = vmatpush1.msra.mxu0 0.0
    %1006 = vmatprep.subr.mxu0 0.0
    %1007 = vmatpush1.msra.mxu0 0.0
    %1008 = vmatprep.subr.mxu0 0.0
    %1009 = vmatpush1.msra.mxu0 0.0
    %1010 = vmatprep.subr.mxu0 0.0
    %1011 = vmatpush1.msra.mxu0 0.0
    %1012 = vmatprep.subr.mxu0 0.0
    %1013 = vmatpush1.msra.mxu0 0.0
    %1014 = vmatprep.subr.mxu0 0.0
    %1015 = vmatpush1.msra.mxu0 0.0
    %1016 = vmatprep.subr.mxu0 0.0
    %1017 = vmatpush1.msra.mxu0 0.0
    %1018 = vmatprep.subr.mxu0 0.0
    %1019 = vmatpush1.msra.mxu0 0.0
    %1020 = vmatprep.subr.mxu0 0.0
    %1021 = vmatpush1.msra.mxu0 0.0
    %1022 = vmatprep.subr.mxu0 0.0
    %1023 = vmatpush1.msra.mxu0 0.0
    %1024 = vmatprep.subr.mxu0 0.0
    %1025 = vmatpush1.msra.mxu0 0.0
    %1026 = vmatprep.subr.mxu0 0.0
    %1027 = vmatpush1.msra.mxu0 0.0
    %1028 = vmatprep.subr.mxu0 0.0
    %1029 = vmatpush1.msra.mxu0 0.0
    %1030 = vmatprep.subr.mxu0 0.0
    %1031 = vmatpush1.msra.mxu0 0.0
    %1032 = vmatprep.subr.mxu0 0.0
    %1033 = vmatpush1.msra.mxu0 0.0
    %1034 = vmatprep.mubr.f32.mxu0 0.0
    %v1035 = vand.u32 %v567, 4294901760
    %v1036 = vsub.f32 %v567, %v1035
    %v1037 = vand.u32 %v1036, 4294901760
    %1038 = vmatmul.mubr.f32.gmra.mrb[0].mxu0 %v1037
    %v1039 = vpop.f32.mrb[0].mxu0
    %v1040 = vadd.f32 %v944, %v1039
    %v1041 = vpop.f32.mrb[0].mxu0
    %1042 = vmatprep.mubr.f32.mxu0 0.0
    %v1043 = vand.u32 %v568, 4294901760
    %v1044 = vsub.f32 %v568, %v1043
    %v1045 = vand.u32 %v1044, 4294901760
    %1046 = vmatmul.mubr.f32.gmra.mrb[0].mxu0 %v1045
    %v1047 = vpop.f32.mrb[0].mxu0
    %v1048 = vadd.f32 %v951, %v1047
    %v1049 = vpop.f32.mrb[0].mxu0
    %1050 = vdwg.mxu0
    %1051 = vmatprep.subr.mxu0 0.0
    %v1052 = vand.u32 %v569, 4294901760
    %v1053 = vsub.f32 %v569, %v1052
    %v1054 = vand.u32 %v1053, 4294901760
    %1055 = vmatpush1.msra.mxu0 %v1054
    %1056 = vmatprep.subr.mxu0 0.0
    %v1057 = vand.u32 %v570, 4294901760
    %v1058 = vsub.f32 %v570, %v1057
    %v1059 = vand.u32 %v1058, 4294901760
    %1060 = vmatpush1.msra.mxu0 %v1059
    %1061 = vmatprep.subr.mxu0 0.0
    %v1062 = vand.u32 %v571, 4294901760
    %v1063 = vsub.f32 %v571, %v1062
    %v1064 = vand.u32 %v1063, 4294901760
    %1065 = vmatpush1.msra.mxu0 %v1064
    %1066 = vmatprep.subr.mxu0 0.0
    %v1067 = vand.u32 %v572, 4294901760
    %v1068 = vsub.f32 %v572, %v1067
    %v1069 = vand.u32 %v1068, 4294901760
    %1070 = vmatpush1.msra.mxu0 %v1069
    %1071 = vmatprep.subr.mxu0 0.0
    %v1072 = vand.u32 %v573, 4294901760
    %v1073 = vsub.f32 %v573, %v1072
    %v1074 = vand.u32 %v1073, 4294901760
    %1075 = vmatpush1.msra.mxu0 %v1074
    %1076 = vmatprep.subr.mxu0 0.0
    %v1077 = vand.u32 %v574, 4294901760
    %v1078 = vsub.f32 %v574, %v1077
    %v1079 = vand.u32 %v1078, 4294901760
    %1080 = vmatpush1.msra.mxu0 %v1079
    %1081 = vmatprep.subr.mxu0 0.0
    %v1082 = vand.u32 %v575, 4294901760
    %v1083 = vsub.f32 %v575, %v1082
    %v1084 = vand.u32 %v1083, 4294901760
    %1085 = vmatpush1.msra.mxu0 %v1084
    %1086 = vmatprep.subr.mxu0 0.0
    %v1087 = vand.u32 %v576, 4294901760
    %v1088 = vsub.f32 %v576, %v1087
    %v1089 = vand.u32 %v1088, 4294901760
    %1090 = vmatpush1.msra.mxu0 %v1089
    %1091 = vmatprep.subr.mxu0 0.0
    %v1092 = vand.u32 %v577, 4294901760
    %v1093 = vsub.f32 %v577, %v1092
    %v1094 = vand.u32 %v1093, 4294901760
    %1095 = vmatpush1.msra.mxu0 %v1094
    %1096 = vmatprep.subr.mxu0 0.0
    %v1097 = vand.u32 %v578, 4294901760
    %v1098 = vsub.f32 %v578, %v1097
    %v1099 = vand.u32 %v1098, 4294901760
    %1100 = vmatpush1.msra.mxu0 %v1099
    %1101 = vmatprep.subr.mxu0 0.0
    %v1102 = vand.u32 %v579, 4294901760
    %v1103 = vsub.f32 %v579, %v1102
    %v1104 = vand.u32 %v1103, 4294901760
    %1105 = vmatpush1.msra.mxu0 %v1104
    %1106 = vmatprep.subr.mxu0 0.0
    %v1107 = vand.u32 %v580, 4294901760
    %v1108 = vsub.f32 %v580, %v1107
    %v1109 = vand.u32 %v1108, 4294901760
    %1110 = vmatpush1.msra.mxu0 %v1109
    %1111 = vmatprep.subr.mxu0 0.0
    %v1112 = vand.u32 %v581, 4294901760
    %v1113 = vsub.f32 %v581, %v1112
    %v1114 = vand.u32 %v1113, 4294901760
    %1115 = vmatpush1.msra.mxu0 %v1114
    %1116 = vmatprep.subr.mxu0 0.0
    %v1117 = vand.u32 %v582, 4294901760
    %v1118 = vsub.f32 %v582, %v1117
    %v1119 = vand.u32 %v1118, 4294901760
    %1120 = vmatpush1.msra.mxu0 %v1119
    %1121 = vmatprep.subr.mxu0 0.0
    %v1122 = vand.u32 %v583, 4294901760
    %v1123 = vsub.f32 %v583, %v1122
    %v1124 = vand.u32 %v1123, 4294901760
    %1125 = vmatpush1.msra.mxu0 %v1124
    %1126 = vmatprep.subr.mxu0 0.0
    %v1127 = vand.u32 %v584, 4294901760
    %v1128 = vsub.f32 %v584, %v1127
    %v1129 = vand.u32 %v1128, 4294901760
    %1130 = vmatpush1.msra.mxu0 %v1129
    %1131 = vmatprep.subr.mxu0 0.0
    %1132 = vmatpush1.msra.mxu0 0.0
    %1133 = vmatprep.subr.mxu0 0.0
    %1134 = vmatpush1.msra.mxu0 0.0
    %1135 = vmatprep.subr.mxu0 0.0
    %1136 = vmatpush1.msra.mxu0 0.0
    %1137 = vmatprep.subr.mxu0 0.0
    %1138 = vmatpush1.msra.mxu0 0.0
    %1139 = vmatprep.subr.mxu0 0.0
    %1140 = vmatpush1.msra.mxu0 0.0
    %1141 = vmatprep.subr.mxu0 0.0
    %1142 = vmatpush1.msra.mxu0 0.0
    %1143 = vmatprep.subr.mxu0 0.0
    %1144 = vmatpush1.msra.mxu0 0.0
    %1145 = vmatprep.subr.mxu0 0.0
    %1146 = vmatpush1.msra.mxu0 0.0
    %1147 = vmatprep.subr.mxu0 0.0
    %1148 = vmatpush1.msra.mxu0 0.0
    %1149 = vmatprep.subr.mxu0 0.0
    %1150 = vmatpush1.msra.mxu0 0.0
    %1151 = vmatprep.subr.mxu0 0.0
    %1152 = vmatpush1.msra.mxu0 0.0
    %1153 = vmatprep.subr.mxu0 0.0
    %1154 = vmatpush1.msra.mxu0 0.0
    %1155 = vmatprep.subr.mxu0 0.0
    %1156 = vmatpush1.msra.mxu0 0.0
    %1157 = vmatprep.subr.mxu0 0.0
    %1158 = vmatpush1.msra.mxu0 0.0
    %1159 = vmatprep.subr.mxu0 0.0
    %1160 = vmatpush1.msra.mxu0 0.0
    %1161 = vmatprep.subr.mxu0 0.0
    %1162 = vmatpush1.msra.mxu0 0.0
    %1163 = vmatprep.mubr.f32.mxu0 0.0
    %v1164 = vand.u32 %v567, 4294901760
    %1165 = vmatmul.mubr.f32.gmra.mrb[0].mxu0 %v1164
    %v1166 = vpop.f32.mrb[0].mxu0
    %v1167 = vadd.f32 %v1040, %v1166
    %v1168 = vpop.f32.mrb[0].mxu0
    %1169 = vmatprep.mubr.f32.mxu0 0.0
    %v1170 = vand.u32 %v568, 4294901760
    %1171 = vmatmul.mubr.f32.gmra.mrb[0].mxu0 %v1170
    %v1172 = vpop.f32.mrb[0].mxu0
    %v1173 = vadd.f32 %v1048, %v1172
    %v1174 = vpop.f32.mrb[0].mxu0
    %1175 = vdwg.mxu0
    %1176 = vmatprep.subr.mxu0 0.0
    %v1177 = vand.u32 %v569, 4294901760
    %1178 = vmatpush1.msra.mxu0 %v1177
    %1179 = vmatprep.subr.mxu0 0.0
    %v1180 = vand.u32 %v570, 4294901760
    %1181 = vmatpush1.msra.mxu0 %v1180
    %1182 = vmatprep.subr.mxu0 0.0
    %v1183 = vand.u32 %v571, 4294901760
    %1184 = vmatpush1.msra.mxu0 %v1183
    %1185 = vmatprep.subr.mxu0 0.0
    %v1186 = vand.u32 %v572, 4294901760
    %1187 = vmatpush1.msra.mxu0 %v1186
    %1188 = vmatprep.subr.mxu0 0.0
    %v1189 = vand.u32 %v573, 4294901760
    %1190 = vmatpush1.msra.mxu0 %v1189
    %1191 = vmatprep.subr.mxu0 0.0
    %v1192 = vand.u32 %v574, 4294901760
    %1193 = vmatpush1.msra.mxu0 %v1192
    %1194 = vmatprep.subr.mxu0 0.0
    %v1195 = vand.u32 %v575, 4294901760
    %1196 = vmatpush1.msra.mxu0 %v1195
    %1197 = vmatprep.subr.mxu0 0.0
    %v1198 = vand.u32 %v576, 4294901760
    %1199 = vmatpush1.msra.mxu0 %v1198
    %1200 = vmatprep.subr.mxu0 0.0
    %v1201 = vand.u32 %v577, 4294901760
    %1202 = vmatpush1.msra.mxu0 %v1201
    %1203 = vmatprep.subr.mxu0 0.0
    %v1204 = vand.u32 %v578, 4294901760
    %1205 = vmatpush1.msra.mxu0 %v1204
    %1206 = vmatprep.subr.mxu0 0.0
    %v1207 = vand.u32 %v579, 4294901760
    %1208 = vmatpush1.msra.mxu0 %v1207
    %1209 = vmatprep.subr.mxu0 0.0
    %v1210 = vand.u32 %v580, 4294901760
    %1211 = vmatpush1.msra.mxu0 %v1210
    %1212 = vmatprep.subr.mxu0 0.0
    %v1213 = vand.u32 %v581, 4294901760
    %1214 = vmatpush1.msra.mxu0 %v1213
    %1215 = vmatprep.subr.mxu0 0.0
    %v1216 = vand.u32 %v582, 4294901760
    %1217 = vmatpush1.msra.mxu0 %v1216
    %1218 = vmatprep.subr.mxu0 0.0
    %v1219 = vand.u32 %v583, 4294901760
    %1220 = vmatpush1.msra.mxu0 %v1219
    %1221 = vmatprep.subr.mxu0 0.0
    %v1222 = vand.u32 %v584, 4294901760
    %1223 = vmatpush1.msra.mxu0 %v1222
    %1224 = vmatprep.subr.mxu0 0.0
    %1225 = vmatpush1.msra.mxu0 0.0
    %1226 = vmatprep.subr.mxu0 0.0
    %1227 = vmatpush1.msra.mxu0 0.0
    %1228 = vmatprep.subr.mxu0 0.0
    %1229 = vmatpush1.msra.mxu0 0.0
    %1230 = vmatprep.subr.mxu0 0.0
    %1231 = vmatpush1.msra.mxu0 0.0
    %1232 = vmatprep.subr.mxu0 0.0
    %1233 = vmatpush1.msra.mxu0 0.0
    %1234 = vmatprep.subr.mxu0 0.0
    %1235 = vmatpush1.msra.mxu0 0.0
    %1236 = vmatprep.subr.mxu0 0.0
    %1237 = vmatpush1.msra.mxu0 0.0
    %1238 = vmatprep.subr.mxu0 0.0
    %1239 = vmatpush1.msra.mxu0 0.0
    %1240 = vmatprep.subr.mxu0 0.0
    %1241 = vmatpush1.msra.mxu0 0.0
    %1242 = vmatprep.subr.mxu0 0.0
    %1243 = vmatpush1.msra.mxu0 0.0
    %1244 = vmatprep.subr.mxu0 0.0
    %1245 = vmatpush1.msra.mxu0 0.0
    %1246 = vmatprep.subr.mxu0 0.0
    %1247 = vmatpush1.msra.mxu0 0.0
    %1248 = vmatprep.subr.mxu0 0.0
    %1249 = vmatpush1.msra.mxu0 0.0
    %1250 = vmatprep.subr.mxu0 0.0
    %1251 = vmatpush1.msra.mxu0 0.0
    %1252 = vmatprep.subr.mxu0 0.0
    %1253 = vmatpush1.msra.mxu0 0.0
    %1254 = vmatprep.subr.mxu0 0.0
    %1255 = vmatpush1.msra.mxu0 0.0
    %1256 = vmatprep.mubr.f32.mxu0 0.0
    %v1257 = vand.u32 %v567, 4294901760
    %1258 = vmatmul.mubr.f32.gmra.mrb[0].mxu0 %v1257
    %v1259 = vpop.f32.mrb[0].mxu0
    %v1260 = vadd.f32 %v1167, %v1259
    %v1261 = vpop.f32.mrb[0].mxu0
    %1262 = vmatprep.mubr.f32.mxu0 0.0
    %v1263 = vand.u32 %v568, 4294901760
    %1264 = vmatmul.mubr.f32.gmra.mrb[0].mxu0 %v1263
    %v1265 = vpop.f32.mrb[0].mxu0
    %v1266 = vadd.f32 %v1173, %v1265
    %v1267 = vpop.f32.mrb[0].mxu0
    %1268 = vdwg.mxu0
    %v1269 = vadd.f32 %v1260, %v1266
    %v1270 = vrot.slane %v1269, 4
    %v1271 = vadd.f32 %v1269, %v1270
    %v1272 = vrot.slane %v1271, 2
    %v1273 = vadd.f32 %v1271, %v1272
    %v1274 = vrot.slane %v1273, 1
    %v1275 = vadd.f32 %v1273, %v1274
    %v1276 = vmul.f32 %v1275, 0.001953125
    %v1277 = vsub.f32 %v567, %v1276
    %v1278 = vsub.f32 %v568, %v1276
    %v1279 = vmul.f32 %v1277, %v1277
    %v1280 = vmul.f32 %v1278, %v1278
    %1281 = vmatprep.subr.mxu0 0.0
    %v1282 = vand.u32 %v569, 4294901760
    %1283 = vmatpush1.msra.mxu0 %v1282
    %1284 = vmatprep.subr.mxu0 0.0
    %v1285 = vand.u32 %v570, 4294901760
    %1286 = vmatpush1.msra.mxu0 %v1285
    %1287 = vmatprep.subr.mxu0 0.0
    %v1288 = vand.u32 %v571, 4294901760
    %1289 = vmatpush1.msra.mxu0 %v1288
    %1290 = vmatprep.subr.mxu0 0.0
    %v1291 = vand.u32 %v572, 4294901760
    %1292 = vmatpush1.msra.mxu0 %v1291
    %1293 = vmatprep.subr.mxu0 0.0
    %v1294 = vand.u32 %v573, 4294901760
    %1295 = vmatpush1.msra.mxu0 %v1294
    %1296 = vmatprep.subr.mxu0 0.0
    %v1297 = vand.u32 %v574, 4294901760
    %1298 = vmatpush1.msra.mxu0 %v1297
    %1299 = vmatprep.subr.mxu0 0.0
    %v1300 = vand.u32 %v575, 4294901760
    %1301 = vmatpush1.msra.mxu0 %v1300
    %1302 = vmatprep.subr.mxu0 0.0
    %v1303 = vand.u32 %v576, 4294901760
    %1304 = vmatpush1.msra.mxu0 %v1303
    %1305 = vmatprep.subr.mxu0 0.0
    %v1306 = vand.u32 %v577, 4294901760
    %1307 = vmatpush1.msra.mxu0 %v1306
    %1308 = vmatprep.subr.mxu0 0.0
    %v1309 = vand.u32 %v578, 4294901760
    %1310 = vmatpush1.msra.mxu0 %v1309
    %1311 = vmatprep.subr.mxu0 0.0
    %v1312 = vand.u32 %v579, 4294901760
    %1313 = vmatpush1.msra.mxu0 %v1312
    %1314 = vmatprep.subr.mxu0 0.0
    %v1315 = vand.u32 %v580, 4294901760
    %1316 = vmatpush1.msra.mxu0 %v1315
    %1317 = vmatprep.subr.mxu0 0.0
    %v1318 = vand.u32 %v581, 4294901760
    %1319 = vmatpush1.msra.mxu0 %v1318
    %1320 = vmatprep.subr.mxu0 0.0
    %v1321 = vand.u32 %v582, 4294901760
    %1322 = vmatpush1.msra.mxu0 %v1321
    %1323 = vmatprep.subr.mxu0 0.0
    %v1324 = vand.u32 %v583, 4294901760
    %1325 = vmatpush1.msra.mxu0 %v1324
    %1326 = vmatprep.subr.mxu0 0.0
    %v1327 = vand.u32 %v584, 4294901760
    %1328 = vmatpush1.msra.mxu0 %v1327
    %1329 = vmatprep.subr.mxu0 0.0
    %1330 = vmatpush1.msra.mxu0 0.0
    %1331 = vmatprep.subr.mxu0 0.0
    %1332 = vmatpush1.msra.mxu0 0.0
    %1333 = vmatprep.subr.mxu0 0.0
    %1334 = vmatpush1.msra.mxu0 0.0
    %1335 = vmatprep.subr.mxu0 0.0
    %1336 = vmatpush1.msra.mxu0 0.0
    %1337 = vmatprep.subr.mxu0 0.0
    %1338 = vmatpush1.msra.mxu0 0.0
    %1339 = vmatprep.subr.mxu0 0.0
    %1340 = vmatpush1.msra.mxu0 0.0
    %1341 = vmatprep.subr.mxu0 0.0
    %1342 = vmatpush1.msra.mxu0 0.0
    %1343 = vmatprep.subr.mxu0 0.0
    %1344 = vmatpush1.msra.mxu0 0.0
    %1345 = vmatprep.subr.mxu0 0.0
    %1346 = vmatpush1.msra.mxu0 0.0
    %1347 = vmatprep.subr.mxu0 0.0
    %1348 = vmatpush1.msra.mxu0 0.0
    %1349 = vmatprep.subr.mxu0 0.0
    %1350 = vmatpush1.msra.mxu0 0.0
    %1351 = vmatprep.subr.mxu0 0.0
    %1352 = vmatpush1.msra.mxu0 0.0
    %1353 = vmatprep.subr.mxu0 0.0
    %1354 = vmatpush1.msra.mxu0 0.0
    %1355 = vmatprep.subr.mxu0 0.0
    %1356 = vmatpush1.msra.mxu0 0.0
    %1357 = vmatprep.subr.mxu0 0.0
    %1358 = vmatpush1.msra.mxu0 0.0
    %1359 = vmatprep.subr.mxu0 0.0
    %1360 = vmatpush1.msra.mxu0 0.0
    %1361 = vmatprep.mubr.f32.mxu0 0.0
    %v1362 = vand.u32 %v1279, 4294901760
    %v1363 = vsub.f32 %v1279, %v1362
    %v1364 = vand.u32 %v1363, 4294901760
    %v1365 = vsub.f32 %v1363, %v1364
    %v1366 = vand.u32 %v1365, 4294901760
    %1367 = vmatmul.mubr.f32.gmra.mrb[0].mxu0 %v1366
    %v1368 = vpop.f32.mrb[0].mxu0
    %v1369 = vadd.f32 0.0, %v1368
    %v1370 = vpop.f32.mrb[0].mxu0
    %1371 = vmatprep.mubr.f32.mxu0 0.0
    %v1372 = vand.u32 %v1280, 4294901760
    %v1373 = vsub.f32 %v1280, %v1372
    %v1374 = vand.u32 %v1373, 4294901760
    %v1375 = vsub.f32 %v1373, %v1374
    %v1376 = vand.u32 %v1375, 4294901760
    %1377 = vmatmul.mubr.f32.gmra.mrb[0].mxu0 %v1376
    %v1378 = vpop.f32.mrb[0].mxu0
    %v1379 = vadd.f32 0.0, %v1378
    %v1380 = vpop.f32.mrb[0].mxu0
    %1381 = vdwg.mxu0
    %1382 = vmatprep.subr.mxu0 0.0
    %v1383 = vand.u32 %v569, 4294901760
    %v1384 = vsub.f32 %v569, %v1383
    %v1385 = vand.u32 %v1384, 4294901760
    %v1386 = vsub.f32 %v1384, %v1385
    %v1387 = vand.u32 %v1386, 4294901760
    %1388 = vmatpush1.msra.mxu0 %v1387
    %1389 = vmatprep.subr.mxu0 0.0
    %v1390 = vand.u32 %v570, 4294901760
    %v1391 = vsub.f32 %v570, %v1390
    %v1392 = vand.u32 %v1391, 4294901760
    %v1393 = vsub.f32 %v1391, %v1392
    %v1394 = vand.u32 %v1393, 4294901760
    %1395 = vmatpush1.msra.mxu0 %v1394
    %1396 = vmatprep.subr.mxu0 0.0
    %v1397 = vand.u32 %v571, 4294901760
    %v1398 = vsub.f32 %v571, %v1397
    %v1399 = vand.u32 %v1398, 4294901760
    %v1400 = vsub.f32 %v1398, %v1399
    %v1401 = vand.u32 %v1400, 4294901760
    %1402 = vmatpush1.msra.mxu0 %v1401
    %1403 = vmatprep.subr.mxu0 0.0
    %v1404 = vand.u32 %v572, 4294901760
    %v1405 = vsub.f32 %v572, %v1404
    %v1406 = vand.u32 %v1405, 4294901760
    %v1407 = vsub.f32 %v1405, %v1406
    %v1408 = vand.u32 %v1407, 4294901760
    %1409 = vmatpush1.msra.mxu0 %v1408
    %1410 = vmatprep.subr.mxu0 0.0
    %v1411 = vand.u32 %v573, 4294901760
    %v1412 = vsub.f32 %v573, %v1411
    %v1413 = vand.u32 %v1412, 4294901760
    %v1414 = vsub.f32 %v1412, %v1413
    %v1415 = vand.u32 %v1414, 4294901760
    %1416 = vmatpush1.msra.mxu0 %v1415
    %1417 = vmatprep.subr.mxu0 0.0
    %v1418 = vand.u32 %v574, 4294901760
    %v1419 = vsub.f32 %v574, %v1418
    %v1420 = vand.u32 %v1419, 4294901760
    %v1421 = vsub.f32 %v1419, %v1420
    %v1422 = vand.u32 %v1421, 4294901760
    %1423 = vmatpush1.msra.mxu0 %v1422
    %1424 = vmatprep.subr.mxu0 0.0
    %v1425 = vand.u32 %v575, 4294901760
    %v1426 = vsub.f32 %v575, %v1425
    %v1427 = vand.u32 %v1426, 4294901760
    %v1428 = vsub.f32 %v1426, %v1427
    %v1429 = vand.u32 %v1428, 4294901760
    %1430 = vmatpush1.msra.mxu0 %v1429
    %1431 = vmatprep.subr.mxu0 0.0
    %v1432 = vand.u32 %v576, 4294901760
    %v1433 = vsub.f32 %v576, %v1432
    %v1434 = vand.u32 %v1433, 4294901760
    %v1435 = vsub.f32 %v1433, %v1434
    %v1436 = vand.u32 %v1435, 4294901760
    %1437 = vmatpush1.msra.mxu0 %v1436
    %1438 = vmatprep.subr.mxu0 0.0
    %v1439 = vand.u32 %v577, 4294901760
    %v1440 = vsub.f32 %v577, %v1439
    %v1441 = vand.u32 %v1440, 4294901760
    %v1442 = vsub.f32 %v1440, %v1441
    %v1443 = vand.u32 %v1442, 4294901760
    %1444 = vmatpush1.msra.mxu0 %v1443
    %1445 = vmatprep.subr.mxu0 0.0
    %v1446 = vand.u32 %v578, 4294901760
    %v1447 = vsub.f32 %v578, %v1446
    %v1448 = vand.u32 %v1447, 4294901760
    %v1449 = vsub.f32 %v1447, %v1448
    %v1450 = vand.u32 %v1449, 4294901760
    %1451 = vmatpush1.msra.mxu0 %v1450
    %1452 = vmatprep.subr.mxu0 0.0
    %v1453 = vand.u32 %v579, 4294901760
    %v1454 = vsub.f32 %v579, %v1453
    %v1455 = vand.u32 %v1454, 4294901760
    %v1456 = vsub.f32 %v1454, %v1455
    %v1457 = vand.u32 %v1456, 4294901760
    %1458 = vmatpush1.msra.mxu0 %v1457
    %1459 = vmatprep.subr.mxu0 0.0
    %v1460 = vand.u32 %v580, 4294901760
    %v1461 = vsub.f32 %v580, %v1460
    %v1462 = vand.u32 %v1461, 4294901760
    %v1463 = vsub.f32 %v1461, %v1462
    %v1464 = vand.u32 %v1463, 4294901760
    %1465 = vmatpush1.msra.mxu0 %v1464
    %1466 = vmatprep.subr.mxu0 0.0
    %v1467 = vand.u32 %v581, 4294901760
    %v1468 = vsub.f32 %v581, %v1467
    %v1469 = vand.u32 %v1468, 4294901760
    %v1470 = vsub.f32 %v1468, %v1469
    %v1471 = vand.u32 %v1470, 4294901760
    %1472 = vmatpush1.msra.mxu0 %v1471
    %1473 = vmatprep.subr.mxu0 0.0
    %v1474 = vand.u32 %v582, 4294901760
    %v1475 = vsub.f32 %v582, %v1474
    %v1476 = vand.u32 %v1475, 4294901760
    %v1477 = vsub.f32 %v1475, %v1476
    %v1478 = vand.u32 %v1477, 4294901760
    %1479 = vmatpush1.msra.mxu0 %v1478
    %1480 = vmatprep.subr.mxu0 0.0
    %v1481 = vand.u32 %v583, 4294901760
    %v1482 = vsub.f32 %v583, %v1481
    %v1483 = vand.u32 %v1482, 4294901760
    %v1484 = vsub.f32 %v1482, %v1483
    %v1485 = vand.u32 %v1484, 4294901760
    %1486 = vmatpush1.msra.mxu0 %v1485
    %1487 = vmatprep.subr.mxu0 0.0
    %v1488 = vand.u32 %v584, 4294901760
    %v1489 = vsub.f32 %v584, %v1488
    %v1490 = vand.u32 %v1489, 4294901760
    %v1491 = vsub.f32 %v1489, %v1490
    %v1492 = vand.u32 %v1491, 4294901760
    %1493 = vmatpush1.msra.mxu0 %v1492
    %1494 = vmatprep.subr.mxu0 0.0
    %1495 = vmatpush1.msra.mxu0 0.0
    %1496 = vmatprep.subr.mxu0 0.0
    %1497 = vmatpush1.msra.mxu0 0.0
    %1498 = vmatprep.subr.mxu0 0.0
    %1499 = vmatpush1.msra.mxu0 0.0
    %1500 = vmatprep.subr.mxu0 0.0
    %1501 = vmatpush1.msra.mxu0 0.0
    %1502 = vmatprep.subr.mxu0 0.0
    %1503 = vmatpush1.msra.mxu0 0.0
    %1504 = vmatprep.subr.mxu0 0.0
    %1505 = vmatpush1.msra.mxu0 0.0
    %1506 = vmatprep.subr.mxu0 0.0
    %1507 = vmatpush1.msra.mxu0 0.0
    %1508 = vmatprep.subr.mxu0 0.0
    %1509 = vmatpush1.msra.mxu0 0.0
    %1510 = vmatprep.subr.mxu0 0.0
    %1511 = vmatpush1.msra.mxu0 0.0
    %1512 = vmatprep.subr.mxu0 0.0
    %1513 = vmatpush1.msra.mxu0 0.0
    %1514 = vmatprep.subr.mxu0 0.0
    %1515 = vmatpush1.msra.mxu0 0.0
    %1516 = vmatprep.subr.mxu0 0.0
    %1517 = vmatpush1.msra.mxu0 0.0
    %1518 = vmatprep.subr.mxu0 0.0
    %1519 = vmatpush1.msra.mxu0 0.0
    %1520 = vmatprep.subr.mxu0 0.0
    %1521 = vmatpush1.msra.mxu0 0.0
    %1522 = vmatprep.subr.mxu0 0.0
    %1523 = vmatpush1.msra.mxu0 0.0
    %1524 = vmatprep.subr.mxu0 0.0
    %1525 = vmatpush1.msra.mxu0 0.0
    %1526 = vmatprep.mubr.f32.mxu0 0.0
    %v1527 = vand.u32 %v1279, 4294901760
    %1528 = vmatmul.mubr.f32.gmra.mrb[0].mxu0 %v1527
    %v1529 = vpop.f32.mrb[0].mxu0
    %v1530 = vadd.f32 %v1369, %v1529
    %v1531 = vpop.f32.mrb[0].mxu0
    %1532 = vmatprep.mubr.f32.mxu0 0.0
    %v1533 = vand.u32 %v1280, 4294901760
    %1534 = vmatmul.mubr.f32.gmra.mrb[0].mxu0 %v1533
    %v1535 = vpop.f32.mrb[0].mxu0
    %v1536 = vadd.f32 %v1379, %v1535
    %v1537 = vpop.f32.mrb[0].mxu0
    %1538 = vdwg.mxu0
    %1539 = vmatprep.subr.mxu0 0.0
    %v1540 = vand.u32 %v569, 4294901760
    %v1541 = vsub.f32 %v569, %v1540
    %1542 = vmatpush1.msra.mxu0 %v1541
    %1543 = vmatprep.subr.mxu0 0.0
    %v1544 = vand.u32 %v570, 4294901760
    %v1545 = vsub.f32 %v570, %v1544
    %1546 = vmatpush1.msra.mxu0 %v1545
    %1547 = vmatprep.subr.mxu0 0.0
    %v1548 = vand.u32 %v571, 4294901760
    %v1549 = vsub.f32 %v571, %v1548
    %1550 = vmatpush1.msra.mxu0 %v1549
    %1551 = vmatprep.subr.mxu0 0.0
    %v1552 = vand.u32 %v572, 4294901760
    %v1553 = vsub.f32 %v572, %v1552
    %1554 = vmatpush1.msra.mxu0 %v1553
    %1555 = vmatprep.subr.mxu0 0.0
    %v1556 = vand.u32 %v573, 4294901760
    %v1557 = vsub.f32 %v573, %v1556
    %1558 = vmatpush1.msra.mxu0 %v1557
    %1559 = vmatprep.subr.mxu0 0.0
    %v1560 = vand.u32 %v574, 4294901760
    %v1561 = vsub.f32 %v574, %v1560
    %1562 = vmatpush1.msra.mxu0 %v1561
    %1563 = vmatprep.subr.mxu0 0.0
    %v1564 = vand.u32 %v575, 4294901760
    %v1565 = vsub.f32 %v575, %v1564
    %1566 = vmatpush1.msra.mxu0 %v1565
    %1567 = vmatprep.subr.mxu0 0.0
    %v1568 = vand.u32 %v576, 4294901760
    %v1569 = vsub.f32 %v576, %v1568
    %1570 = vmatpush1.msra.mxu0 %v1569
    %1571 = vmatprep.subr.mxu0 0.0
    %v1572 = vand.u32 %v577, 4294901760
    %v1573 = vsub.f32 %v577, %v1572
    %1574 = vmatpush1.msra.mxu0 %v1573
    %1575 = vmatprep.subr.mxu0 0.0
    %v1576 = vand.u32 %v578, 4294901760
    %v1577 = vsub.f32 %v578, %v1576
    %1578 = vmatpush1.msra.mxu0 %v1577
    %1579 = vmatprep.subr.mxu0 0.0
    %v1580 = vand.u32 %v579, 4294901760
    %v1581 = vsub.f32 %v579, %v1580
    %1582 = vmatpush1.msra.mxu0 %v1581
    %1583 = vmatprep.subr.mxu0 0.0
    %v1584 = vand.u32 %v580, 4294901760
    %v1585 = vsub.f32 %v580, %v1584
    %1586 = vmatpush1.msra.mxu0 %v1585
    %1587 = vmatprep.subr.mxu0 0.0
    %v1588 = vand.u32 %v581, 4294901760
    %v1589 = vsub.f32 %v581, %v1588
    %1590 = vmatpush1.msra.mxu0 %v1589
    %1591 = vmatprep.subr.mxu0 0.0
    %v1592 = vand.u32 %v582, 4294901760
    %v1593 = vsub.f32 %v582, %v1592
    %1594 = vmatpush1.msra.mxu0 %v1593
    %1595 = vmatprep.subr.mxu0 0.0
    %v1596 = vand.u32 %v583, 4294901760
    %v1597 = vsub.f32 %v583, %v1596
    %1598 = vmatpush1.msra.mxu0 %v1597
    %1599 = vmatprep.subr.mxu0 0.0
    %v1600 = vand.u32 %v584, 4294901760
    %v1601 = vsub.f32 %v584, %v1600
    %1602 = vmatpush1.msra.mxu0 %v1601
    %1603 = vmatprep.subr.mxu0 0.0
    %1604 = vmatpush1.msra.mxu0 0.0
    %1605 = vmatprep.subr.mxu0 0.0
    %1606 = vmatpush1.msra.mxu0 0.0
    %1607 = vmatprep.subr.mxu0 0.0
    %1608 = vmatpush1.msra.mxu0 0.0
    %1609 = vmatprep.subr.mxu0 0.0
    %1610 = vmatpush1.msra.mxu0 0.0
    %1611 = vmatprep.subr.mxu0 0.0
    %1612 = vmatpush1.msra.mxu0 0.0
    %1613 = vmatprep.subr.mxu0 0.0
    %1614 = vmatpush1.msra.mxu0 0.0
    %1615 = vmatprep.subr.mxu0 0.0
    %1616 = vmatpush1.msra.mxu0 0.0
    %1617 = vmatprep.subr.mxu0 0.0
    %1618 = vmatpush1.msra.mxu0 0.0
    %1619 = vmatprep.subr.mxu0 0.0
    %1620 = vmatpush1.msra.mxu0 0.0
    %1621 = vmatprep.subr.mxu0 0.0
    %1622 = vmatpush1.msra.mxu0 0.0
    %1623 = vmatprep.subr.mxu0 0.0
    %1624 = vmatpush1.msra.mxu0 0.0
    %1625 = vmatprep.subr.mxu0 0.0
    %1626 = vmatpush1.msra.mxu0 0.0
    %1627 = vmatprep.subr.mxu0 0.0
    %1628 = vmatpush1.msra.mxu0 0.0
    %1629 = vmatprep.subr.mxu0 0.0
    %1630 = vmatpush1.msra.mxu0 0.0
    %1631 = vmatprep.subr.mxu0 0.0
    %1632 = vmatpush1.msra.mxu0 0.0
    %1633 = vmatprep.subr.mxu0 0.0
    %1634 = vmatpush1.msra.mxu0 0.0
    %1635 = vmatprep.mubr.f32.mxu0 0.0
    %v1636 = vand.u32 %v1279, 4294901760
    %v1637 = vsub.f32 %v1279, %v1636
    %1638 = vmatmul.mubr.f32.gmra.mrb[0].mxu0 %v1637
    %v1639 = vpop.f32.mrb[0].mxu0
    %v1640 = vadd.f32 %v1530, %v1639
    %v1641 = vpop.f32.mrb[0].mxu0
    %1642 = vmatprep.mubr.f32.mxu0 0.0
    %v1643 = vand.u32 %v1280, 4294901760
    %v1644 = vsub.f32 %v1280, %v1643
    %1645 = vmatmul.mubr.f32.gmra.mrb[0].mxu0 %v1644
    %v1646 = vpop.f32.mrb[0].mxu0
    %v1647 = vadd.f32 %v1536, %v1646
    %v1648 = vpop.f32.mrb[0].mxu0
    %1649 = vdwg.mxu0
    %1650 = vmatprep.subr.mxu0 0.0
    %v1651 = vand.u32 %v569, 4294901760
    %1652 = vmatpush1.msra.mxu0 %v1651
    %1653 = vmatprep.subr.mxu0 0.0
    %v1654 = vand.u32 %v570, 4294901760
    %1655 = vmatpush1.msra.mxu0 %v1654
    %1656 = vmatprep.subr.mxu0 0.0
    %v1657 = vand.u32 %v571, 4294901760
    %1658 = vmatpush1.msra.mxu0 %v1657
    %1659 = vmatprep.subr.mxu0 0.0
    %v1660 = vand.u32 %v572, 4294901760
    %1661 = vmatpush1.msra.mxu0 %v1660
    %1662 = vmatprep.subr.mxu0 0.0
    %v1663 = vand.u32 %v573, 4294901760
    %1664 = vmatpush1.msra.mxu0 %v1663
    %1665 = vmatprep.subr.mxu0 0.0
    %v1666 = vand.u32 %v574, 4294901760
    %1667 = vmatpush1.msra.mxu0 %v1666
    %1668 = vmatprep.subr.mxu0 0.0
    %v1669 = vand.u32 %v575, 4294901760
    %1670 = vmatpush1.msra.mxu0 %v1669
    %1671 = vmatprep.subr.mxu0 0.0
    %v1672 = vand.u32 %v576, 4294901760
    %1673 = vmatpush1.msra.mxu0 %v1672
    %1674 = vmatprep.subr.mxu0 0.0
    %v1675 = vand.u32 %v577, 4294901760
    %1676 = vmatpush1.msra.mxu0 %v1675
    %1677 = vmatprep.subr.mxu0 0.0
    %v1678 = vand.u32 %v578, 4294901760
    %1679 = vmatpush1.msra.mxu0 %v1678
    %1680 = vmatprep.subr.mxu0 0.0
    %v1681 = vand.u32 %v579, 4294901760
    %1682 = vmatpush1.msra.mxu0 %v1681
    %1683 = vmatprep.subr.mxu0 0.0
    %v1684 = vand.u32 %v580, 4294901760
    %1685 = vmatpush1.msra.mxu0 %v1684
    %1686 = vmatprep.subr.mxu0 0.0
    %v1687 = vand.u32 %v581, 4294901760
    %1688 = vmatpush1.msra.mxu0 %v1687
    %1689 = vmatprep.subr.mxu0 0.0
    %v1690 = vand.u32 %v582, 4294901760
    %1691 = vmatpush1.msra.mxu0 %v1690
    %1692 = vmatprep.subr.mxu0 0.0
    %v1693 = vand.u32 %v583, 4294901760
    %1694 = vmatpush1.msra.mxu0 %v1693
    %1695 = vmatprep.subr.mxu0 0.0
    %v1696 = vand.u32 %v584, 4294901760
    %1697 = vmatpush1.msra.mxu0 %v1696
    %1698 = vmatprep.subr.mxu0 0.0
    %1699 = vmatpush1.msra.mxu0 0.0
    %1700 = vmatprep.subr.mxu0 0.0
    %1701 = vmatpush1.msra.mxu0 0.0
    %1702 = vmatprep.subr.mxu0 0.0
    %1703 = vmatpush1.msra.mxu0 0.0
    %1704 = vmatprep.subr.mxu0 0.0
    %1705 = vmatpush1.msra.mxu0 0.0
    %1706 = vmatprep.subr.mxu0 0.0
    %1707 = vmatpush1.msra.mxu0 0.0
    %1708 = vmatprep.subr.mxu0 0.0
    %1709 = vmatpush1.msra.mxu0 0.0
    %1710 = vmatprep.subr.mxu0 0.0
    %1711 = vmatpush1.msra.mxu0 0.0
    %1712 = vmatprep.subr.mxu0 0.0
    %1713 = vmatpush1.msra.mxu0 0.0
    %1714 = vmatprep.subr.mxu0 0.0
    %1715 = vmatpush1.msra.mxu0 0.0
    %1716 = vmatprep.subr.mxu0 0.0
    %1717 = vmatpush1.msra.mxu0 0.0
    %1718 = vmatprep.subr.mxu0 0.0
    %1719 = vmatpush1.msra.mxu0 0.0
    %1720 = vmatprep.subr.mxu0 0.0
    %1721 = vmatpush1.msra.mxu0 0.0
    %1722 = vmatprep.subr.mxu0 0.0
    %1723 = vmatpush1.msra.mxu0 0.0
    %1724 = vmatprep.subr.mxu0 0.0
    %1725 = vmatpush1.msra.mxu0 0.0
    %1726 = vmatprep.subr.mxu0 0.0
    %1727 = vmatpush1.msra.mxu0 0.0
    %1728 = vmatprep.subr.mxu0 0.0
    %1729 = vmatpush1.msra.mxu0 0.0
    %1730 = vmatprep.mubr.f32.mxu0 0.0
    %v1731 = vand.u32 %v1279, 4294901760
    %v1732 = vsub.f32 %v1279, %v1731
    %v1733 = vand.u32 %v1732, 4294901760
    %1734 = vmatmul.mubr.f32.gmra.mrb[0].mxu0 %v1733
    %v1735 = vpop.f32.mrb[0].mxu0
    %v1736 = vadd.f32 %v1640, %v1735
    %v1737 = vpop.f32.mrb[0].mxu0
    %1738 = vmatprep.mubr.f32.mxu0 0.0
    %v1739 = vand.u32 %v1280, 4294901760
    %v1740 = vsub.f32 %v1280, %v1739
    %v1741 = vand.u32 %v1740, 4294901760
    %1742 = vmatmul.mubr.f32.gmra.mrb[0].mxu0 %v1741
    %v1743 = vpop.f32.mrb[0].mxu0
    %v1744 = vadd.f32 %v1647, %v1743
    %v1745 = vpop.f32.mrb[0].mxu0
    %1746 = vdwg.mxu0
    %1747 = vmatprep.subr.mxu0 0.0
    %v1748 = vand.u32 %v569, 4294901760
    %v1749 = vsub.f32 %v569, %v1748
    %v1750 = vand.u32 %v1749, 4294901760
    %1751 = vmatpush1.msra.mxu0 %v1750
    %1752 = vmatprep.subr.mxu0 0.0
    %v1753 = vand.u32 %v570, 4294901760
    %v1754 = vsub.f32 %v570, %v1753
    %v1755 = vand.u32 %v1754, 4294901760
    %1756 = vmatpush1.msra.mxu0 %v1755
    %1757 = vmatprep.subr.mxu0 0.0
    %v1758 = vand.u32 %v571, 4294901760
    %v1759 = vsub.f32 %v571, %v1758
    %v1760 = vand.u32 %v1759, 4294901760
    %1761 = vmatpush1.msra.mxu0 %v1760
    %1762 = vmatprep.subr.mxu0 0.0
    %v1763 = vand.u32 %v572, 4294901760
    %v1764 = vsub.f32 %v572, %v1763
    %v1765 = vand.u32 %v1764, 4294901760
    %1766 = vmatpush1.msra.mxu0 %v1765
    %1767 = vmatprep.subr.mxu0 0.0
    %v1768 = vand.u32 %v573, 4294901760
    %v1769 = vsub.f32 %v573, %v1768
    %v1770 = vand.u32 %v1769, 4294901760
    %1771 = vmatpush1.msra.mxu0 %v1770
    %1772 = vmatprep.subr.mxu0 0.0
    %v1773 = vand.u32 %v574, 4294901760
    %v1774 = vsub.f32 %v574, %v1773
    %v1775 = vand.u32 %v1774, 4294901760
    %1776 = vmatpush1.msra.mxu0 %v1775
    %1777 = vmatprep.subr.mxu0 0.0
    %v1778 = vand.u32 %v575, 4294901760
    %v1779 = vsub.f32 %v575, %v1778
    %v1780 = vand.u32 %v1779, 4294901760
    %1781 = vmatpush1.msra.mxu0 %v1780
    %1782 = vmatprep.subr.mxu0 0.0
    %v1783 = vand.u32 %v576, 4294901760
    %v1784 = vsub.f32 %v576, %v1783
    %v1785 = vand.u32 %v1784, 4294901760
    %1786 = vmatpush1.msra.mxu0 %v1785
    %1787 = vmatprep.subr.mxu0 0.0
    %v1788 = vand.u32 %v577, 4294901760
    %v1789 = vsub.f32 %v577, %v1788
    %v1790 = vand.u32 %v1789, 4294901760
    %1791 = vmatpush1.msra.mxu0 %v1790
    %1792 = vmatprep.subr.mxu0 0.0
    %v1793 = vand.u32 %v578, 4294901760
    %v1794 = vsub.f32 %v578, %v1793
    %v1795 = vand.u32 %v1794, 4294901760
    %1796 = vmatpush1.msra.mxu0 %v1795
    %1797 = vmatprep.subr.mxu0 0.0
    %v1798 = vand.u32 %v579, 4294901760
    %v1799 = vsub.f32 %v579, %v1798
    %v1800 = vand.u32 %v1799, 4294901760
    %1801 = vmatpush1.msra.mxu0 %v1800
    %1802 = vmatprep.subr.mxu0 0.0
    %v1803 = vand.u32 %v580, 4294901760
    %v1804 = vsub.f32 %v580, %v1803
    %v1805 = vand.u32 %v1804, 4294901760
    %1806 = vmatpush1.msra.mxu0 %v1805
    %1807 = vmatprep.subr.mxu0 0.0
    %v1808 = vand.u32 %v581, 4294901760
    %v1809 = vsub.f32 %v581, %v1808
    %v1810 = vand.u32 %v1809, 4294901760
    %1811 = vmatpush1.msra.mxu0 %v1810
    %1812 = vmatprep.subr.mxu0 0.0
    %v1813 = vand.u32 %v582, 4294901760
    %v1814 = vsub.f32 %v582, %v1813
    %v1815 = vand.u32 %v1814, 4294901760
    %1816 = vmatpush1.msra.mxu0 %v1815
    %1817 = vmatprep.subr.mxu0 0.0
    %v1818 = vand.u32 %v583, 4294901760
    %v1819 = vsub.f32 %v583, %v1818
    %v1820 = vand.u32 %v1819, 4294901760
    %1821 = vmatpush1.msra.mxu0 %v1820
    %1822 = vmatprep.subr.mxu0 0.0
    %v1823 = vand.u32 %v584, 4294901760
    %v1824 = vsub.f32 %v584, %v1823
    %v1825 = vand.u32 %v1824, 4294901760
    %1826 = vmatpush1.msra.mxu0 %v1825
    %1827 = vmatprep.subr.mxu0 0.0
    %1828 = vmatpush1.msra.mxu0 0.0
    %1829 = vmatprep.subr.mxu0 0.0
    %1830 = vmatpush1.msra.mxu0 0.0
    %1831 = vmatprep.subr.mxu0 0.0
    %1832 = vmatpush1.msra.mxu0 0.0
    %1833 = vmatprep.subr.mxu0 0.0
    %1834 = vmatpush1.msra.mxu0 0.0
    %1835 = vmatprep.subr.mxu0 0.0
    %1836 = vmatpush1.msra.mxu0 0.0
    %1837 = vmatprep.subr.mxu0 0.0
    %1838 = vmatpush1.msra.mxu0 0.0
    %1839 = vmatprep.subr.mxu0 0.0
    %1840 = vmatpush1.msra.mxu0 0.0
    %1841 = vmatprep.subr.mxu0 0.0
    %1842 = vmatpush1.msra.mxu0 0.0
    %1843 = vmatprep.subr.mxu0 0.0
    %1844 = vmatpush1.msra.mxu0 0.0
    %1845 = vmatprep.subr.mxu0 0.0
    %1846 = vmatpush1.msra.mxu0 0.0
    %1847 = vmatprep.subr.mxu0 0.0
    %1848 = vmatpush1.msra.mxu0 0.0
    %1849 = vmatprep.subr.mxu0 0.0
    %1850 = vmatpush1.msra.mxu0 0.0
    %1851 = vmatprep.subr.mxu0 0.0
    %1852 = vmatpush1.msra.mxu0 0.0
    %1853 = vmatprep.subr.mxu0 0.0
    %1854 = vmatpush1.msra.mxu0 0.0
    %1855 = vmatprep.subr.mxu0 0.0
    %1856 = vmatpush1.msra.mxu0 0.0
    %1857 = vmatprep.subr.mxu0 0.0
    %1858 = vmatpush1.msra.mxu0 0.0
    %1859 = vmatprep.mubr.f32.mxu0 0.0
    %v1860 = vand.u32 %v1279, 4294901760
    %1861 = vmatmul.mubr.f32.gmra.mrb[0].mxu0 %v1860
    %v1862 = vpop.f32.mrb[0].mxu0
    %v1863 = vadd.f32 %v1736, %v1862
    %v1864 = vpop.f32.mrb[0].mxu0
    %1865 = vmatprep.mubr.f32.mxu0 0.0
    %v1866 = vand.u32 %v1280, 4294901760
    %1867 = vmatmul.mubr.f32.gmra.mrb[0].mxu0 %v1866
    %v1868 = vpop.f32.mrb[0].mxu0
    %v1869 = vadd.f32 %v1744, %v1868
    %v1870 = vpop.f32.mrb[0].mxu0
    %1871 = vdwg.mxu0
    %1872 = vmatprep.subr.mxu0 0.0
    %v1873 = vand.u32 %v569, 4294901760
    %1874 = vmatpush1.msra.mxu0 %v1873
    %1875 = vmatprep.subr.mxu0 0.0
    %v1876 = vand.u32 %v570, 4294901760
    %1877 = vmatpush1.msra.mxu0 %v1876
    %1878 = vmatprep.subr.mxu0 0.0
    %v1879 = vand.u32 %v571, 4294901760
    %1880 = vmatpush1.msra.mxu0 %v1879
    %1881 = vmatprep.subr.mxu0 0.0
    %v1882 = vand.u32 %v572, 4294901760
    %1883 = vmatpush1.msra.mxu0 %v1882
    %1884 = vmatprep.subr.mxu0 0.0
    %v1885 = vand.u32 %v573, 4294901760
    %1886 = vmatpush1.msra.mxu0 %v1885
    %1887 = vmatprep.subr.mxu0 0.0
    %v1888 = vand.u32 %v574, 4294901760
    %1889 = vmatpush1.msra.mxu0 %v1888
    %1890 = vmatprep.subr.mxu0 0.0
    %v1891 = vand.u32 %v575, 4294901760
    %1892 = vmatpush1.msra.mxu0 %v1891
    %1893 = vmatprep.subr.mxu0 0.0
    %v1894 = vand.u32 %v576, 4294901760
    %1895 = vmatpush1.msra.mxu0 %v1894
    %1896 = vmatprep.subr.mxu0 0.0
    %v1897 = vand.u32 %v577, 4294901760
    %1898 = vmatpush1.msra.mxu0 %v1897
    %1899 = vmatprep.subr.mxu0 0.0
    %v1900 = vand.u32 %v578, 4294901760
    %1901 = vmatpush1.msra.mxu0 %v1900
    %1902 = vmatprep.subr.mxu0 0.0
    %v1903 = vand.u32 %v579, 4294901760
    %1904 = vmatpush1.msra.mxu0 %v1903
    %1905 = vmatprep.subr.mxu0 0.0
    %v1906 = vand.u32 %v580, 4294901760
    %1907 = vmatpush1.msra.mxu0 %v1906
    %1908 = vmatprep.subr.mxu0 0.0
    %v1909 = vand.u32 %v581, 4294901760
    %1910 = vmatpush1.msra.mxu0 %v1909
    %1911 = vmatprep.subr.mxu0 0.0
    %v1912 = vand.u32 %v582, 4294901760
    %1913 = vmatpush1.msra.mxu0 %v1912
    %1914 = vmatprep.subr.mxu0 0.0
    %v1915 = vand.u32 %v583, 4294901760
    %1916 = vmatpush1.msra.mxu0 %v1915
    %1917 = vmatprep.subr.mxu0 0.0
    %v1918 = vand.u32 %v584, 4294901760
    %1919 = vmatpush1.msra.mxu0 %v1918
    %1920 = vmatprep.subr.mxu0 0.0
    %1921 = vmatpush1.msra.mxu0 0.0
    %1922 = vmatprep.subr.mxu0 0.0
    %1923 = vmatpush1.msra.mxu0 0.0
    %1924 = vmatprep.subr.mxu0 0.0
    %1925 = vmatpush1.msra.mxu0 0.0
    %1926 = vmatprep.subr.mxu0 0.0
    %1927 = vmatpush1.msra.mxu0 0.0
    %1928 = vmatprep.subr.mxu0 0.0
    %1929 = vmatpush1.msra.mxu0 0.0
    %1930 = vmatprep.subr.mxu0 0.0
    %1931 = vmatpush1.msra.mxu0 0.0
    %1932 = vmatprep.subr.mxu0 0.0
    %1933 = vmatpush1.msra.mxu0 0.0
    %1934 = vmatprep.subr.mxu0 0.0
    %1935 = vmatpush1.msra.mxu0 0.0
    %1936 = vmatprep.subr.mxu0 0.0
    %1937 = vmatpush1.msra.mxu0 0.0
    %1938 = vmatprep.subr.mxu0 0.0
    %1939 = vmatpush1.msra.mxu0 0.0
    %1940 = vmatprep.subr.mxu0 0.0
    %1941 = vmatpush1.msra.mxu0 0.0
    %1942 = vmatprep.subr.mxu0 0.0
    %1943 = vmatpush1.msra.mxu0 0.0
    %1944 = vmatprep.subr.mxu0 0.0
    %1945 = vmatpush1.msra.mxu0 0.0
    %1946 = vmatprep.subr.mxu0 0.0
    %1947 = vmatpush1.msra.mxu0 0.0
    %1948 = vmatprep.subr.mxu0 0.0
    %1949 = vmatpush1.msra.mxu0 0.0
    %1950 = vmatprep.subr.mxu0 0.0
    %1951 = vmatpush1.msra.mxu0 0.0
    %1952 = vmatprep.mubr.f32.mxu0 0.0
    %v1953 = vand.u32 %v1279, 4294901760
    %1954 = vmatmul.mubr.f32.gmra.mrb[0].mxu0 %v1953
    %v1955 = vpop.f32.mrb[0].mxu0
    %v1956 = vadd.f32 %v1863, %v1955
    %v1957 = vpop.f32.mrb[0].mxu0
    %1958 = vmatprep.mubr.f32.mxu0 0.0
    %v1959 = vand.u32 %v1280, 4294901760
    %1960 = vmatmul.mubr.f32.gmra.mrb[0].mxu0 %v1959
    %v1961 = vpop.f32.mrb[0].mxu0
    %v1962 = vadd.f32 %v1869, %v1961
    %v1963 = vpop.f32.mrb[0].mxu0
    %1964 = vdwg.mxu0
    %v1965 = vadd.f32 %v1956, %v1962
    %v1966 = vrot.slane %v1965, 4
    %v1967 = vadd.f32 %v1965, %v1966
    %v1968 = vrot.slane %v1967, 2
    %v1969 = vadd.f32 %v1967, %v1968
    %v1970 = vrot.slane %v1969, 1
    %v1971 = vadd.f32 %v1969, %v1970
    %v1972 = vmul.f32 %v1971, 0.001953125
    %v1973 = vadd.f32 %v1972, 1e-05
    %v1974 = vrsqrt.pop %v1973
    %v1975 = vld [vmem:[%s5] sm:$0x1]
    %v1976 = vmul.f32 %v1974, %v1975
    %v1977 = vlaneseq
    %v1978 = vshrl.u32 %v1977, 7
    %v1979 = vsub.s32 0, %v1978
    %v1980 = vrot.slane %v1976, %v1979
    %v1981 = vmul.f32 %v1277, %v1980
    %v1982 = vmul.f32 %v1278, %v1980
    %v1983 = vld [vmem:[%s6] sm:$0x1]
    %v1985 = vlaneseq
    %v1986 = vshrl.u32 %v1985, 7
    %v1987 = vsub.s32 0, %v1986
    %v1988 = vrot.slane %v1983, %v1987
    %v1990 = vadd.f32 %v1981, %v1988
    %v1991 = vadd.f32 %v1982, %v1988
    %v1992 = vxor.u32 %v1990, 2147483648
    %v1993 = vxor.u32 %v1991, 2147483648
    %v1994 = vmul.f32 %v1992, 1.442695
    %v1995 = vpow.pop %v1994
    %v1996 = vmul.f32 %v1993, 1.442695
    %v1997 = vpow.pop %v1996
    %v1998 = vadd.f32 %v1995, 1.0
    %v1999 = vadd.f32 %v1997, 1.0
    %v2000 = vrcp.pop %v1998
    %v2001 = vmul.f32 1.0, %v2000
    %v2002 = vrcp.pop %v1999
    %v2003 = vmul.f32 1.0, %v2002
    %v2004 = vmul.f32 %v1990, %v2001
    %v2005 = vmul.f32 %v1991, %v2003
    %2006 = vst [vmem:[#allocation2 + $0x1] sm:$0xff] %v2004
    %2007 = vst [vmem:[#allocation2 + $0x9] sm:$0xff] %v2005
    %v2008 = vld [vmem:[#allocation2] sm:$0xff]
    %v2009 = vld [vmem:[#allocation2 + $0x8] sm:$0xff]
    %2010 = vrot.lane.b32.xlu0 %v2008, 1
    %v2011 = vpop.permute.xlu0 %2010
    %2012 = vrot.lane.b32.xlu0 %v2009, 1
    %v2013 = vpop.permute.xlu0 %2012
    %v2014 = vld [vmem:[#allocation8] sm:$0x1]
    %v2015 = vlaneseq
    %v2016 = vshrl.u32 %v2015, 7
    %v2017 = vsub.s32 0, %v2016
    %v2018 = vrot.slane %v2014, %v2017
    %v2019 = vmul.f32 %v2011, %v2018
    %v2020 = vmul.f32 %v2013, %v2018
    %v2021 = vadd.f32 %v2019, 0.0
    %v2022 = vadd.f32 %v2020, 0.0
    %v2023 = vld [vmem:[#allocation8 + $0x1] sm:$0x1]
    %v2024 = vlaneseq
    %v2025 = vshrl.u32 %v2024, 7
    %v2026 = vsub.s32 0, %v2025
    %v2027 = vrot.slane %v2023, %v2026
    %v2028 = vmul.f32 %v2008, %v2027
    %v2029 = vmul.f32 %v2009, %v2027
    %v2030 = vadd.f32 %v2021, %v2028
    %v2031 = vadd.f32 %v2022, %v2029
    %2032 = vrot.lane.b32.xlu0 %v2008, 127
    %v2033 = vpop.permute.xlu0 %2032
    %2034 = vrot.lane.b32.xlu0 %v2009, 127
    %v2035 = vpop.permute.xlu0 %2034
    %v2036 = vld [vmem:[#allocation8 + $0x2] sm:$0x1]
    %v2037 = vlaneseq
    %v2038 = vshrl.u32 %v2037, 7
    %v2039 = vsub.s32 0, %v2038
    %v2040 = vrot.slane %v2036, %v2039
    %v2041 = vmul.f32 %v2033, %v2040
    %v2042 = vmul.f32 %v2035, %v2040
    %v2043 = vadd.f32 %v2030, %v2041
    %v2044 = vadd.f32 %v2031, %v2042
    %2045 = vrot.lane.b32.xlu0 %v2008, 97
    %v2046 = vpop.permute.xlu0 %2045
    %2047 = vrot.lane.b32.xlu0 %v2009, 97
    %v2048 = vpop.permute.xlu0 %2047
    %v2049 = vld [vmem:[#allocation8 + $0x9] sm:$0x1]
    %v2050 = vlaneseq
    %v2051 = vshrl.u32 %v2050, 7
    %v2052 = vsub.s32 0, %v2051
    %v2053 = vrot.slane %v2049, %v2052
    %v2054 = vmul.f32 %v2046, %v2053
    %v2055 = vmul.f32 %v2048, %v2053
    %v2056 = vadd.f32 %v2054, 0.0
    %v2057 = vadd.f32 %v2055, 0.0
    %2058 = vrot.lane.b32.xlu0 %v2008, 96
    %v2059 = vpop.permute.xlu0 %2058
    %2060 = vrot.lane.b32.xlu0 %v2009, 96
    %v2061 = vpop.permute.xlu0 %2060
    %v2062 = vld [vmem:[#allocation8 + $0xa] sm:$0x1]
    %v2063 = vlaneseq
    %v2064 = vshrl.u32 %v2063, 7
    %v2065 = vsub.s32 0, %v2064
    %v2066 = vrot.slane %v2062, %v2065
    %v2067 = vmul.f32 %v2059, %v2066
    %v2068 = vmul.f32 %v2061, %v2066
    %v2069 = vadd.f32 %v2056, %v2067
    %v2070 = vadd.f32 %v2057, %v2068
    %2071 = vrot.lane.b32.xlu0 %v2008, 95
    %v2072 = vpop.permute.xlu0 %2071
    %2073 = vrot.lane.b32.xlu0 %v2009, 95
    %v2074 = vpop.permute.xlu0 %2073
    %v2075 = vld [vmem:[#allocation8 + $0xb] sm:$0x1]
    %v2076 = vlaneseq
    %v2077 = vshrl.u32 %v2076, 7
    %v2078 = vsub.s32 0, %v2077
    %v2079 = vrot.slane %v2075, %v2078
    %v2080 = vmul.f32 %v2072, %v2079
    %v2081 = vmul.f32 %v2074, %v2079
    %v2082 = vadd.f32 %v2069, %v2080
    %v2083 = vadd.f32 %v2070, %v2081
    %2084 = vrot.lane.b32.xlu0 %v2008, 65
    %v2085 = vpop.permute.xlu0 %2084
    %2086 = vrot.lane.b32.xlu0 %v2009, 65
    %v2087 = vpop.permute.xlu0 %2086
    %v2088 = vld [vmem:[#allocation8 + $0x12] sm:$0x1]
    %v2089 = vlaneseq
    %v2090 = vshrl.u32 %v2089, 7
    %v2091 = vsub.s32 0, %v2090
    %v2092 = vrot.slane %v2088, %v2091
    %v2093 = vmul.f32 %v2085, %v2092
    %v2094 = vmul.f32 %v2087, %v2092
    %v2095 = vadd.f32 %v2093, 0.0
    %v2096 = vadd.f32 %v2094, 0.0
    %2097 = vrot.lane.b32.xlu0 %v2008, 64
    %v2098 = vpop.permute.xlu0 %2097
    %2099 = vrot.lane.b32.xlu0 %v2009, 64
    %v2100 = vpop.permute.xlu0 %2099
    %v2101 = vld [vmem:[#allocation8 + $0x13] sm:$0x1]
    %v2102 = vlaneseq
    %v2103 = vshrl.u32 %v2102, 7
    %v2104 = vsub.s32 0, %v2103
    %v2105 = vrot.slane %v2101, %v2104
    %v2106 = vmul.f32 %v2098, %v2105
    %v2107 = vmul.f32 %v2100, %v2105
    %v2108 = vadd.f32 %v2095, %v2106
    %v2109 = vadd.f32 %v2096, %v2107
    %2110 = vrot.lane.b32.xlu0 %v2008, 63
    %v2111 = vpop.permute.xlu0 %2110
    %2112 = vrot.lane.b32.xlu0 %v2009, 63
    %v2113 = vpop.permute.xlu0 %2112
    %v2114 = vld [vmem:[#allocation8 + $0x14] sm:$0x1]
    %v2115 = vlaneseq
    %v2116 = vshrl.u32 %v2115, 7
    %v2117 = vsub.s32 0, %v2116
    %v2118 = vrot.slane %v2114, %v2117
    %v2119 = vmul.f32 %v2111, %v2118
    %v2120 = vmul.f32 %v2113, %v2118
    %v2121 = vadd.f32 %v2108, %v2119
    %v2122 = vadd.f32 %v2109, %v2120
    %2123 = vrot.lane.b32.xlu0 %v2008, 33
    %v2124 = vpop.permute.xlu0 %2123
    %2125 = vrot.lane.b32.xlu0 %v2009, 33
    %v2126 = vpop.permute.xlu0 %2125
    %v2127 = vld [vmem:[#allocation8 + $0x1b] sm:$0x1]
    %v2128 = vlaneseq
    %v2129 = vshrl.u32 %v2128, 7
    %v2130 = vsub.s32 0, %v2129
    %v2131 = vrot.slane %v2127, %v2130
    %v2132 = vmul.f32 %v2124, %v2131
    %v2133 = vmul.f32 %v2126, %v2131
    %v2134 = vadd.f32 %v2132, 0.0
    %v2135 = vadd.f32 %v2133, 0.0
    %2136 = vrot.lane.b32.xlu0 %v2008, 32
    %v2137 = vpop.permute.xlu0 %2136
    %2138 = vrot.lane.b32.xlu0 %v2009, 32
    %v2139 = vpop.permute.xlu0 %2138
    %v2140 = vld [vmem:[#allocation8 + $0x1c] sm:$0x1]
    %v2141 = vlaneseq
    %v2142 = vshrl.u32 %v2141, 7
    %v2143 = vsub.s32 0, %v2142
    %v2144 = vrot.slane %v2140, %v2143
    %v2145 = vmul.f32 %v2137, %v2144
    %v2146 = vmul.f32 %v2139, %v2144
    %v2147 = vadd.f32 %v2134, %v2145
    %v2148 = vadd.f32 %v2135, %v2146
    %2149 = vrot.lane.b32.xlu0 %v2008, 31
    %v2150 = vpop.permute.xlu0 %2149
    %2151 = vrot.lane.b32.xlu0 %v2009, 31
    %v2152 = vpop.permute.xlu0 %2151
    %v2153 = vld [vmem:[#allocation8 + $0x1d] sm:$0x1]
    %v2154 = vlaneseq
    %v2155 = vshrl.u32 %v2154, 7
    %v2156 = vsub.s32 0, %v2155
    %v2157 = vrot.slane %v2153, %v2156
    %v2158 = vmul.f32 %v2150, %v2157
    %v2159 = vmul.f32 %v2152, %v2157
    %v2160 = vadd.f32 %v2147, %v2158
    %v2161 = vadd.f32 %v2148, %v2159
    %v2162 = vld [vmem:[#allocation2 + $0x1] sm:$0xff]
    %v2163 = vld [vmem:[#allocation2 + $0x9] sm:$0xff]
    %2164 = vrot.lane.b32.xlu0 %v2162, 1
    %v2165 = vpop.permute.xlu0 %2164
    %2166 = vrot.lane.b32.xlu0 %v2163, 1
    %v2167 = vpop.permute.xlu0 %2166
    %v2168 = vld [vmem:[#allocation8 + $0x3] sm:$0x1]
    %v2169 = vlaneseq
    %v2170 = vshrl.u32 %v2169, 7
    %v2171 = vsub.s32 0, %v2170
    %v2172 = vrot.slane %v2168, %v2171
    %v2173 = vmul.f32 %v2165, %v2172
    %v2174 = vmul.f32 %v2167, %v2172
    %v2175 = vadd.f32 %v2043, %v2173
    %v2176 = vadd.f32 %v2044, %v2174
    %v2177 = vld [vmem:[#allocation8 + $0x4] sm:$0x1]
    %v2178 = vlaneseq
    %v2179 = vshrl.u32 %v2178, 7
    %v2180 = vsub.s32 0, %v2179
    %v2181 = vrot.slane %v2177, %v2180
    %v2182 = vmul.f32 %v2162, %v2181
    %v2183 = vmul.f32 %v2163, %v2181
    %v2184 = vadd.f32 %v2175, %v2182
    %v2185 = vadd.f32 %v2176, %v2183
    %2186 = vrot.lane.b32.xlu0 %v2162, 127
    %v2187 = vpop.permute.xlu0 %2186
    %2188 = vrot.lane.b32.xlu0 %v2163, 127
    %v2189 = vpop.permute.xlu0 %2188
    %v2190 = vld [vmem:[#allocation8 + $0x5] sm:$0x1]
    %v2191 = vlaneseq
    %v2192 = vshrl.u32 %v2191, 7
    %v2193 = vsub.s32 0, %v2192
    %v2194 = vrot.slane %v2190, %v2193
    %v2195 = vmul.f32 %v2187, %v2194
    %v2196 = vmul.f32 %v2189, %v2194
    %v2197 = vadd.f32 %v2184, %v2195
    %v2198 = vadd.f32 %v2185, %v2196
    %2199 = vrot.lane.b32.xlu0 %v2162, 97
    %v2200 = vpop.permute.xlu0 %2199
    %2201 = vrot.lane.b32.xlu0 %v2163, 97
    %v2202 = vpop.permute.xlu0 %2201
    %v2203 = vld [vmem:[#allocation8 + $0xc] sm:$0x1]
    %v2204 = vlaneseq
    %v2205 = vshrl.u32 %v2204, 7
    %v2206 = vsub.s32 0, %v2205
    %v2207 = vrot.slane %v2203, %v2206
    %v2208 = vmul.f32 %v2200, %v2207
    %v2209 = vmul.f32 %v2202, %v2207
    %v2210 = vadd.f32 %v2082, %v2208
    %v2211 = vadd.f32 %v2083, %v2209
    %2212 = vrot.lane.b32.xlu0 %v2162, 96
    %v2213 = vpop.permute.xlu0 %2212
    %2214 = vrot.lane.b32.xlu0 %v2163, 96
    %v2215 = vpop.permute.xlu0 %2214
    %v2216 = vld [vmem:[#allocation8 + $0xd] sm:$0x1]
    %v2217 = vlaneseq
    %v2218 = vshrl.u32 %v2217, 7
    %v2219 = vsub.s32 0, %v2218
    %v2220 = vrot.slane %v2216, %v2219
    %v2221 = vmul.f32 %v2213, %v2220
    %v2222 = vmul.f32 %v2215, %v2220
    %v2223 = vadd.f32 %v2210, %v2221
    %v2224 = vadd.f32 %v2211, %v2222
    %2225 = vrot.lane.b32.xlu0 %v2162, 95
    %v2226 = vpop.permute.xlu0 %2225
    %2227 = vrot.lane.b32.xlu0 %v2163, 95
    %v2228 = vpop.permute.xlu0 %2227
    %v2229 = vld [vmem:[#allocation8 + $0xe] sm:$0x1]
    %v2230 = vlaneseq
    %v2231 = vshrl.u32 %v2230, 7
    %v2232 = vsub.s32 0, %v2231
    %v2233 = vrot.slane %v2229, %v2232
    %v2234 = vmul.f32 %v2226, %v2233
    %v2235 = vmul.f32 %v2228, %v2233
    %v2236 = vadd.f32 %v2223, %v2234
    %v2237 = vadd.f32 %v2224, %v2235
    %2238 = vrot.lane.b32.xlu0 %v2162, 65
    %v2239 = vpop.permute.xlu0 %2238
    %2240 = vrot.lane.b32.xlu0 %v2163, 65
    %v2241 = vpop.permute.xlu0 %2240
    %v2242 = vld [vmem:[#allocation8 + $0x15] sm:$0x1]
    %v2243 = vlaneseq
    %v2244 = vshrl.u32 %v2243, 7
    %v2245 = vsub.s32 0, %v2244
    %v2246 = vrot.slane %v2242, %v2245
    %v2247 = vmul.f32 %v2239, %v2246
    %v2248 = vmul.f32 %v2241, %v2246
    %v2249 = vadd.f32 %v2121, %v2247
    %v2250 = vadd.f32 %v2122, %v2248
    %2251 = vrot.lane.b32.xlu0 %v2162, 64
    %v2252 = vpop.permute.xlu0 %2251
    %2253 = vrot.lane.b32.xlu0 %v2163, 64
    %v2254 = vpop.permute.xlu0 %2253
    %v2255 = vld [vmem:[#allocation8 + $0x16] sm:$0x1]
    %v2256 = vlaneseq
    %v2257 = vshrl.u32 %v2256, 7
    %v2258 = vsub.s32 0, %v2257
    %v2259 = vrot.slane %v2255, %v2258
    %v2260 = vmul.f32 %v2252, %v2259
    %v2261 = vmul.f32 %v2254, %v2259
    %v2262 = vadd.f32 %v2249, %v2260
    %v2263 = vadd.f32 %v2250, %v2261
    %2264 = vrot.lane.b32.xlu0 %v2162, 63
    %v2265 = vpop.permute.xlu0 %2264
    %2266 = vrot.lane.b32.xlu0 %v2163, 63
    %v2267 = vpop.permute.xlu0 %2266
    %v2268 = vld [vmem:[#allocation8 + $0x17] sm:$0x1]
    %v2269 = vlaneseq
    %v2270 = vshrl.u32 %v2269, 7
    %v2271 = vsub.s32 0, %v2270
    %v2272 = vrot.slane %v2268, %v2271
    %v2273 = vmul.f32 %v2265, %v2272
    %v2274 = vmul.f32 %v2267, %v2272
    %v2275 = vadd.f32 %v2262, %v2273
    %v2276 = vadd.f32 %v2263, %v2274
    %2277 = vrot.lane.b32.xlu0 %v2162, 33
    %v2278 = vpop.permute.xlu0 %2277
    %2279 = vrot.lane.b32.xlu0 %v2163, 33
    %v2280 = vpop.permute.xlu0 %2279
    %v2281 = vld [vmem:[#allocation8 + $0x1e] sm:$0x1]
    %v2282 = vlaneseq
    %v2283 = vshrl.u32 %v2282, 7
    %v2284 = vsub.s32 0, %v2283
    %v2285 = vrot.slane %v2281, %v2284
    %v2286 = vmul.f32 %v2278, %v2285
    %v2287 = vmul.f32 %v2280, %v2285
    %v2288 = vadd.f32 %v2160, %v2286
    %v2289 = vadd.f32 %v2161, %v2287
    %2290 = vrot.lane.b32.xlu0 %v2162, 32
    %v2291 = vpop.permute.xlu0 %2290
    %2292 = vrot.lane.b32.xlu0 %v2163, 32
    %v2293 = vpop.permute.xlu0 %2292
    %v2294 = vld [vmem:[#allocation8 + $0x1f] sm:$0x1]
    %v2295 = vlaneseq
    %v2296 = vshrl.u32 %v2295, 7
    %v2297 = vsub.s32 0, %v2296
    %v2298 = vrot.slane %v2294, %v2297
    %v2299 = vmul.f32 %v2291, %v2298
    %v2300 = vmul.f32 %v2293, %v2298
    %v2301 = vadd.f32 %v2288, %v2299
    %v2302 = vadd.f32 %v2289, %v2300
    %2303 = vrot.lane.b32.xlu0 %v2162, 31
    %v2304 = vpop.permute.xlu0 %2303
    %2305 = vrot.lane.b32.xlu0 %v2163, 31
    %v2306 = vpop.permute.xlu0 %2305
    %v2307 = vld [vmem:[#allocation8 + $0x20] sm:$0x1]
    %v2308 = vlaneseq
    %v2309 = vshrl.u32 %v2308, 7
    %v2310 = vsub.s32 0, %v2309
    %v2311 = vrot.slane %v2307, %v2310
    %v2312 = vmul.f32 %v2304, %v2311
    %v2313 = vmul.f32 %v2306, %v2311
    %v2314 = vadd.f32 %v2301, %v2312
    %v2315 = vadd.f32 %v2302, %v2313
    %v2316 = vld [vmem:[#allocation2 + $0x2] sm:$0xff]
    %v2317 = vld [vmem:[#allocation2 + $0xa] sm:$0xff]
    %2318 = vrot.lane.b32.xlu0 %v2316, 1
    %v2319 = vpop.permute.xlu0 %2318
    %2320 = vrot.lane.b32.xlu0 %v2317, 1
    %v2321 = vpop.permute.xlu0 %2320
    %v2322 = vld [vmem:[#allocation8 + $0x6] sm:$0x1]
    %v2323 = vlaneseq
    %v2324 = vshrl.u32 %v2323, 7
    %v2325 = vsub.s32 0, %v2324
    %v2326 = vrot.slane %v2322, %v2325
    %v2327 = vmul.f32 %v2319, %v2326
    %v2328 = vmul.f32 %v2321, %v2326
    %v2329 = vadd.f32 %v2197, %v2327
    %v2330 = vadd.f32 %v2198, %v2328
    %v2331 = vld [vmem:[#allocation8 + $0x7] sm:$0x1]
    %v2332 = vlaneseq
    %v2333 = vshrl.u32 %v2332, 7
    %v2334 = vsub.s32 0, %v2333
    %v2335 = vrot.slane %v2331, %v2334
    %v2336 = vmul.f32 %v2316, %v2335
    %v2337 = vmul.f32 %v2317, %v2335
    %v2338 = vadd.f32 %v2329, %v2336
    %v2339 = vadd.f32 %v2330, %v2337
    %2340 = vrot.lane.b32.xlu0 %v2316, 127
    %v2341 = vpop.permute.xlu0 %2340
    %2342 = vrot.lane.b32.xlu0 %v2317, 127
    %v2343 = vpop.permute.xlu0 %2342
    %v2344 = vld [vmem:[#allocation8 + $0x8] sm:$0x1]
    %v2345 = vlaneseq
    %v2346 = vshrl.u32 %v2345, 7
    %v2347 = vsub.s32 0, %v2346
    %v2348 = vrot.slane %v2344, %v2347
    %v2349 = vmul.f32 %v2341, %v2348
    %v2350 = vmul.f32 %v2343, %v2348
    %v2351 = vadd.f32 %v2338, %v2349
    %v2352 = vadd.f32 %v2339, %v2350
    %2353 = vrot.lane.b32.xlu0 %v2316, 97
    %v2354 = vpop.permute.xlu0 %2353
    %2355 = vrot.lane.b32.xlu0 %v2317, 97
    %v2356 = vpop.permute.xlu0 %2355
    %v2357 = vld [vmem:[#allocation8 + $0xf] sm:$0x1]
    %v2358 = vlaneseq
    %v2359 = vshrl.u32 %v2358, 7
    %v2360 = vsub.s32 0, %v2359
    %v2361 = vrot.slane %v2357, %v2360
    %v2362 = vmul.f32 %v2354, %v2361
    %v2363 = vmul.f32 %v2356, %v2361
    %v2364 = vadd.f32 %v2236, %v2362
    %v2365 = vadd.f32 %v2237, %v2363
    %2366 = vrot.lane.b32.xlu0 %v2316, 96
    %v2367 = vpop.permute.xlu0 %2366
    %2368 = vrot.lane.b32.xlu0 %v2317, 96
    %v2369 = vpop.permute.xlu0 %2368
    %v2370 = vld [vmem:[#allocation8 + $0x10] sm:$0x1]
    %v2371 = vlaneseq
    %v2372 = vshrl.u32 %v2371, 7
    %v2373 = vsub.s32 0, %v2372
    %v2374 = vrot.slane %v2370, %v2373
    %v2375 = vmul.f32 %v2367, %v2374
    %v2376 = vmul.f32 %v2369, %v2374
    %v2377 = vadd.f32 %v2364, %v2375
    %v2378 = vadd.f32 %v2365, %v2376
    %2379 = vrot.lane.b32.xlu0 %v2316, 95
    %v2380 = vpop.permute.xlu0 %2379
    %2381 = vrot.lane.b32.xlu0 %v2317, 95
    %v2382 = vpop.permute.xlu0 %2381
    %v2383 = vld [vmem:[#allocation8 + $0x11] sm:$0x1]
    %v2384 = vlaneseq
    %v2385 = vshrl.u32 %v2384, 7
    %v2386 = vsub.s32 0, %v2385
    %v2387 = vrot.slane %v2383, %v2386
    %v2388 = vmul.f32 %v2380, %v2387
    %v2389 = vmul.f32 %v2382, %v2387
    %v2390 = vadd.f32 %v2377, %v2388
    %v2391 = vadd.f32 %v2378, %v2389
    %2392 = vrot.lane.b32.xlu0 %v2316, 65
    %v2393 = vpop.permute.xlu0 %2392
    %2394 = vrot.lane.b32.xlu0 %v2317, 65
    %v2395 = vpop.permute.xlu0 %2394
    %v2396 = vld [vmem:[#allocation8 + $0x18] sm:$0x1]
    %v2397 = vlaneseq
    %v2398 = vshrl.u32 %v2397, 7
    %v2399 = vsub.s32 0, %v2398
    %v2400 = vrot.slane %v2396, %v2399
    %v2401 = vmul.f32 %v2393, %v2400
    %v2402 = vmul.f32 %v2395, %v2400
    %v2403 = vadd.f32 %v2275, %v2401
    %v2404 = vadd.f32 %v2276, %v2402
    %2405 = vrot.lane.b32.xlu0 %v2316, 64
    %v2406 = vpop.permute.xlu0 %2405
    %2407 = vrot.lane.b32.xlu0 %v2317, 64
    %v2408 = vpop.permute.xlu0 %2407
    %v2409 = vld [vmem:[#allocation8 + $0x19] sm:$0x1]
    %v2410 = vlaneseq
    %v2411 = vshrl.u32 %v2410, 7
    %v2412 = vsub.s32 0, %v2411
    %v2413 = vrot.slane %v2409, %v2412
    %v2414 = vmul.f32 %v2406, %v2413
    %v2415 = vmul.f32 %v2408, %v2413
    %v2416 = vadd.f32 %v2403, %v2414
    %v2417 = vadd.f32 %v2404, %v2415
    %2418 = vrot.lane.b32.xlu0 %v2316, 63
    %v2419 = vpop.permute.xlu0 %2418
    %2420 = vrot.lane.b32.xlu0 %v2317, 63
    %v2421 = vpop.permute.xlu0 %2420
    %v2422 = vld [vmem:[#allocation8 + $0x1a] sm:$0x1]
    %v2423 = vlaneseq
    %v2424 = vshrl.u32 %v2423, 7
    %v2425 = vsub.s32 0, %v2424
    %v2426 = vrot.slane %v2422, %v2425
    %v2427 = vmul.f32 %v2419, %v2426
    %v2428 = vmul.f32 %v2421, %v2426
    %v2429 = vadd.f32 %v2416, %v2427
    %v2430 = vadd.f32 %v2417, %v2428
    %2431 = vrot.lane.b32.xlu0 %v2316, 33
    %v2432 = vpop.permute.xlu0 %2431
    %2433 = vrot.lane.b32.xlu0 %v2317, 33
    %v2434 = vpop.permute.xlu0 %2433
    %v2435 = vld [vmem:[#allocation8 + $0x21] sm:$0x1]
    %v2436 = vlaneseq
    %v2437 = vshrl.u32 %v2436, 7
    %v2438 = vsub.s32 0, %v2437
    %v2439 = vrot.slane %v2435, %v2438
    %v2440 = vmul.f32 %v2432, %v2439
    %v2441 = vmul.f32 %v2434, %v2439
    %v2442 = vadd.f32 %v2314, %v2440
    %v2443 = vadd.f32 %v2315, %v2441
    %2444 = vrot.lane.b32.xlu0 %v2316, 32
    %v2445 = vpop.permute.xlu0 %2444
    %2446 = vrot.lane.b32.xlu0 %v2317, 32
    %v2447 = vpop.permute.xlu0 %2446
    %v2448 = vld [vmem:[#allocation8 + $0x22] sm:$0x1]
    %v2449 = vlaneseq
    %v2450 = vshrl.u32 %v2449, 7
    %v2451 = vsub.s32 0, %v2450
    %v2452 = vrot.slane %v2448, %v2451
    %v2453 = vmul.f32 %v2445, %v2452
    %v2454 = vmul.f32 %v2447, %v2452
    %v2455 = vadd.f32 %v2442, %v2453
    %v2456 = vadd.f32 %v2443, %v2454
    %2457 = vrot.lane.b32.xlu0 %v2316, 31
    %v2458 = vpop.permute.xlu0 %2457
    %2459 = vrot.lane.b32.xlu0 %v2317, 31
    %v2460 = vpop.permute.xlu0 %2459
    %v2461 = vld [vmem:[#allocation8 + $0x23] sm:$0x1]
    %v2462 = vlaneseq
    %v2463 = vshrl.u32 %v2462, 7
    %v2464 = vsub.s32 0, %v2463
    %v2465 = vrot.slane %v2461, %v2464
    %v2466 = vmul.f32 %v2458, %v2465
    %v2467 = vmul.f32 %v2460, %v2465
    %v2468 = vadd.f32 %v2455, %v2466
    %v2469 = vadd.f32 %v2456, %v2467
    %v2470 = vld [vmem:[%s4] sm:$0x1]
    %v2472 = vlaneseq
    %v2473 = vshrl.u32 %v2472, 7
    %v2474 = vsub.s32 0, %v2473
    %v2475 = vrot.slane %v2470, %v2474
    %v2477 = vadd.f32 %v2475, %v2351
    %v2478 = vadd.f32 %v2475, %v2352
    %v2479 = vadd.f32 %v2477, %v2390
    %v2480 = vadd.f32 %v2478, %v2391
    %v2481 = vadd.f32 %v2479, %v2429
    %v2482 = vadd.f32 %v2480, %v2430
    %v2483 = vadd.f32 %v2481, %v2468
    %v2484 = vadd.f32 %v2482, %v2469
    %v2485 = vld [vmem:[#allocation9] sm:$0xff]
    %v2486 = vld [vmem:[#allocation9 + $0x8] sm:$0xff]
    %v2487 = vld [vmem:[#allocation9 + $0x10] sm:$0xff]
    %v2488 = vld [vmem:[#allocation9 + $0x18] sm:$0xff]
    %v2489 = vld [vmem:[#allocation9 + $0x20] sm:$0xff]
    %v2490 = vld [vmem:[#allocation9 + $0x28] sm:$0xff]
    %v2491 = vld [vmem:[#allocation9 + $0x30] sm:$0xff]
    %v2492 = vld [vmem:[#allocation9 + $0x38] sm:$0xff]
    %v2493 = vld [vmem:[#allocation9 + $0x40] sm:$0xff]
    %v2494 = vld [vmem:[#allocation9 + $0x48] sm:$0xff]
    %v2495 = vld [vmem:[#allocation9 + $0x50] sm:$0xff]
    %v2496 = vld [vmem:[#allocation9 + $0x58] sm:$0xff]
    %v2497 = vld [vmem:[#allocation9 + $0x60] sm:$0xff]
    %v2498 = vld [vmem:[#allocation9 + $0x68] sm:$0xff]
    %v2499 = vld [vmem:[#allocation9 + $0x70] sm:$0xff]
    %v2500 = vld [vmem:[#allocation9 + $0x78] sm:$0xff]
    %2501 = vmatprep.subr.mxu0 0.0
    %v2502 = vand.u32 %v2485, 4294901760
    %2503 = vmatpush1.msra.mxu0 %v2502
    %2504 = vmatprep.subr.mxu0 0.0
    %v2505 = vand.u32 %v2486, 4294901760
    %2506 = vmatpush1.msra.mxu0 %v2505
    %2507 = vmatprep.subr.mxu0 0.0
    %v2508 = vand.u32 %v2487, 4294901760
    %2509 = vmatpush1.msra.mxu0 %v2508
    %2510 = vmatprep.subr.mxu0 0.0
    %v2511 = vand.u32 %v2488, 4294901760
    %2512 = vmatpush1.msra.mxu0 %v2511
    %2513 = vmatprep.subr.mxu0 0.0
    %v2514 = vand.u32 %v2489, 4294901760
    %2515 = vmatpush1.msra.mxu0 %v2514
    %2516 = vmatprep.subr.mxu0 0.0
    %v2517 = vand.u32 %v2490, 4294901760
    %2518 = vmatpush1.msra.mxu0 %v2517
    %2519 = vmatprep.subr.mxu0 0.0
    %v2520 = vand.u32 %v2491, 4294901760
    %2521 = vmatpush1.msra.mxu0 %v2520
    %2522 = vmatprep.subr.mxu0 0.0
    %v2523 = vand.u32 %v2492, 4294901760
    %2524 = vmatpush1.msra.mxu0 %v2523
    %2525 = vmatprep.subr.mxu0 0.0
    %v2526 = vand.u32 %v2493, 4294901760
    %2527 = vmatpush1.msra.mxu0 %v2526
    %2528 = vmatprep.subr.mxu0 0.0
    %v2529 = vand.u32 %v2494, 4294901760
    %2530 = vmatpush1.msra.mxu0 %v2529
    %2531 = vmatprep.subr.mxu0 0.0
    %v2532 = vand.u32 %v2495, 4294901760
    %2533 = vmatpush1.msra.mxu0 %v2532
    %2534 = vmatprep.subr.mxu0 0.0
    %v2535 = vand.u32 %v2496, 4294901760
    %2536 = vmatpush1.msra.mxu0 %v2535
    %2537 = vmatprep.subr.mxu0 0.0
    %v2538 = vand.u32 %v2497, 4294901760
    %2539 = vmatpush1.msra.mxu0 %v2538
    %2540 = vmatprep.subr.mxu0 0.0
    %v2541 = vand.u32 %v2498, 4294901760
    %2542 = vmatpush1.msra.mxu0 %v2541
    %2543 = vmatprep.subr.mxu0 0.0
    %v2544 = vand.u32 %v2499, 4294901760
    %2545 = vmatpush1.msra.mxu0 %v2544
    %2546 = vmatprep.subr.mxu0 0.0
    %v2547 = vand.u32 %v2500, 4294901760
    %2548 = vmatpush1.msra.mxu0 %v2547
    %2549 = vmatprep.subr.mxu0 0.0
    %2550 = vmatpush1.msra.mxu0 0.0
    %2551 = vmatprep.subr.mxu0 0.0
    %2552 = vmatpush1.msra.mxu0 0.0
    %2553 = vmatprep.subr.mxu0 0.0
    %2554 = vmatpush1.msra.mxu0 0.0
    %2555 = vmatprep.subr.mxu0 0.0
    %2556 = vmatpush1.msra.mxu0 0.0
    %2557 = vmatprep.subr.mxu0 0.0
    %2558 = vmatpush1.msra.mxu0 0.0
    %2559 = vmatprep.subr.mxu0 0.0
    %2560 = vmatpush1.msra.mxu0 0.0
    %2561 = vmatprep.subr.mxu0 0.0
    %2562 = vmatpush1.msra.mxu0 0.0
    %2563 = vmatprep.subr.mxu0 0.0
    %2564 = vmatpush1.msra.mxu0 0.0
    %2565 = vmatprep.subr.mxu0 0.0
    %2566 = vmatpush1.msra.mxu0 0.0
    %2567 = vmatprep.subr.mxu0 0.0
    %2568 = vmatpush1.msra.mxu0 0.0
    %2569 = vmatprep.subr.mxu0 0.0
    %2570 = vmatpush1.msra.mxu0 0.0
    %2571 = vmatprep.subr.mxu0 0.0
    %2572 = vmatpush1.msra.mxu0 0.0
    %2573 = vmatprep.subr.mxu0 0.0
    %2574 = vmatpush1.msra.mxu0 0.0
    %2575 = vmatprep.subr.mxu0 0.0
    %2576 = vmatpush1.msra.mxu0 0.0
    %2577 = vmatprep.subr.mxu0 0.0
    %2578 = vmatpush1.msra.mxu0 0.0
    %2579 = vmatprep.subr.mxu0 0.0
    %2580 = vmatpush1.msra.mxu0 0.0
    %2581 = vmatprep.mubr.f32.mxu0 0.0
    %v2582 = vand.u32 %v2483, 4294901760
    %v2583 = vsub.f32 %v2483, %v2582
    %v2584 = vand.u32 %v2583, 4294901760
    %v2585 = vsub.f32 %v2583, %v2584
    %v2586 = vand.u32 %v2585, 4294901760
    %2587 = vmatmul.mubr.f32.gmra.mrb[0].mxu0 %v2586
    %v2588 = vpop.f32.mrb[0].mxu0
    %v2589 = vadd.f32 0.0, %v2588
    %v2590 = vpop.f32.mrb[0].mxu0
    %2591 = vmatprep.mubr.f32.mxu0 0.0
    %v2592 = vand.u32 %v2484, 4294901760
    %v2593 = vsub.f32 %v2484, %v2592
    %v2594 = vand.u32 %v2593, 4294901760
    %v2595 = vsub.f32 %v2593, %v2594
    %v2596 = vand.u32 %v2595, 4294901760
    %2597 = vmatmul.mubr.f32.gmra.mrb[0].mxu0 %v2596
    %v2598 = vpop.f32.mrb[0].mxu0
    %v2599 = vadd.f32 0.0, %v2598
    %v2600 = vpop.f32.mrb[0].mxu0
    %2601 = vdwg.mxu0
    %2602 = vmatprep.subr.mxu0 0.0
    %v2603 = vand.u32 %v2485, 4294901760
    %v2604 = vsub.f32 %v2485, %v2603
    %v2605 = vand.u32 %v2604, 4294901760
    %v2606 = vsub.f32 %v2604, %v2605
    %v2607 = vand.u32 %v2606, 4294901760
    %2608 = vmatpush1.msra.mxu0 %v2607
    %2609 = vmatprep.subr.mxu0 0.0
    %v2610 = vand.u32 %v2486, 4294901760
    %v2611 = vsub.f32 %v2486, %v2610
    %v2612 = vand.u32 %v2611, 4294901760
    %v2613 = vsub.f32 %v2611, %v2612
    %v2614 = vand.u32 %v2613, 4294901760
    %2615 = vmatpush1.msra.mxu0 %v2614
    %2616 = vmatprep.subr.mxu0 0.0
    %v2617 = vand.u32 %v2487, 4294901760
    %v2618 = vsub.f32 %v2487, %v2617
    %v2619 = vand.u32 %v2618, 4294901760
    %v2620 = vsub.f32 %v2618, %v2619
    %v2621 = vand.u32 %v2620, 4294901760
    %2622 = vmatpush1.msra.mxu0 %v2621
    %2623 = vmatprep.subr.mxu0 0.0
    %v2624 = vand.u32 %v2488, 4294901760
    %v2625 = vsub.f32 %v2488, %v2624
    %v2626 = vand.u32 %v2625, 4294901760
    %v2627 = vsub.f32 %v2625, %v2626
    %v2628 = vand.u32 %v2627, 4294901760
    %2629 = vmatpush1.msra.mxu0 %v2628
    %2630 = vmatprep.subr.mxu0 0.0
    %v2631 = vand.u32 %v2489, 4294901760
    %v2632 = vsub.f32 %v2489, %v2631
    %v2633 = vand.u32 %v2632, 4294901760
    %v2634 = vsub.f32 %v2632, %v2633
    %v2635 = vand.u32 %v2634, 4294901760
    %2636 = vmatpush1.msra.mxu0 %v2635
    %2637 = vmatprep.subr.mxu0 0.0
    %v2638 = vand.u32 %v2490, 4294901760
    %v2639 = vsub.f32 %v2490, %v2638
    %v2640 = vand.u32 %v2639, 4294901760
    %v2641 = vsub.f32 %v2639, %v2640
    %v2642 = vand.u32 %v2641, 4294901760
    %2643 = vmatpush1.msra.mxu0 %v2642
    %2644 = vmatprep.subr.mxu0 0.0
    %v2645 = vand.u32 %v2491, 4294901760
    %v2646 = vsub.f32 %v2491, %v2645
    %v2647 = vand.u32 %v2646, 4294901760
    %v2648 = vsub.f32 %v2646, %v2647
    %v2649 = vand.u32 %v2648, 4294901760
    %2650 = vmatpush1.msra.mxu0 %v2649
    %2651 = vmatprep.subr.mxu0 0.0
    %v2652 = vand.u32 %v2492, 4294901760
    %v2653 = vsub.f32 %v2492, %v2652
    %v2654 = vand.u32 %v2653, 4294901760
    %v2655 = vsub.f32 %v2653, %v2654
    %v2656 = vand.u32 %v2655, 4294901760
    %2657 = vmatpush1.msra.mxu0 %v2656
    %2658 = vmatprep.subr.mxu0 0.0
    %v2659 = vand.u32 %v2493, 4294901760
    %v2660 = vsub.f32 %v2493, %v2659
    %v2661 = vand.u32 %v2660, 4294901760
    %v2662 = vsub.f32 %v2660, %v2661
    %v2663 = vand.u32 %v2662, 4294901760
    %2664 = vmatpush1.msra.mxu0 %v2663
    %2665 = vmatprep.subr.mxu0 0.0
    %v2666 = vand.u32 %v2494, 4294901760
    %v2667 = vsub.f32 %v2494, %v2666
    %v2668 = vand.u32 %v2667, 4294901760
    %v2669 = vsub.f32 %v2667, %v2668
    %v2670 = vand.u32 %v2669, 4294901760
    %2671 = vmatpush1.msra.mxu0 %v2670
    %2672 = vmatprep.subr.mxu0 0.0
    %v2673 = vand.u32 %v2495, 4294901760
    %v2674 = vsub.f32 %v2495, %v2673
    %v2675 = vand.u32 %v2674, 4294901760
    %v2676 = vsub.f32 %v2674, %v2675
    %v2677 = vand.u32 %v2676, 4294901760
    %2678 = vmatpush1.msra.mxu0 %v2677
    %2679 = vmatprep.subr.mxu0 0.0
    %v2680 = vand.u32 %v2496, 4294901760
    %v2681 = vsub.f32 %v2496, %v2680
    %v2682 = vand.u32 %v2681, 4294901760
    %v2683 = vsub.f32 %v2681, %v2682
    %v2684 = vand.u32 %v2683, 4294901760
    %2685 = vmatpush1.msra.mxu0 %v2684
    %2686 = vmatprep.subr.mxu0 0.0
    %v2687 = vand.u32 %v2497, 4294901760
    %v2688 = vsub.f32 %v2497, %v2687
    %v2689 = vand.u32 %v2688, 4294901760
    %v2690 = vsub.f32 %v2688, %v2689
    %v2691 = vand.u32 %v2690, 4294901760
    %2692 = vmatpush1.msra.mxu0 %v2691
    %2693 = vmatprep.subr.mxu0 0.0
    %v2694 = vand.u32 %v2498, 4294901760
    %v2695 = vsub.f32 %v2498, %v2694
    %v2696 = vand.u32 %v2695, 4294901760
    %v2697 = vsub.f32 %v2695, %v2696
    %v2698 = vand.u32 %v2697, 4294901760
    %2699 = vmatpush1.msra.mxu0 %v2698
    %2700 = vmatprep.subr.mxu0 0.0
    %v2701 = vand.u32 %v2499, 4294901760
    %v2702 = vsub.f32 %v2499, %v2701
    %v2703 = vand.u32 %v2702, 4294901760
    %v2704 = vsub.f32 %v2702, %v2703
    %v2705 = vand.u32 %v2704, 4294901760
    %2706 = vmatpush1.msra.mxu0 %v2705
    %2707 = vmatprep.subr.mxu0 0.0
    %v2708 = vand.u32 %v2500, 4294901760
    %v2709 = vsub.f32 %v2500, %v2708
    %v2710 = vand.u32 %v2709, 4294901760
    %v2711 = vsub.f32 %v2709, %v2710
    %v2712 = vand.u32 %v2711, 4294901760
    %2713 = vmatpush1.msra.mxu0 %v2712
    %2714 = vmatprep.subr.mxu0 0.0
    %2715 = vmatpush1.msra.mxu0 0.0
    %2716 = vmatprep.subr.mxu0 0.0
    %2717 = vmatpush1.msra.mxu0 0.0
    %2718 = vmatprep.subr.mxu0 0.0
    %2719 = vmatpush1.msra.mxu0 0.0
    %2720 = vmatprep.subr.mxu0 0.0
    %2721 = vmatpush1.msra.mxu0 0.0
    %2722 = vmatprep.subr.mxu0 0.0
    %2723 = vmatpush1.msra.mxu0 0.0
    %2724 = vmatprep.subr.mxu0 0.0
    %2725 = vmatpush1.msra.mxu0 0.0
    %2726 = vmatprep.subr.mxu0 0.0
    %2727 = vmatpush1.msra.mxu0 0.0
    %2728 = vmatprep.subr.mxu0 0.0
    %2729 = vmatpush1.msra.mxu0 0.0
    %2730 = vmatprep.subr.mxu0 0.0
    %2731 = vmatpush1.msra.mxu0 0.0
    %2732 = vmatprep.subr.mxu0 0.0
    %2733 = vmatpush1.msra.mxu0 0.0
    %2734 = vmatprep.subr.mxu0 0.0
    %2735 = vmatpush1.msra.mxu0 0.0
    %2736 = vmatprep.subr.mxu0 0.0
    %2737 = vmatpush1.msra.mxu0 0.0
    %2738 = vmatprep.subr.mxu0 0.0
    %2739 = vmatpush1.msra.mxu0 0.0
    %2740 = vmatprep.subr.mxu0 0.0
    %2741 = vmatpush1.msra.mxu0 0.0
    %2742 = vmatprep.subr.mxu0 0.0
    %2743 = vmatpush1.msra.mxu0 0.0
    %2744 = vmatprep.subr.mxu0 0.0
    %2745 = vmatpush1.msra.mxu0 0.0
    %2746 = vmatprep.mubr.f32.mxu0 0.0
    %v2747 = vand.u32 %v2483, 4294901760
    %2748 = vmatmul.mubr.f32.gmra.mrb[0].mxu0 %v2747
    %v2749 = vpop.f32.mrb[0].mxu0
    %v2750 = vadd.f32 %v2589, %v2749
    %v2751 = vpop.f32.mrb[0].mxu0
    %2752 = vmatprep.mubr.f32.mxu0 0.0
    %v2753 = vand.u32 %v2484, 4294901760
    %2754 = vmatmul.mubr.f32.gmra.mrb[0].mxu0 %v2753
    %v2755 = vpop.f32.mrb[0].mxu0
    %v2756 = vadd.f32 %v2599, %v2755
    %v2757 = vpop.f32.mrb[0].mxu0
    %2758 = vdwg.mxu0
    %2759 = vmatprep.subr.mxu0 0.0
    %v2760 = vand.u32 %v2485, 4294901760
    %v2761 = vsub.f32 %v2485, %v2760
    %2762 = vmatpush1.msra.mxu0 %v2761
    %2763 = vmatprep.subr.mxu0 0.0
    %v2764 = vand.u32 %v2486, 4294901760
    %v2765 = vsub.f32 %v2486, %v2764
    %2766 = vmatpush1.msra.mxu0 %v2765
    %2767 = vmatprep.subr.mxu0 0.0
    %v2768 = vand.u32 %v2487, 4294901760
    %v2769 = vsub.f32 %v2487, %v2768
    %2770 = vmatpush1.msra.mxu0 %v2769
    %2771 = vmatprep.subr.mxu0 0.0
    %v2772 = vand.u32 %v2488, 4294901760
    %v2773 = vsub.f32 %v2488, %v2772
    %2774 = vmatpush1.msra.mxu0 %v2773
    %2775 = vmatprep.subr.mxu0 0.0
    %v2776 = vand.u32 %v2489, 4294901760
    %v2777 = vsub.f32 %v2489, %v2776
    %2778 = vmatpush1.msra.mxu0 %v2777
    %2779 = vmatprep.subr.mxu0 0.0
    %v2780 = vand.u32 %v2490, 4294901760
    %v2781 = vsub.f32 %v2490, %v2780
    %2782 = vmatpush1.msra.mxu0 %v2781
    %2783 = vmatprep.subr.mxu0 0.0
    %v2784 = vand.u32 %v2491, 4294901760
    %v2785 = vsub.f32 %v2491, %v2784
    %2786 = vmatpush1.msra.mxu0 %v2785
    %2787 = vmatprep.subr.mxu0 0.0
    %v2788 = vand.u32 %v2492, 4294901760
    %v2789 = vsub.f32 %v2492, %v2788
    %2790 = vmatpush1.msra.mxu0 %v2789
    %2791 = vmatprep.subr.mxu0 0.0
    %v2792 = vand.u32 %v2493, 4294901760
    %v2793 = vsub.f32 %v2493, %v2792
    %2794 = vmatpush1.msra.mxu0 %v2793
    %2795 = vmatprep.subr.mxu0 0.0
    %v2796 = vand.u32 %v2494, 4294901760
    %v2797 = vsub.f32 %v2494, %v2796
    %2798 = vmatpush1.msra.mxu0 %v2797
    %2799 = vmatprep.subr.mxu0 0.0
    %v2800 = vand.u32 %v2495, 4294901760
    %v2801 = vsub.f32 %v2495, %v2800
    %2802 = vmatpush1.msra.mxu0 %v2801
    %2803 = vmatprep.subr.mxu0 0.0
    %v2804 = vand.u32 %v2496, 4294901760
    %v2805 = vsub.f32 %v2496, %v2804
    %2806 = vmatpush1.msra.mxu0 %v2805
    %2807 = vmatprep.subr.mxu0 0.0
    %v2808 = vand.u32 %v2497, 4294901760
    %v2809 = vsub.f32 %v2497, %v2808
    %2810 = vmatpush1.msra.mxu0 %v2809
    %2811 = vmatprep.subr.mxu0 0.0
    %v2812 = vand.u32 %v2498, 4294901760
    %v2813 = vsub.f32 %v2498, %v2812
    %2814 = vmatpush1.msra.mxu0 %v2813
    %2815 = vmatprep.subr.mxu0 0.0
    %v2816 = vand.u32 %v2499, 4294901760
    %v2817 = vsub.f32 %v2499, %v2816
    %2818 = vmatpush1.msra.mxu0 %v2817
    %2819 = vmatprep.subr.mxu0 0.0
    %v2820 = vand.u32 %v2500, 4294901760
    %v2821 = vsub.f32 %v2500, %v2820
    %2822 = vmatpush1.msra.mxu0 %v2821
    %2823 = vmatprep.subr.mxu0 0.0
    %2824 = vmatpush1.msra.mxu0 0.0
    %2825 = vmatprep.subr.mxu0 0.0
    %2826 = vmatpush1.msra.mxu0 0.0
    %2827 = vmatprep.subr.mxu0 0.0
    %2828 = vmatpush1.msra.mxu0 0.0
    %2829 = vmatprep.subr.mxu0 0.0
    %2830 = vmatpush1.msra.mxu0 0.0
    %2831 = vmatprep.subr.mxu0 0.0
    %2832 = vmatpush1.msra.mxu0 0.0
    %2833 = vmatprep.subr.mxu0 0.0
    %2834 = vmatpush1.msra.mxu0 0.0
    %2835 = vmatprep.subr.mxu0 0.0
    %2836 = vmatpush1.msra.mxu0 0.0
    %2837 = vmatprep.subr.mxu0 0.0
    %2838 = vmatpush1.msra.mxu0 0.0
    %2839 = vmatprep.subr.mxu0 0.0
    %2840 = vmatpush1.msra.mxu0 0.0
    %2841 = vmatprep.subr.mxu0 0.0
    %2842 = vmatpush1.msra.mxu0 0.0
    %2843 = vmatprep.subr.mxu0 0.0
    %2844 = vmatpush1.msra.mxu0 0.0
    %2845 = vmatprep.subr.mxu0 0.0
    %2846 = vmatpush1.msra.mxu0 0.0
    %2847 = vmatprep.subr.mxu0 0.0
    %2848 = vmatpush1.msra.mxu0 0.0
    %2849 = vmatprep.subr.mxu0 0.0
    %2850 = vmatpush1.msra.mxu0 0.0
    %2851 = vmatprep.subr.mxu0 0.0
    %2852 = vmatpush1.msra.mxu0 0.0
    %2853 = vmatprep.subr.mxu0 0.0
    %2854 = vmatpush1.msra.mxu0 0.0
    %2855 = vmatprep.mubr.f32.mxu0 0.0
    %v2856 = vand.u32 %v2483, 4294901760
    %v2857 = vsub.f32 %v2483, %v2856
    %2858 = vmatmul.mubr.f32.gmra.mrb[0].mxu0 %v2857
    %v2859 = vpop.f32.mrb[0].mxu0
    %v2860 = vadd.f32 %v2750, %v2859
    %v2861 = vpop.f32.mrb[0].mxu0
    %2862 = vmatprep.mubr.f32.mxu0 0.0
    %v2863 = vand.u32 %v2484, 4294901760
    %v2864 = vsub.f32 %v2484, %v2863
    %2865 = vmatmul.mubr.f32.gmra.mrb[0].mxu0 %v2864
    %v2866 = vpop.f32.mrb[0].mxu0
    %v2867 = vadd.f32 %v2756, %v2866
    %v2868 = vpop.f32.mrb[0].mxu0
    %2869 = vdwg.mxu0
    %2870 = vmatprep.subr.mxu0 0.0
    %v2871 = vand.u32 %v2485, 4294901760
    %2872 = vmatpush1.msra.mxu0 %v2871
    %2873 = vmatprep.subr.mxu0 0.0
    %v2874 = vand.u32 %v2486, 4294901760
    %2875 = vmatpush1.msra.mxu0 %v2874
    %2876 = vmatprep.subr.mxu0 0.0
    %v2877 = vand.u32 %v2487, 4294901760
    %2878 = vmatpush1.msra.mxu0 %v2877
    %2879 = vmatprep.subr.mxu0 0.0
    %v2880 = vand.u32 %v2488, 4294901760
    %2881 = vmatpush1.msra.mxu0 %v2880
    %2882 = vmatprep.subr.mxu0 0.0
    %v2883 = vand.u32 %v2489, 4294901760
    %2884 = vmatpush1.msra.mxu0 %v2883
    %2885 = vmatprep.subr.mxu0 0.0
    %v2886 = vand.u32 %v2490, 4294901760
    %2887 = vmatpush1.msra.mxu0 %v2886
    %2888 = vmatprep.subr.mxu0 0.0
    %v2889 = vand.u32 %v2491, 4294901760
    %2890 = vmatpush1.msra.mxu0 %v2889
    %2891 = vmatprep.subr.mxu0 0.0
    %v2892 = vand.u32 %v2492, 4294901760
    %2893 = vmatpush1.msra.mxu0 %v2892
    %2894 = vmatprep.subr.mxu0 0.0
    %v2895 = vand.u32 %v2493, 4294901760
    %2896 = vmatpush1.msra.mxu0 %v2895
    %2897 = vmatprep.subr.mxu0 0.0
    %v2898 = vand.u32 %v2494, 4294901760
    %2899 = vmatpush1.msra.mxu0 %v2898
    %2900 = vmatprep.subr.mxu0 0.0
    %v2901 = vand.u32 %v2495, 4294901760
    %2902 = vmatpush1.msra.mxu0 %v2901
    %2903 = vmatprep.subr.mxu0 0.0
    %v2904 = vand.u32 %v2496, 4294901760
    %2905 = vmatpush1.msra.mxu0 %v2904
    %2906 = vmatprep.subr.mxu0 0.0
    %v2907 = vand.u32 %v2497, 4294901760
    %2908 = vmatpush1.msra.mxu0 %v2907
    %2909 = vmatprep.subr.mxu0 0.0
    %v2910 = vand.u32 %v2498, 4294901760
    %2911 = vmatpush1.msra.mxu0 %v2910
    %2912 = vmatprep.subr.mxu0 0.0
    %v2913 = vand.u32 %v2499, 4294901760
    %2914 = vmatpush1.msra.mxu0 %v2913
    %2915 = vmatprep.subr.mxu0 0.0
    %v2916 = vand.u32 %v2500, 4294901760
    %2917 = vmatpush1.msra.mxu0 %v2916
    %2918 = vmatprep.subr.mxu0 0.0
    %2919 = vmatpush1.msra.mxu0 0.0
    %2920 = vmatprep.subr.mxu0 0.0
    %2921 = vmatpush1.msra.mxu0 0.0
    %2922 = vmatprep.subr.mxu0 0.0
    %2923 = vmatpush1.msra.mxu0 0.0
    %2924 = vmatprep.subr.mxu0 0.0
    %2925 = vmatpush1.msra.mxu0 0.0
    %2926 = vmatprep.subr.mxu0 0.0
    %2927 = vmatpush1.msra.mxu0 0.0
    %2928 = vmatprep.subr.mxu0 0.0
    %2929 = vmatpush1.msra.mxu0 0.0
    %2930 = vmatprep.subr.mxu0 0.0
    %2931 = vmatpush1.msra.mxu0 0.0
    %2932 = vmatprep.subr.mxu0 0.0
    %2933 = vmatpush1.msra.mxu0 0.0
    %2934 = vmatprep.subr.mxu0 0.0
    %2935 = vmatpush1.msra.mxu0 0.0
    %2936 = vmatprep.subr.mxu0 0.0
    %2937 = vmatpush1.msra.mxu0 0.0
    %2938 = vmatprep.subr.mxu0 0.0
    %2939 = vmatpush1.msra.mxu0 0.0
    %2940 = vmatprep.subr.mxu0 0.0
    %2941 = vmatpush1.msra.mxu0 0.0
    %2942 = vmatprep.subr.mxu0 0.0
    %2943 = vmatpush1.msra.mxu0 0.0
    %2944 = vmatprep.subr.mxu0 0.0
    %2945 = vmatpush1.msra.mxu0 0.0
    %2946 = vmatprep.subr.mxu0 0.0
    %2947 = vmatpush1.msra.mxu0 0.0
    %2948 = vmatprep.subr.mxu0 0.0
    %2949 = vmatpush1.msra.mxu0 0.0
    %2950 = vmatprep.mubr.f32.mxu0 0.0
    %v2951 = vand.u32 %v2483, 4294901760
    %v2952 = vsub.f32 %v2483, %v2951
    %v2953 = vand.u32 %v2952, 4294901760
    %2954 = vmatmul.mubr.f32.gmra.mrb[0].mxu0 %v2953
    %v2955 = vpop.f32.mrb[0].mxu0
    %v2956 = vadd.f32 %v2860, %v2955
    %v2957 = vpop.f32.mrb[0].mxu0
    %2958 = vmatprep.mubr.f32.mxu0 0.0
    %v2959 = vand.u32 %v2484, 4294901760
    %v2960 = vsub.f32 %v2484, %v2959
    %v2961 = vand.u32 %v2960, 4294901760
    %2962 = vmatmul.mubr.f32.gmra.mrb[0].mxu0 %v2961
    %v2963 = vpop.f32.mrb[0].mxu0
    %v2964 = vadd.f32 %v2867, %v2963
    %v2965 = vpop.f32.mrb[0].mxu0
    %2966 = vdwg.mxu0
    %2967 = vmatprep.subr.mxu0 0.0
    %v2968 = vand.u32 %v2485, 4294901760
    %v2969 = vsub.f32 %v2485, %v2968
    %v2970 = vand.u32 %v2969, 4294901760
    %2971 = vmatpush1.msra.mxu0 %v2970
    %2972 = vmatprep.subr.mxu0 0.0
    %v2973 = vand.u32 %v2486, 4294901760
    %v2974 = vsub.f32 %v2486, %v2973
    %v2975 = vand.u32 %v2974, 4294901760
    %2976 = vmatpush1.msra.mxu0 %v2975
    %2977 = vmatprep.subr.mxu0 0.0
    %v2978 = vand.u32 %v2487, 4294901760
    %v2979 = vsub.f32 %v2487, %v2978
    %v2980 = vand.u32 %v2979, 4294901760
    %2981 = vmatpush1.msra.mxu0 %v2980
    %2982 = vmatprep.subr.mxu0 0.0
    %v2983 = vand.u32 %v2488, 4294901760
    %v2984 = vsub.f32 %v2488, %v2983
    %v2985 = vand.u32 %v2984, 4294901760
    %2986 = vmatpush1.msra.mxu0 %v2985
    %2987 = vmatprep.subr.mxu0 0.0
    %v2988 = vand.u32 %v2489, 4294901760
    %v2989 = vsub.f32 %v2489, %v2988
    %v2990 = vand.u32 %v2989, 4294901760
    %2991 = vmatpush1.msra.mxu0 %v2990
    %2992 = vmatprep.subr.mxu0 0.0
    %v2993 = vand.u32 %v2490, 4294901760
    %v2994 = vsub.f32 %v2490, %v2993
    %v2995 = vand.u32 %v2994, 4294901760
    %2996 = vmatpush1.msra.mxu0 %v2995
    %2997 = vmatprep.subr.mxu0 0.0
    %v2998 = vand.u32 %v2491, 4294901760
    %v2999 = vsub.f32 %v2491, %v2998
    %v3000 = vand.u32 %v2999, 4294901760
    %3001 = vmatpush1.msra.mxu0 %v3000
    %3002 = vmatprep.subr.mxu0 0.0
    %v3003 = vand.u32 %v2492, 4294901760
    %v3004 = vsub.f32 %v2492, %v3003
    %v3005 = vand.u32 %v3004, 4294901760
    %3006 = vmatpush1.msra.mxu0 %v3005
    %3007 = vmatprep.subr.mxu0 0.0
    %v3008 = vand.u32 %v2493, 4294901760
    %v3009 = vsub.f32 %v2493, %v3008
    %v3010 = vand.u32 %v3009, 4294901760
    %3011 = vmatpush1.msra.mxu0 %v3010
    %3012 = vmatprep.subr.mxu0 0.0
    %v3013 = vand.u32 %v2494, 4294901760
    %v3014 = vsub.f32 %v2494, %v3013
    %v3015 = vand.u32 %v3014, 4294901760
    %3016 = vmatpush1.msra.mxu0 %v3015
    %3017 = vmatprep.subr.mxu0 0.0
    %v3018 = vand.u32 %v2495, 4294901760
    %v3019 = vsub.f32 %v2495, %v3018
    %v3020 = vand.u32 %v3019, 4294901760
    %3021 = vmatpush1.msra.mxu0 %v3020
    %3022 = vmatprep.subr.mxu0 0.0
    %v3023 = vand.u32 %v2496, 4294901760
    %v3024 = vsub.f32 %v2496, %v3023
    %v3025 = vand.u32 %v3024, 4294901760
    %3026 = vmatpush1.msra.mxu0 %v3025
    %3027 = vmatprep.subr.mxu0 0.0
    %v3028 = vand.u32 %v2497, 4294901760
    %v3029 = vsub.f32 %v2497, %v3028
    %v3030 = vand.u32 %v3029, 4294901760
    %3031 = vmatpush1.msra.mxu0 %v3030
    %3032 = vmatprep.subr.mxu0 0.0
    %v3033 = vand.u32 %v2498, 4294901760
    %v3034 = vsub.f32 %v2498, %v3033
    %v3035 = vand.u32 %v3034, 4294901760
    %3036 = vmatpush1.msra.mxu0 %v3035
    %3037 = vmatprep.subr.mxu0 0.0
    %v3038 = vand.u32 %v2499, 4294901760
    %v3039 = vsub.f32 %v2499, %v3038
    %v3040 = vand.u32 %v3039, 4294901760
    %3041 = vmatpush1.msra.mxu0 %v3040
    %3042 = vmatprep.subr.mxu0 0.0
    %v3043 = vand.u32 %v2500, 4294901760
    %v3044 = vsub.f32 %v2500, %v3043
    %v3045 = vand.u32 %v3044, 4294901760
    %3046 = vmatpush1.msra.mxu0 %v3045
    %3047 = vmatprep.subr.mxu0 0.0
    %3048 = vmatpush1.msra.mxu0 0.0
    %3049 = vmatprep.subr.mxu0 0.0
    %3050 = vmatpush1.msra.mxu0 0.0
    %3051 = vmatprep.subr.mxu0 0.0
    %3052 = vmatpush1.msra.mxu0 0.0
    %3053 = vmatprep.subr.mxu0 0.0
    %3054 = vmatpush1.msra.mxu0 0.0
    %3055 = vmatprep.subr.mxu0 0.0
    %3056 = vmatpush1.msra.mxu0 0.0
    %3057 = vmatprep.subr.mxu0 0.0
    %3058 = vmatpush1.msra.mxu0 0.0
    %3059 = vmatprep.subr.mxu0 0.0
    %3060 = vmatpush1.msra.mxu0 0.0
    %3061 = vmatprep.subr.mxu0 0.0
    %3062 = vmatpush1.msra.mxu0 0.0
    %3063 = vmatprep.subr.mxu0 0.0
    %3064 = vmatpush1.msra.mxu0 0.0
    %3065 = vmatprep.subr.mxu0 0.0
    %3066 = vmatpush1.msra.mxu0 0.0
    %3067 = vmatprep.subr.mxu0 0.0
    %3068 = vmatpush1.msra.mxu0 0.0
    %3069 = vmatprep.subr.mxu0 0.0
    %3070 = vmatpush1.msra.mxu0 0.0
    %3071 = vmatprep.subr.mxu0 0.0
    %3072 = vmatpush1.msra.mxu0 0.0
    %3073 = vmatprep.subr.mxu0 0.0
    %3074 = vmatpush1.msra.mxu0 0.0
    %3075 = vmatprep.subr.mxu0 0.0
    %3076 = vmatpush1.msra.mxu0 0.0
    %3077 = vmatprep.subr.mxu0 0.0
    %3078 = vmatpush1.msra.mxu0 0.0
    %3079 = vmatprep.mubr.f32.mxu0 0.0
    %v3080 = vand.u32 %v2483, 4294901760
    %3081 = vmatmul.mubr.f32.gmra.mrb[0].mxu0 %v3080
    %v3082 = vpop.f32.mrb[0].mxu0
    %v3083 = vadd.f32 %v2956, %v3082
    %v3084 = vpop.f32.mrb[0].mxu0
    %3085 = vmatprep.mubr.f32.mxu0 0.0
    %v3086 = vand.u32 %v2484, 4294901760
    %3087 = vmatmul.mubr.f32.gmra.mrb[0].mxu0 %v3086
    %v3088 = vpop.f32.mrb[0].mxu0
    %v3089 = vadd.f32 %v2964, %v3088
    %v3090 = vpop.f32.mrb[0].mxu0
    %3091 = vdwg.mxu0
    %3092 = vmatprep.subr.mxu0 0.0
    %v3093 = vand.u32 %v2485, 4294901760
    %3094 = vmatpush1.msra.mxu0 %v3093
    %3095 = vmatprep.subr.mxu0 0.0
    %v3096 = vand.u32 %v2486, 4294901760
    %3097 = vmatpush1.msra.mxu0 %v3096
    %3098 = vmatprep.subr.mxu0 0.0
    %v3099 = vand.u32 %v2487, 4294901760
    %3100 = vmatpush1.msra.mxu0 %v3099
    %3101 = vmatprep.subr.mxu0 0.0
    %v3102 = vand.u32 %v2488, 4294901760
    %3103 = vmatpush1.msra.mxu0 %v3102
    %3104 = vmatprep.subr.mxu0 0.0
    %v3105 = vand.u32 %v2489, 4294901760
    %3106 = vmatpush1.msra.mxu0 %v3105
    %3107 = vmatprep.subr.mxu0 0.0
    %v3108 = vand.u32 %v2490, 4294901760
    %3109 = vmatpush1.msra.mxu0 %v3108
    %3110 = vmatprep.subr.mxu0 0.0
    %v3111 = vand.u32 %v2491, 4294901760
    %3112 = vmatpush1.msra.mxu0 %v3111
    %3113 = vmatprep.subr.mxu0 0.0
    %v3114 = vand.u32 %v2492, 4294901760
    %3115 = vmatpush1.msra.mxu0 %v3114
    %3116 = vmatprep.subr.mxu0 0.0
    %v3117 = vand.u32 %v2493, 4294901760
    %3118 = vmatpush1.msra.mxu0 %v3117
    %3119 = vmatprep.subr.mxu0 0.0
    %v3120 = vand.u32 %v2494, 4294901760
    %3121 = vmatpush1.msra.mxu0 %v3120
    %3122 = vmatprep.subr.mxu0 0.0
    %v3123 = vand.u32 %v2495, 4294901760
    %3124 = vmatpush1.msra.mxu0 %v3123
    %3125 = vmatprep.subr.mxu0 0.0
    %v3126 = vand.u32 %v2496, 4294901760
    %3127 = vmatpush1.msra.mxu0 %v3126
    %3128 = vmatprep.subr.mxu0 0.0
    %v3129 = vand.u32 %v2497, 4294901760
    %3130 = vmatpush1.msra.mxu0 %v3129
    %3131 = vmatprep.subr.mxu0 0.0
    %v3132 = vand.u32 %v2498, 4294901760
    %3133 = vmatpush1.msra.mxu0 %v3132
    %3134 = vmatprep.subr.mxu0 0.0
    %v3135 = vand.u32 %v2499, 4294901760
    %3136 = vmatpush1.msra.mxu0 %v3135
    %3137 = vmatprep.subr.mxu0 0.0
    %v3138 = vand.u32 %v2500, 4294901760
    %3139 = vmatpush1.msra.mxu0 %v3138
    %3140 = vmatprep.subr.mxu0 0.0
    %3141 = vmatpush1.msra.mxu0 0.0
    %3142 = vmatprep.subr.mxu0 0.0
    %3143 = vmatpush1.msra.mxu0 0.0
    %3144 = vmatprep.subr.mxu0 0.0
    %3145 = vmatpush1.msra.mxu0 0.0
    %3146 = vmatprep.subr.mxu0 0.0
    %3147 = vmatpush1.msra.mxu0 0.0
    %3148 = vmatprep.subr.mxu0 0.0
    %3149 = vmatpush1.msra.mxu0 0.0
    %3150 = vmatprep.subr.mxu0 0.0
    %3151 = vmatpush1.msra.mxu0 0.0
    %3152 = vmatprep.subr.mxu0 0.0
    %3153 = vmatpush1.msra.mxu0 0.0
    %3154 = vmatprep.subr.mxu0 0.0
    %3155 = vmatpush1.msra.mxu0 0.0
    %3156 = vmatprep.subr.mxu0 0.0
    %3157 = vmatpush1.msra.mxu0 0.0
    %3158 = vmatprep.subr.mxu0 0.0
    %3159 = vmatpush1.msra.mxu0 0.0
    %3160 = vmatprep.subr.mxu0 0.0
    %3161 = vmatpush1.msra.mxu0 0.0
    %3162 = vmatprep.subr.mxu0 0.0
    %3163 = vmatpush1.msra.mxu0 0.0
    %3164 = vmatprep.subr.mxu0 0.0
    %3165 = vmatpush1.msra.mxu0 0.0
    %3166 = vmatprep.subr.mxu0 0.0
    %3167 = vmatpush1.msra.mxu0 0.0
    %3168 = vmatprep.subr.mxu0 0.0
    %3169 = vmatpush1.msra.mxu0 0.0
    %3170 = vmatprep.subr.mxu0 0.0
    %3171 = vmatpush1.msra.mxu0 0.0
    %3172 = vmatprep.mubr.f32.mxu0 0.0
    %v3173 = vand.u32 %v2483, 4294901760
    %3174 = vmatmul.mubr.f32.gmra.mrb[0].mxu0 %v3173
    %v3175 = vpop.f32.mrb[0].mxu0
    %v3176 = vadd.f32 %v3083, %v3175
    %v3177 = vpop.f32.mrb[0].mxu0
    %3178 = vmatprep.mubr.f32.mxu0 0.0
    %v3179 = vand.u32 %v2484, 4294901760
    %3180 = vmatmul.mubr.f32.gmra.mrb[0].mxu0 %v3179
    %v3181 = vpop.f32.mrb[0].mxu0
    %v3182 = vadd.f32 %v3089, %v3181
    %v3183 = vpop.f32.mrb[0].mxu0
    %3184 = vdwg.mxu0
    %v3185 = vadd.f32 %v3176, %v3182
    %v3186 = vrot.slane %v3185, 4
    %v3187 = vadd.f32 %v3185, %v3186
    %v3188 = vrot.slane %v3187, 2
    %v3189 = vadd.f32 %v3187, %v3188
    %v3190 = vrot.slane %v3189, 1
    %v3191 = vadd.f32 %v3189, %v3190
    %v3192 = vmul.f32 %v3191, 0.001953125
    %v3193 = vsub.f32 %v2483, %v3192
    %v3194 = vsub.f32 %v2484, %v3192
    %v3195 = vmul.f32 %v3193, %v3193
    %v3196 = vmul.f32 %v3194, %v3194
    %3197 = vmatprep.subr.mxu0 0.0
    %v3198 = vand.u32 %v2485, 4294901760
    %3199 = vmatpush1.msra.mxu0 %v3198
    %3200 = vmatprep.subr.mxu0 0.0
    %v3201 = vand.u32 %v2486, 4294901760
    %3202 = vmatpush1.msra.mxu0 %v3201
    %3203 = vmatprep.subr.mxu0 0.0
    %v3204 = vand.u32 %v2487, 4294901760
    %3205 = vmatpush1.msra.mxu0 %v3204
    %3206 = vmatprep.subr.mxu0 0.0
    %v3207 = vand.u32 %v2488, 4294901760
    %3208 = vmatpush1.msra.mxu0 %v3207
    %3209 = vmatprep.subr.mxu0 0.0
    %v3210 = vand.u32 %v2489, 4294901760
    %3211 = vmatpush1.msra.mxu0 %v3210
    %3212 = vmatprep.subr.mxu0 0.0
    %v3213 = vand.u32 %v2490, 4294901760
    %3214 = vmatpush1.msra.mxu0 %v3213
    %3215 = vmatprep.subr.mxu0 0.0
    %v3216 = vand.u32 %v2491, 4294901760
    %3217 = vmatpush1.msra.mxu0 %v3216
    %3218 = vmatprep.subr.mxu0 0.0
    %v3219 = vand.u32 %v2492, 4294901760
    %3220 = vmatpush1.msra.mxu0 %v3219
    %3221 = vmatprep.subr.mxu0 0.0
    %v3222 = vand.u32 %v2493, 4294901760
    %3223 = vmatpush1.msra.mxu0 %v3222
    %3224 = vmatprep.subr.mxu0 0.0
    %v3225 = vand.u32 %v2494, 4294901760
    %3226 = vmatpush1.msra.mxu0 %v3225
    %3227 = vmatprep.subr.mxu0 0.0
    %v3228 = vand.u32 %v2495, 4294901760
    %3229 = vmatpush1.msra.mxu0 %v3228
    %3230 = vmatprep.subr.mxu0 0.0
    %v3231 = vand.u32 %v2496, 4294901760
    %3232 = vmatpush1.msra.mxu0 %v3231
    %3233 = vmatprep.subr.mxu0 0.0
    %v3234 = vand.u32 %v2497, 4294901760
    %3235 = vmatpush1.msra.mxu0 %v3234
    %3236 = vmatprep.subr.mxu0 0.0
    %v3237 = vand.u32 %v2498, 4294901760
    %3238 = vmatpush1.msra.mxu0 %v3237
    %3239 = vmatprep.subr.mxu0 0.0
    %v3240 = vand.u32 %v2499, 4294901760
    %3241 = vmatpush1.msra.mxu0 %v3240
    %3242 = vmatprep.subr.mxu0 0.0
    %v3243 = vand.u32 %v2500, 4294901760
    %3244 = vmatpush1.msra.mxu0 %v3243
    %3245 = vmatprep.subr.mxu0 0.0
    %3246 = vmatpush1.msra.mxu0 0.0
    %3247 = vmatprep.subr.mxu0 0.0
    %3248 = vmatpush1.msra.mxu0 0.0
    %3249 = vmatprep.subr.mxu0 0.0
    %3250 = vmatpush1.msra.mxu0 0.0
    %3251 = vmatprep.subr.mxu0 0.0
    %3252 = vmatpush1.msra.mxu0 0.0
    %3253 = vmatprep.subr.mxu0 0.0
    %3254 = vmatpush1.msra.mxu0 0.0
    %3255 = vmatprep.subr.mxu0 0.0
    %3256 = vmatpush1.msra.mxu0 0.0
    %3257 = vmatprep.subr.mxu0 0.0
    %3258 = vmatpush1.msra.mxu0 0.0
    %3259 = vmatprep.subr.mxu0 0.0
    %3260 = vmatpush1.msra.mxu0 0.0
    %3261 = vmatprep.subr.mxu0 0.0
    %3262 = vmatpush1.msra.mxu0 0.0
    %3263 = vmatprep.subr.mxu0 0.0
    %3264 = vmatpush1.msra.mxu0 0.0
    %3265 = vmatprep.subr.mxu0 0.0
    %3266 = vmatpush1.msra.mxu0 0.0
    %3267 = vmatprep.subr.mxu0 0.0
    %3268 = vmatpush1.msra.mxu0 0.0
    %3269 = vmatprep.subr.mxu0 0.0
    %3270 = vmatpush1.msra.mxu0 0.0
    %3271 = vmatprep.subr.mxu0 0.0
    %3272 = vmatpush1.msra.mxu0 0.0
    %3273 = vmatprep.subr.mxu0 0.0
    %3274 = vmatpush1.msra.mxu0 0.0
    %3275 = vmatprep.subr.mxu0 0.0
    %3276 = vmatpush1.msra.mxu0 0.0
    %3277 = vmatprep.mubr.f32.mxu0 0.0
    %v3278 = vand.u32 %v3195, 4294901760
    %v3279 = vsub.f32 %v3195, %v3278
    %v3280 = vand.u32 %v3279, 4294901760
    %v3281 = vsub.f32 %v3279, %v3280
    %v3282 = vand.u32 %v3281, 4294901760
    %3283 = vmatmul.mubr.f32.gmra.mrb[0].mxu0 %v3282
    %v3284 = vpop.f32.mrb[0].mxu0
    %v3285 = vadd.f32 0.0, %v3284
    %v3286 = vpop.f32.mrb[0].mxu0
    %3287 = vmatprep.mubr.f32.mxu0 0.0
    %v3288 = vand.u32 %v3196, 4294901760
    %v3289 = vsub.f32 %v3196, %v3288
    %v3290 = vand.u32 %v3289, 4294901760
    %v3291 = vsub.f32 %v3289, %v3290
    %v3292 = vand.u32 %v3291, 4294901760
    %3293 = vmatmul.mubr.f32.gmra.mrb[0].mxu0 %v3292
    %v3294 = vpop.f32.mrb[0].mxu0
    %v3295 = vadd.f32 0.0, %v3294
    %v3296 = vpop.f32.mrb[0].mxu0
    %3297 = vdwg.mxu0
    %3298 = vmatprep.subr.mxu0 0.0
    %v3299 = vand.u32 %v2485, 4294901760
    %v3300 = vsub.f32 %v2485, %v3299
    %v3301 = vand.u32 %v3300, 4294901760
    %v3302 = vsub.f32 %v3300, %v3301
    %v3303 = vand.u32 %v3302, 4294901760
    %3304 = vmatpush1.msra.mxu0 %v3303
    %3305 = vmatprep.subr.mxu0 0.0
    %v3306 = vand.u32 %v2486, 4294901760
    %v3307 = vsub.f32 %v2486, %v3306
    %v3308 = vand.u32 %v3307, 4294901760
    %v3309 = vsub.f32 %v3307, %v3308
    %v3310 = vand.u32 %v3309, 4294901760
    %3311 = vmatpush1.msra.mxu0 %v3310
    %3312 = vmatprep.subr.mxu0 0.0
    %v3313 = vand.u32 %v2487, 4294901760
    %v3314 = vsub.f32 %v2487, %v3313
    %v3315 = vand.u32 %v3314, 4294901760
    %v3316 = vsub.f32 %v3314, %v3315
    %v3317 = vand.u32 %v3316, 4294901760
    %3318 = vmatpush1.msra.mxu0 %v3317
    %3319 = vmatprep.subr.mxu0 0.0
    %v3320 = vand.u32 %v2488, 4294901760
    %v3321 = vsub.f32 %v2488, %v3320
    %v3322 = vand.u32 %v3321, 4294901760
    %v3323 = vsub.f32 %v3321, %v3322
    %v3324 = vand.u32 %v3323, 4294901760
    %3325 = vmatpush1.msra.mxu0 %v3324
    %3326 = vmatprep.subr.mxu0 0.0
    %v3327 = vand.u32 %v2489, 4294901760
    %v3328 = vsub.f32 %v2489, %v3327
    %v3329 = vand.u32 %v3328, 4294901760
    %v3330 = vsub.f32 %v3328, %v3329
    %v3331 = vand.u32 %v3330, 4294901760
    %3332 = vmatpush1.msra.mxu0 %v3331
    %3333 = vmatprep.subr.mxu0 0.0
    %v3334 = vand.u32 %v2490, 4294901760
    %v3335 = vsub.f32 %v2490, %v3334
    %v3336 = vand.u32 %v3335, 4294901760
    %v3337 = vsub.f32 %v3335, %v3336
    %v3338 = vand.u32 %v3337, 4294901760
    %3339 = vmatpush1.msra.mxu0 %v3338
    %3340 = vmatprep.subr.mxu0 0.0
    %v3341 = vand.u32 %v2491, 4294901760
    %v3342 = vsub.f32 %v2491, %v3341
    %v3343 = vand.u32 %v3342, 4294901760
    %v3344 = vsub.f32 %v3342, %v3343
    %v3345 = vand.u32 %v3344, 4294901760
    %3346 = vmatpush1.msra.mxu0 %v3345
    %3347 = vmatprep.subr.mxu0 0.0
    %v3348 = vand.u32 %v2492, 4294901760
    %v3349 = vsub.f32 %v2492, %v3348
    %v3350 = vand.u32 %v3349, 4294901760
    %v3351 = vsub.f32 %v3349, %v3350
    %v3352 = vand.u32 %v3351, 4294901760
    %3353 = vmatpush1.msra.mxu0 %v3352
    %3354 = vmatprep.subr.mxu0 0.0
    %v3355 = vand.u32 %v2493, 4294901760
    %v3356 = vsub.f32 %v2493, %v3355
    %v3357 = vand.u32 %v3356, 4294901760
    %v3358 = vsub.f32 %v3356, %v3357
    %v3359 = vand.u32 %v3358, 4294901760
    %3360 = vmatpush1.msra.mxu0 %v3359
    %3361 = vmatprep.subr.mxu0 0.0
    %v3362 = vand.u32 %v2494, 4294901760
    %v3363 = vsub.f32 %v2494, %v3362
    %v3364 = vand.u32 %v3363, 4294901760
    %v3365 = vsub.f32 %v3363, %v3364
    %v3366 = vand.u32 %v3365, 4294901760
    %3367 = vmatpush1.msra.mxu0 %v3366
    %3368 = vmatprep.subr.mxu0 0.0
    %v3369 = vand.u32 %v2495, 4294901760
    %v3370 = vsub.f32 %v2495, %v3369
    %v3371 = vand.u32 %v3370, 4294901760
    %v3372 = vsub.f32 %v3370, %v3371
    %v3373 = vand.u32 %v3372, 4294901760
    %3374 = vmatpush1.msra.mxu0 %v3373
    %3375 = vmatprep.subr.mxu0 0.0
    %v3376 = vand.u32 %v2496, 4294901760
    %v3377 = vsub.f32 %v2496, %v3376
    %v3378 = vand.u32 %v3377, 4294901760
    %v3379 = vsub.f32 %v3377, %v3378
    %v3380 = vand.u32 %v3379, 4294901760
    %3381 = vmatpush1.msra.mxu0 %v3380
    %3382 = vmatprep.subr.mxu0 0.0
    %v3383 = vand.u32 %v2497, 4294901760
    %v3384 = vsub.f32 %v2497, %v3383
    %v3385 = vand.u32 %v3384, 4294901760
    %v3386 = vsub.f32 %v3384, %v3385
    %v3387 = vand.u32 %v3386, 4294901760
    %3388 = vmatpush1.msra.mxu0 %v3387
    %3389 = vmatprep.subr.mxu0 0.0
    %v3390 = vand.u32 %v2498, 4294901760
    %v3391 = vsub.f32 %v2498, %v3390
    %v3392 = vand.u32 %v3391, 4294901760
    %v3393 = vsub.f32 %v3391, %v3392
    %v3394 = vand.u32 %v3393, 4294901760
    %3395 = vmatpush1.msra.mxu0 %v3394
    %3396 = vmatprep.subr.mxu0 0.0
    %v3397 = vand.u32 %v2499, 4294901760
    %v3398 = vsub.f32 %v2499, %v3397
    %v3399 = vand.u32 %v3398, 4294901760
    %v3400 = vsub.f32 %v3398, %v3399
    %v3401 = vand.u32 %v3400, 4294901760
    %3402 = vmatpush1.msra.mxu0 %v3401
    %3403 = vmatprep.subr.mxu0 0.0
    %v3404 = vand.u32 %v2500, 4294901760
    %v3405 = vsub.f32 %v2500, %v3404
    %v3406 = vand.u32 %v3405, 4294901760
    %v3407 = vsub.f32 %v3405, %v3406
    %v3408 = vand.u32 %v3407, 4294901760
    %3409 = vmatpush1.msra.mxu0 %v3408
    %3410 = vmatprep.subr.mxu0 0.0
    %3411 = vmatpush1.msra.mxu0 0.0
    %3412 = vmatprep.subr.mxu0 0.0
    %3413 = vmatpush1.msra.mxu0 0.0
    %3414 = vmatprep.subr.mxu0 0.0
    %3415 = vmatpush1.msra.mxu0 0.0
    %3416 = vmatprep.subr.mxu0 0.0
    %3417 = vmatpush1.msra.mxu0 0.0
    %3418 = vmatprep.subr.mxu0 0.0
    %3419 = vmatpush1.msra.mxu0 0.0
    %3420 = vmatprep.subr.mxu0 0.0
    %3421 = vmatpush1.msra.mxu0 0.0
    %3422 = vmatprep.subr.mxu0 0.0
    %3423 = vmatpush1.msra.mxu0 0.0
    %3424 = vmatprep.subr.mxu0 0.0
    %3425 = vmatpush1.msra.mxu0 0.0
    %3426 = vmatprep.subr.mxu0 0.0
    %3427 = vmatpush1.msra.mxu0 0.0
    %3428 = vmatprep.subr.mxu0 0.0
    %3429 = vmatpush1.msra.mxu0 0.0
    %3430 = vmatprep.subr.mxu0 0.0
    %3431 = vmatpush1.msra.mxu0 0.0
    %3432 = vmatprep.subr.mxu0 0.0
    %3433 = vmatpush1.msra.mxu0 0.0
    %3434 = vmatprep.subr.mxu0 0.0
    %3435 = vmatpush1.msra.mxu0 0.0
    %3436 = vmatprep.subr.mxu0 0.0
    %3437 = vmatpush1.msra.mxu0 0.0
    %3438 = vmatprep.subr.mxu0 0.0
    %3439 = vmatpush1.msra.mxu0 0.0
    %3440 = vmatprep.subr.mxu0 0.0
    %3441 = vmatpush1.msra.mxu0 0.0
    %3442 = vmatprep.mubr.f32.mxu0 0.0
    %v3443 = vand.u32 %v3195, 4294901760
    %3444 = vmatmul.mubr.f32.gmra.mrb[0].mxu0 %v3443
    %v3445 = vpop.f32.mrb[0].mxu0
    %v3446 = vadd.f32 %v3285, %v3445
    %v3447 = vpop.f32.mrb[0].mxu0
    %3448 = vmatprep.mubr.f32.mxu0 0.0
    %v3449 = vand.u32 %v3196, 4294901760
    %3450 = vmatmul.mubr.f32.gmra.mrb[0].mxu0 %v3449
    %v3451 = vpop.f32.mrb[0].mxu0
    %v3452 = vadd.f32 %v3295, %v3451
    %v3453 = vpop.f32.mrb[0].mxu0
    %3454 = vdwg.mxu0
    %3455 = vmatprep.subr.mxu0 0.0
    %v3456 = vand.u32 %v2485, 4294901760
    %v3457 = vsub.f32 %v2485, %v3456
    %3458 = vmatpush1.msra.mxu0 %v3457
    %3459 = vmatprep.subr.mxu0 0.0
    %v3460 = vand.u32 %v2486, 4294901760
    %v3461 = vsub.f32 %v2486, %v3460
    %3462 = vmatpush1.msra.mxu0 %v3461
    %3463 = vmatprep.subr.mxu0 0.0
    %v3464 = vand.u32 %v2487, 4294901760
    %v3465 = vsub.f32 %v2487, %v3464
    %3466 = vmatpush1.msra.mxu0 %v3465
    %3467 = vmatprep.subr.mxu0 0.0
    %v3468 = vand.u32 %v2488, 4294901760
    %v3469 = vsub.f32 %v2488, %v3468
    %3470 = vmatpush1.msra.mxu0 %v3469
    %3471 = vmatprep.subr.mxu0 0.0
    %v3472 = vand.u32 %v2489, 4294901760
    %v3473 = vsub.f32 %v2489, %v3472
    %3474 = vmatpush1.msra.mxu0 %v3473
    %3475 = vmatprep.subr.mxu0 0.0
    %v3476 = vand.u32 %v2490, 4294901760
    %v3477 = vsub.f32 %v2490, %v3476
    %3478 = vmatpush1.msra.mxu0 %v3477
    %3479 = vmatprep.subr.mxu0 0.0
    %v3480 = vand.u32 %v2491, 4294901760
    %v3481 = vsub.f32 %v2491, %v3480
    %3482 = vmatpush1.msra.mxu0 %v3481
    %3483 = vmatprep.subr.mxu0 0.0
    %v3484 = vand.u32 %v2492, 4294901760
    %v3485 = vsub.f32 %v2492, %v3484
    %3486 = vmatpush1.msra.mxu0 %v3485
    %3487 = vmatprep.subr.mxu0 0.0
    %v3488 = vand.u32 %v2493, 4294901760
    %v3489 = vsub.f32 %v2493, %v3488
    %3490 = vmatpush1.msra.mxu0 %v3489
    %3491 = vmatprep.subr.mxu0 0.0
    %v3492 = vand.u32 %v2494, 4294901760
    %v3493 = vsub.f32 %v2494, %v3492
    %3494 = vmatpush1.msra.mxu0 %v3493
    %3495 = vmatprep.subr.mxu0 0.0
    %v3496 = vand.u32 %v2495, 4294901760
    %v3497 = vsub.f32 %v2495, %v3496
    %3498 = vmatpush1.msra.mxu0 %v3497
    %3499 = vmatprep.subr.mxu0 0.0
    %v3500 = vand.u32 %v2496, 4294901760
    %v3501 = vsub.f32 %v2496, %v3500
    %3502 = vmatpush1.msra.mxu0 %v3501
    %3503 = vmatprep.subr.mxu0 0.0
    %v3504 = vand.u32 %v2497, 4294901760
    %v3505 = vsub.f32 %v2497, %v3504
    %3506 = vmatpush1.msra.mxu0 %v3505
    %3507 = vmatprep.subr.mxu0 0.0
    %v3508 = vand.u32 %v2498, 4294901760
    %v3509 = vsub.f32 %v2498, %v3508
    %3510 = vmatpush1.msra.mxu0 %v3509
    %3511 = vmatprep.subr.mxu0 0.0
    %v3512 = vand.u32 %v2499, 4294901760
    %v3513 = vsub.f32 %v2499, %v3512
    %3514 = vmatpush1.msra.mxu0 %v3513
    %3515 = vmatprep.subr.mxu0 0.0
    %v3516 = vand.u32 %v2500, 4294901760
    %v3517 = vsub.f32 %v2500, %v3516
    %3518 = vmatpush1.msra.mxu0 %v3517
    %3519 = vmatprep.subr.mxu0 0.0
    %3520 = vmatpush1.msra.mxu0 0.0
    %3521 = vmatprep.subr.mxu0 0.0
    %3522 = vmatpush1.msra.mxu0 0.0
    %3523 = vmatprep.subr.mxu0 0.0
    %3524 = vmatpush1.msra.mxu0 0.0
    %3525 = vmatprep.subr.mxu0 0.0
    %3526 = vmatpush1.msra.mxu0 0.0
    %3527 = vmatprep.subr.mxu0 0.0
    %3528 = vmatpush1.msra.mxu0 0.0
    %3529 = vmatprep.subr.mxu0 0.0
    %3530 = vmatpush1.msra.mxu0 0.0
    %3531 = vmatprep.subr.mxu0 0.0
    %3532 = vmatpush1.msra.mxu0 0.0
    %3533 = vmatprep.subr.mxu0 0.0
    %3534 = vmatpush1.msra.mxu0 0.0
    %3535 = vmatprep.subr.mxu0 0.0
    %3536 = vmatpush1.msra.mxu0 0.0
    %3537 = vmatprep.subr.mxu0 0.0
    %3538 = vmatpush1.msra.mxu0 0.0
    %3539 = vmatprep.subr.mxu0 0.0
    %3540 = vmatpush1.msra.mxu0 0.0
    %3541 = vmatprep.subr.mxu0 0.0
    %3542 = vmatpush1.msra.mxu0 0.0
    %3543 = vmatprep.subr.mxu0 0.0
    %3544 = vmatpush1.msra.mxu0 0.0
    %3545 = vmatprep.subr.mxu0 0.0
    %3546 = vmatpush1.msra.mxu0 0.0
    %3547 = vmatprep.subr.mxu0 0.0
    %3548 = vmatpush1.msra.mxu0 0.0
    %3549 = vmatprep.subr.mxu0 0.0
    %3550 = vmatpush1.msra.mxu0 0.0
    %3551 = vmatprep.mubr.f32.mxu0 0.0
    %v3552 = vand.u32 %v3195, 4294901760
    %v3553 = vsub.f32 %v3195, %v3552
    %3554 = vmatmul.mubr.f32.gmra.mrb[0].mxu0 %v3553
    %v3555 = vpop.f32.mrb[0].mxu0
    %v3556 = vadd.f32 %v3446, %v3555
    %v3557 = vpop.f32.mrb[0].mxu0
    %3558 = vmatprep.mubr.f32.mxu0 0.0
    %v3559 = vand.u32 %v3196, 4294901760
    %v3560 = vsub.f32 %v3196, %v3559
    %3561 = vmatmul.mubr.f32.gmra.mrb[0].mxu0 %v3560
    %v3562 = vpop.f32.mrb[0].mxu0
    %v3563 = vadd.f32 %v3452, %v3562
    %v3564 = vpop.f32.mrb[0].mxu0
    %3565 = vdwg.mxu0
    %3566 = vmatprep.subr.mxu0 0.0
    %v3567 = vand.u32 %v2485, 4294901760
    %3568 = vmatpush1.msra.mxu0 %v3567
    %3569 = vmatprep.subr.mxu0 0.0
    %v3570 = vand.u32 %v2486, 4294901760
    %3571 = vmatpush1.msra.mxu0 %v3570
    %3572 = vmatprep.subr.mxu0 0.0
    %v3573 = vand.u32 %v2487, 4294901760
    %3574 = vmatpush1.msra.mxu0 %v3573
    %3575 = vmatprep.subr.mxu0 0.0
    %v3576 = vand.u32 %v2488, 4294901760
    %3577 = vmatpush1.msra.mxu0 %v3576
    %3578 = vmatprep.subr.mxu0 0.0
    %v3579 = vand.u32 %v2489, 4294901760
    %3580 = vmatpush1.msra.mxu0 %v3579
    %3581 = vmatprep.subr.mxu0 0.0
    %v3582 = vand.u32 %v2490, 4294901760
    %3583 = vmatpush1.msra.mxu0 %v3582
    %3584 = vmatprep.subr.mxu0 0.0
    %v3585 = vand.u32 %v2491, 4294901760
    %3586 = vmatpush1.msra.mxu0 %v3585
    %3587 = vmatprep.subr.mxu0 0.0
    %v3588 = vand.u32 %v2492, 4294901760
    %3589 = vmatpush1.msra.mxu0 %v3588
    %3590 = vmatprep.subr.mxu0 0.0
    %v3591 = vand.u32 %v2493, 4294901760
    %3592 = vmatpush1.msra.mxu0 %v3591
    %3593 = vmatprep.subr.mxu0 0.0
    %v3594 = vand.u32 %v2494, 4294901760
    %3595 = vmatpush1.msra.mxu0 %v3594
    %3596 = vmatprep.subr.mxu0 0.0
    %v3597 = vand.u32 %v2495, 4294901760
    %3598 = vmatpush1.msra.mxu0 %v3597
    %3599 = vmatprep.subr.mxu0 0.0
    %v3600 = vand.u32 %v2496, 4294901760
    %3601 = vmatpush1.msra.mxu0 %v3600
    %3602 = vmatprep.subr.mxu0 0.0
    %v3603 = vand.u32 %v2497, 4294901760
    %3604 = vmatpush1.msra.mxu0 %v3603
    %3605 = vmatprep.subr.mxu0 0.0
    %v3606 = vand.u32 %v2498, 4294901760
    %3607 = vmatpush1.msra.mxu0 %v3606
    %3608 = vmatprep.subr.mxu0 0.0
    %v3609 = vand.u32 %v2499, 4294901760
    %3610 = vmatpush1.msra.mxu0 %v3609
    %3611 = vmatprep.subr.mxu0 0.0
    %v3612 = vand.u32 %v2500, 4294901760
    %3613 = vmatpush1.msra.mxu0 %v3612
    %3614 = vmatprep.subr.mxu0 0.0
    %3615 = vmatpush1.msra.mxu0 0.0
    %3616 = vmatprep.subr.mxu0 0.0
    %3617 = vmatpush1.msra.mxu0 0.0
    %3618 = vmatprep.subr.mxu0 0.0
    %3619 = vmatpush1.msra.mxu0 0.0
    %3620 = vmatprep.subr.mxu0 0.0
    %3621 = vmatpush1.msra.mxu0 0.0
    %3622 = vmatprep.subr.mxu0 0.0
    %3623 = vmatpush1.msra.mxu0 0.0
    %3624 = vmatprep.subr.mxu0 0.0
    %3625 = vmatpush1.msra.mxu0 0.0
    %3626 = vmatprep.subr.mxu0 0.0
    %3627 = vmatpush1.msra.mxu0 0.0
    %3628 = vmatprep.subr.mxu0 0.0
    %3629 = vmatpush1.msra.mxu0 0.0
    %3630 = vmatprep.subr.mxu0 0.0
    %3631 = vmatpush1.msra.mxu0 0.0
    %3632 = vmatprep.subr.mxu0 0.0
    %3633 = vmatpush1.msra.mxu0 0.0
    %3634 = vmatprep.subr.mxu0 0.0
    %3635 = vmatpush1.msra.mxu0 0.0
    %3636 = vmatprep.subr.mxu0 0.0
    %3637 = vmatpush1.msra.mxu0 0.0
    %3638 = vmatprep.subr.mxu0 0.0
    %3639 = vmatpush1.msra.mxu0 0.0
    %3640 = vmatprep.subr.mxu0 0.0
    %3641 = vmatpush1.msra.mxu0 0.0
    %3642 = vmatprep.subr.mxu0 0.0
    %3643 = vmatpush1.msra.mxu0 0.0
    %3644 = vmatprep.subr.mxu0 0.0
    %3645 = vmatpush1.msra.mxu0 0.0
    %3646 = vmatprep.mubr.f32.mxu0 0.0
    %v3647 = vand.u32 %v3195, 4294901760
    %v3648 = vsub.f32 %v3195, %v3647
    %v3649 = vand.u32 %v3648, 4294901760
    %3650 = vmatmul.mubr.f32.gmra.mrb[0].mxu0 %v3649
    %v3651 = vpop.f32.mrb[0].mxu0
    %v3652 = vadd.f32 %v3556, %v3651
    %v3653 = vpop.f32.mrb[0].mxu0
    %3654 = vmatprep.mubr.f32.mxu0 0.0
    %v3655 = vand.u32 %v3196, 4294901760
    %v3656 = vsub.f32 %v3196, %v3655
    %v3657 = vand.u32 %v3656, 4294901760
    %3658 = vmatmul.mubr.f32.gmra.mrb[0].mxu0 %v3657
    %v3659 = vpop.f32.mrb[0].mxu0
    %v3660 = vadd.f32 %v3563, %v3659
    %v3661 = vpop.f32.mrb[0].mxu0
    %3662 = vdwg.mxu0
    %3663 = vmatprep.subr.mxu0 0.0
    %v3664 = vand.u32 %v2485, 4294901760
    %v3665 = vsub.f32 %v2485, %v3664
    %v3666 = vand.u32 %v3665, 4294901760
    %3667 = vmatpush1.msra.mxu0 %v3666
    %3668 = vmatprep.subr.mxu0 0.0
    %v3669 = vand.u32 %v2486, 4294901760
    %v3670 = vsub.f32 %v2486, %v3669
    %v3671 = vand.u32 %v3670, 4294901760
    %3672 = vmatpush1.msra.mxu0 %v3671
    %3673 = vmatprep.subr.mxu0 0.0
    %v3674 = vand.u32 %v2487, 4294901760
    %v3675 = vsub.f32 %v2487, %v3674
    %v3676 = vand.u32 %v3675, 4294901760
    %3677 = vmatpush1.msra.mxu0 %v3676
    %3678 = vmatprep.subr.mxu0 0.0
    %v3679 = vand.u32 %v2488, 4294901760
    %v3680 = vsub.f32 %v2488, %v3679
    %v3681 = vand.u32 %v3680, 4294901760
    %3682 = vmatpush1.msra.mxu0 %v3681
    %3683 = vmatprep.subr.mxu0 0.0
    %v3684 = vand.u32 %v2489, 4294901760
    %v3685 = vsub.f32 %v2489, %v3684
    %v3686 = vand.u32 %v3685, 4294901760
    %3687 = vmatpush1.msra.mxu0 %v3686
    %3688 = vmatprep.subr.mxu0 0.0
    %v3689 = vand.u32 %v2490, 4294901760
    %v3690 = vsub.f32 %v2490, %v3689
    %v3691 = vand.u32 %v3690, 4294901760
    %3692 = vmatpush1.msra.mxu0 %v3691
    %3693 = vmatprep.subr.mxu0 0.0
    %v3694 = vand.u32 %v2491, 4294901760
    %v3695 = vsub.f32 %v2491, %v3694
    %v3696 = vand.u32 %v3695, 4294901760
    %3697 = vmatpush1.msra.mxu0 %v3696
    %3698 = vmatprep.subr.mxu0 0.0
    %v3699 = vand.u32 %v2492, 4294901760
    %v3700 = vsub.f32 %v2492, %v3699
    %v3701 = vand.u32 %v3700, 4294901760
    %3702 = vmatpush1.msra.mxu0 %v3701
    %3703 = vmatprep.subr.mxu0 0.0
    %v3704 = vand.u32 %v2493, 4294901760
    %v3705 = vsub.f32 %v2493, %v3704
    %v3706 = vand.u32 %v3705, 4294901760
    %3707 = vmatpush1.msra.mxu0 %v3706
    %3708 = vmatprep.subr.mxu0 0.0
    %v3709 = vand.u32 %v2494, 4294901760
    %v3710 = vsub.f32 %v2494, %v3709
    %v3711 = vand.u32 %v3710, 4294901760
    %3712 = vmatpush1.msra.mxu0 %v3711
    %3713 = vmatprep.subr.mxu0 0.0
    %v3714 = vand.u32 %v2495, 4294901760
    %v3715 = vsub.f32 %v2495, %v3714
    %v3716 = vand.u32 %v3715, 4294901760
    %3717 = vmatpush1.msra.mxu0 %v3716
    %3718 = vmatprep.subr.mxu0 0.0
    %v3719 = vand.u32 %v2496, 4294901760
    %v3720 = vsub.f32 %v2496, %v3719
    %v3721 = vand.u32 %v3720, 4294901760
    %3722 = vmatpush1.msra.mxu0 %v3721
    %3723 = vmatprep.subr.mxu0 0.0
    %v3724 = vand.u32 %v2497, 4294901760
    %v3725 = vsub.f32 %v2497, %v3724
    %v3726 = vand.u32 %v3725, 4294901760
    %3727 = vmatpush1.msra.mxu0 %v3726
    %3728 = vmatprep.subr.mxu0 0.0
    %v3729 = vand.u32 %v2498, 4294901760
    %v3730 = vsub.f32 %v2498, %v3729
    %v3731 = vand.u32 %v3730, 4294901760
    %3732 = vmatpush1.msra.mxu0 %v3731
    %3733 = vmatprep.subr.mxu0 0.0
    %v3734 = vand.u32 %v2499, 4294901760
    %v3735 = vsub.f32 %v2499, %v3734
    %v3736 = vand.u32 %v3735, 4294901760
    %3737 = vmatpush1.msra.mxu0 %v3736
    %3738 = vmatprep.subr.mxu0 0.0
    %v3739 = vand.u32 %v2500, 4294901760
    %v3740 = vsub.f32 %v2500, %v3739
    %v3741 = vand.u32 %v3740, 4294901760
    %3742 = vmatpush1.msra.mxu0 %v3741
    %3743 = vmatprep.subr.mxu0 0.0
    %3744 = vmatpush1.msra.mxu0 0.0
    %3745 = vmatprep.subr.mxu0 0.0
    %3746 = vmatpush1.msra.mxu0 0.0
    %3747 = vmatprep.subr.mxu0 0.0
    %3748 = vmatpush1.msra.mxu0 0.0
    %3749 = vmatprep.subr.mxu0 0.0
    %3750 = vmatpush1.msra.mxu0 0.0
    %3751 = vmatprep.subr.mxu0 0.0
    %3752 = vmatpush1.msra.mxu0 0.0
    %3753 = vmatprep.subr.mxu0 0.0
    %3754 = vmatpush1.msra.mxu0 0.0
    %3755 = vmatprep.subr.mxu0 0.0
    %3756 = vmatpush1.msra.mxu0 0.0
    %3757 = vmatprep.subr.mxu0 0.0
    %3758 = vmatpush1.msra.mxu0 0.0
    %3759 = vmatprep.subr.mxu0 0.0
    %3760 = vmatpush1.msra.mxu0 0.0
    %3761 = vmatprep.subr.mxu0 0.0
    %3762 = vmatpush1.msra.mxu0 0.0
    %3763 = vmatprep.subr.mxu0 0.0
    %3764 = vmatpush1.msra.mxu0 0.0
    %3765 = vmatprep.subr.mxu0 0.0
    %3766 = vmatpush1.msra.mxu0 0.0
    %3767 = vmatprep.subr.mxu0 0.0
    %3768 = vmatpush1.msra.mxu0 0.0
    %3769 = vmatprep.subr.mxu0 0.0
    %3770 = vmatpush1.msra.mxu0 0.0
    %3771 = vmatprep.subr.mxu0 0.0
    %3772 = vmatpush1.msra.mxu0 0.0
    %3773 = vmatprep.subr.mxu0 0.0
    %3774 = vmatpush1.msra.mxu0 0.0
    %3775 = vmatprep.mubr.f32.mxu0 0.0
    %v3776 = vand.u32 %v3195, 4294901760
    %3777 = vmatmul.mubr.f32.gmra.mrb[0].mxu0 %v3776
    %v3778 = vpop.f32.mrb[0].mxu0
    %v3779 = vadd.f32 %v3652, %v3778
    %v3780 = vpop.f32.mrb[0].mxu0
    %3781 = vmatprep.mubr.f32.mxu0 0.0
    %v3782 = vand.u32 %v3196, 4294901760
    %3783 = vmatmul.mubr.f32.gmra.mrb[0].mxu0 %v3782
    %v3784 = vpop.f32.mrb[0].mxu0
    %v3785 = vadd.f32 %v3660, %v3784
    %v3786 = vpop.f32.mrb[0].mxu0
    %3787 = vdwg.mxu0
    %3788 = vmatprep.subr.mxu0 0.0
    %v3789 = vand.u32 %v2485, 4294901760
    %3790 = vmatpush1.msra.mxu0 %v3789
    %3791 = vmatprep.subr.mxu0 0.0
    %v3792 = vand.u32 %v2486, 4294901760
    %3793 = vmatpush1.msra.mxu0 %v3792
    %3794 = vmatprep.subr.mxu0 0.0
    %v3795 = vand.u32 %v2487, 4294901760
    %3796 = vmatpush1.msra.mxu0 %v3795
    %3797 = vmatprep.subr.mxu0 0.0
    %v3798 = vand.u32 %v2488, 4294901760
    %3799 = vmatpush1.msra.mxu0 %v3798
    %3800 = vmatprep.subr.mxu0 0.0
    %v3801 = vand.u32 %v2489, 4294901760
    %3802 = vmatpush1.msra.mxu0 %v3801
    %3803 = vmatprep.subr.mxu0 0.0
    %v3804 = vand.u32 %v2490, 4294901760
    %3805 = vmatpush1.msra.mxu0 %v3804
    %3806 = vmatprep.subr.mxu0 0.0
    %v3807 = vand.u32 %v2491, 4294901760
    %3808 = vmatpush1.msra.mxu0 %v3807
    %3809 = vmatprep.subr.mxu0 0.0
    %v3810 = vand.u32 %v2492, 4294901760
    %3811 = vmatpush1.msra.mxu0 %v3810
    %3812 = vmatprep.subr.mxu0 0.0
    %v3813 = vand.u32 %v2493, 4294901760
    %3814 = vmatpush1.msra.mxu0 %v3813
    %3815 = vmatprep.subr.mxu0 0.0
    %v3816 = vand.u32 %v2494, 4294901760
    %3817 = vmatpush1.msra.mxu0 %v3816
    %3818 = vmatprep.subr.mxu0 0.0
    %v3819 = vand.u32 %v2495, 4294901760
    %3820 = vmatpush1.msra.mxu0 %v3819
    %3821 = vmatprep.subr.mxu0 0.0
    %v3822 = vand.u32 %v2496, 4294901760
    %3823 = vmatpush1.msra.mxu0 %v3822
    %3824 = vmatprep.subr.mxu0 0.0
    %v3825 = vand.u32 %v2497, 4294901760
    %3826 = vmatpush1.msra.mxu0 %v3825
    %3827 = vmatprep.subr.mxu0 0.0
    %v3828 = vand.u32 %v2498, 4294901760
    %3829 = vmatpush1.msra.mxu0 %v3828
    %3830 = vmatprep.subr.mxu0 0.0
    %v3831 = vand.u32 %v2499, 4294901760
    %3832 = vmatpush1.msra.mxu0 %v3831
    %3833 = vmatprep.subr.mxu0 0.0
    %v3834 = vand.u32 %v2500, 4294901760
    %3835 = vmatpush1.msra.mxu0 %v3834
    %3836 = vmatprep.subr.mxu0 0.0
    %3837 = vmatpush1.msra.mxu0 0.0
    %3838 = vmatprep.subr.mxu0 0.0
    %3839 = vmatpush1.msra.mxu0 0.0
    %3840 = vmatprep.subr.mxu0 0.0
    %3841 = vmatpush1.msra.mxu0 0.0
    %3842 = vmatprep.subr.mxu0 0.0
    %3843 = vmatpush1.msra.mxu0 0.0
    %3844 = vmatprep.subr.mxu0 0.0
    %3845 = vmatpush1.msra.mxu0 0.0
    %3846 = vmatprep.subr.mxu0 0.0
    %3847 = vmatpush1.msra.mxu0 0.0
    %3848 = vmatprep.subr.mxu0 0.0
    %3849 = vmatpush1.msra.mxu0 0.0
    %3850 = vmatprep.subr.mxu0 0.0
    %3851 = vmatpush1.msra.mxu0 0.0
    %3852 = vmatprep.subr.mxu0 0.0
    %3853 = vmatpush1.msra.mxu0 0.0
    %3854 = vmatprep.subr.mxu0 0.0
    %3855 = vmatpush1.msra.mxu0 0.0
    %3856 = vmatprep.subr.mxu0 0.0
    %3857 = vmatpush1.msra.mxu0 0.0
    %3858 = vmatprep.subr.mxu0 0.0
    %3859 = vmatpush1.msra.mxu0 0.0
    %3860 = vmatprep.subr.mxu0 0.0
    %3861 = vmatpush1.msra.mxu0 0.0
    %3862 = vmatprep.subr.mxu0 0.0
    %3863 = vmatpush1.msra.mxu0 0.0
    %3864 = vmatprep.subr.mxu0 0.0
    %3865 = vmatpush1.msra.mxu0 0.0
    %3866 = vmatprep.subr.mxu0 0.0
    %3867 = vmatpush1.msra.mxu0 0.0
    %3868 = vmatprep.mubr.f32.mxu0 0.0
    %v3869 = vand.u32 %v3195, 4294901760
    %3870 = vmatmul.mubr.f32.gmra.mrb[0].mxu0 %v3869
    %v3871 = vpop.f32.mrb[0].mxu0
    %v3872 = vadd.f32 %v3779, %v3871
    %v3873 = vpop.f32.mrb[0].mxu0
    %3874 = vmatprep.mubr.f32.mxu0 0.0
    %v3875 = vand.u32 %v3196, 4294901760
    %3876 = vmatmul.mubr.f32.gmra.mrb[0].mxu0 %v3875
    %v3877 = vpop.f32.mrb[0].mxu0
    %v3878 = vadd.f32 %v3785, %v3877
    %v3879 = vpop.f32.mrb[0].mxu0
    %3880 = vdwg.mxu0
    %v3881 = vadd.f32 %v3872, %v3878
    %v3882 = vrot.slane %v3881, 4
    %v3883 = vadd.f32 %v3881, %v3882
    %v3884 = vrot.slane %v3883, 2
    %v3885 = vadd.f32 %v3883, %v3884
    %v3886 = vrot.slane %v3885, 1
    %v3887 = vadd.f32 %v3885, %v3886
    %v3888 = vmul.f32 %v3887, 0.001953125
    %v3889 = vadd.f32 %v3888, 1e-05
    %v3890 = vrsqrt.pop %v3889
    %v3891 = vld [vmem:[%s5] sm:$0x1]
    %v3892 = vmul.f32 %v3890, %v3891
    %v3893 = vlaneseq
    %v3894 = vshrl.u32 %v3893, 7
    %v3895 = vsub.s32 0, %v3894
    %v3896 = vrot.slane %v3892, %v3895
    %v3897 = vmul.f32 %v3193, %v3896
    %v3898 = vmul.f32 %v3194, %v3896
    %v3899 = vld [vmem:[%s6] sm:$0x1]
    %v3901 = vlaneseq
    %v3902 = vshrl.u32 %v3901, 7
    %v3903 = vsub.s32 0, %v3902
    %v3904 = vrot.slane %v3899, %v3903
    %v3906 = vadd.f32 %v3897, %v3904
    %v3907 = vadd.f32 %v3898, %v3904
    %v3908 = vld [vmem:[#allocation3] sm:$0xff]
    %v3909 = vld [vmem:[#allocation3 + $0x8] sm:$0xff]
    %v3910 = vadd.f32 %v3906, %v3908
    %v3911 = vadd.f32 %v3907, %v3909
    %v3912 = vxor.u32 %v3910, 2147483648
    %v3913 = vxor.u32 %v3911, 2147483648
    %v3914 = vmul.f32 %v3912, 1.442695
    %v3915 = vpow.pop %v3914
    %v3916 = vmul.f32 %v3913, 1.442695
    %v3917 = vpow.pop %v3916
    %v3918 = vadd.f32 %v3915, 1.0
    %v3919 = vadd.f32 %v3917, 1.0
    %v3920 = vrcp.pop %v3918
    %v3921 = vmul.f32 1.0, %v3920
    %v3922 = vrcp.pop %v3919
    %v3923 = vmul.f32 1.0, %v3922
    %v3924 = vmul.f32 %v3910, %v3921
    %v3925 = vmul.f32 %v3911, %v3923
    %3926 = vst [vmem:[#allocation11] sm:$0xff] %v3924
    %3927 = vst [vmem:[#allocation11 + $0x8] sm:$0xff] %v3925
    // Predicated region
    $region50: #{tpu_custom_call.1} parent=1 // pred_check
      _
    $region51: #{tpu_custom_call.1} parent=1 // pred_check_branch
      %3929 = sbr.rel (0) target = $region53
    $region52: #{tpu_custom_call.1} parent=1 // pred_region
      %s3931 = ssub.s32 256, 256
      %3932 = vsyncadd [#allocation5], %s3931
      %s3933 = sshll.u32 [#allocation11], 4
      %s3934 = int_to_ptr.vmem [resolvable:$true] %s3933
      %3939 = dma.vmem_to_hbm [thread:$0]  %s3934, 256, %s8, [#allocation5], 128, 128, 8
    $region53: #{tpu_custom_call.1} parent=1 // pred_fallthru
      _
    // Predicated region
    $region54: #{tpu_custom_call.1} parent=1 // pred_check
      _
    $region55: #{tpu_custom_call.1} parent=1 // pred_check_branch
      %3941 = sbr.rel (0) target = $region57
    $region56: #{tpu_custom_call.1} parent=1 // pred_region
      %3942 = dma.done [#allocation5], 256
    $region57: #{tpu_custom_call.1} parent=1 // pred_fallthru
      _
    %3943 = vsyncpa [#allocation4], 1
    %3944 = vsyncpa [#allocation7], 1
    %3945 = vsyncpa [#allocation10], 1
    %3946 = vsyncpa [#allocation5], 1

</llo_original>
